<compile_context>
chip_gen: v6e
topology: v6e:2x2x1
jax: 0.10.0
libtpu: 0.0.40
codegen_flags: <defaults>
</compile_context>

<pallas_src>
import functools

import jax
import jax.numpy as jnp
from jax.experimental import pallas as pl
from jax.experimental.pallas import tpu as pltpu

EPS = 1e-5  # PyTorch GroupNorm default eps


def _silu(x):
    return x * jax.nn.sigmoid(x)


def _round_up(n, m):
    return (n + m - 1) // m * m


def _masked_group_norm(h, mask, gamma, beta, *, groups, n_valid):
    """GroupNorm over the flattened-spatial (lane) axis, masked to valid pixels.

    h:     (C, L) activations, finite everywhere, correct where mask == 1
    mask:  (1, L) 1.0 at interior (valid) pixels, 0.0 elsewhere
    gamma, beta: (C, 1)
    """
    C = h.shape[0]
    cg = C // groups
    denom = float(n_valid * cg)

    ch_sum = jnp.sum(h * mask, axis=1, keepdims=True)                    # (C, 1)
    g_sum = jnp.sum(ch_sum.reshape(groups, cg), axis=1, keepdims=True)   # (G, 1)
    mean = jnp.broadcast_to(g_sum / denom, (groups, cg)).reshape(C, 1)   # (C, 1)

    d = (h - mean) * mask                                                # two-pass var
    ch_ss = jnp.sum(d * d, axis=1, keepdims=True)                        # (C, 1)
    g_ss = jnp.sum(ch_ss.reshape(groups, cg), axis=1, keepdims=True)     # (G, 1)
    var = jnp.broadcast_to(g_ss / denom, (groups, cg)).reshape(C, 1)     # (C, 1)

    return (h - mean) * jax.lax.rsqrt(var + EPS) * gamma + beta


def _fused_resnet_kernel(x_ref, e_ref, mask_ref,
                         w1_ref, b1_ref, g1_ref, be1_ref,
                         w2_ref, b2_ref, g2_ref, be2_ref,
                         wr_ref, br_ref,
                         out_ref,
                         h1_ref,
                         *, groups, n_valid, tap_starts, qoff):
    lout = out_ref.shape[2]              # lane-dense compute width (3*128 here)
    mask = mask_ref[...]                 # (1, LOUT)
    e = e_ref[0]                         # (Cout, 1) summed time/label/pk embedding

    def conv3x3(read, w_ref, b_ref):
        # 3x3 conv (cross-correlation, zero padding) as 9 shifted matmuls
        # (Cout, Cin) @ (Cin, LOUT) over the flattened padded frame.
        acc = None
        for t, s in enumerate(tap_starts):          # static Python unroll
            c = jnp.dot(w_ref[t], read(s), preferred_element_type=jnp.float32)
            acc = c if acc is None else acc + c
        return acc + b_ref[...]

    # ---------------- block1: conv3x3 -> GroupNorm -> SiLU ------------------
    h = conv3x3(lambda s: x_ref[0, :, pl.ds(s, lout)], w1_ref, b1_ref)
    h = _masked_group_norm(h, mask, g1_ref[...], be1_ref[...],
                           groups=groups, n_valid=n_valid)
    h = _silu(h)

    # add (time + label + pk) embedding, then zero padding / scratch lanes so
    # it becomes the zero-padded input image of the second conv.
    h = (h + e) * mask

    # stage h1 into a wider zero-filled VMEM buffer so conv2's shifted reads
    # stay in bounds and see zeros in the halo (h1 never leaves VMEM).
    # The full zero-init each step keeps the halo finite even for grid steps
    # executing on the second TensorCore (no reliance on program_id == 0).
    h1_ref[...] = jnp.zeros(h1_ref.shape, h1_ref.dtype)
    h1_ref[:, pl.ds(qoff, lout)] = h

    # ---------------- block2: conv3x3 -> GroupNorm -> SiLU ------------------
    h = conv3x3(lambda s: h1_ref[:, pl.ds(s, lout)], w2_ref, b2_ref)
    h = _masked_group_norm(h, mask, g2_ref[...], be2_ref[...],
                           groups=groups, n_valid=n_valid)
    h = _silu(h)

    # ---------------- res_conv (1x1) + residual add --------------------------
    res = jnp.dot(wr_ref[...], x_ref[0, :, pl.ds(qoff, lout)],
                  preferred_element_type=jnp.float32) + br_ref[...]
    out_ref[0] = ((h + res) * mask).astype(out_ref.dtype)


def pk_aware_resnet_block(x_nchw, time_emb, label_emb, log10pk, params, *, groups):
    """Forward pass of PkAwareResnetBlock.  x is NCHW; returns NCHW."""
    B, Cin, H, W = x_nchw.shape
    Cout = params['w1'].shape[1]
    Hp, Wp = H + 2, W + 2                      # zero-padded spatial extent
    P = Hp * Wp                                # flattened padded frame size
    QOFF = Wp + 1                              # frame staging offset (halo size)
    LOUT = _round_up(P, 128)                   # lane-dense compute/output width
    LIN = _round_up(LOUT + 2 * Wp + 2, 128)    # staged-input width (covers all taps)
    # tap t = 3*ky + kx reads the padded frame at offset (ky-1)*Wp + (kx-1);
    # relative to the staged buffers that is a slice starting at ky*Wp + kx.
    tap_starts = tuple(ky * Wp + kx for ky in range(3) for kx in range(3))

    x = x_nchw.astype(jnp.float32)

    # zero-padded, spatially flattened input staged at offset QOFF (pure glue)
    xp = jnp.pad(x, ((0, 0), (0, 0), (1, 1), (1, 1))).reshape(B, Cin, P)
    xbuf = jnp.zeros((B, Cin, LIN), jnp.float32).at[:, :, QOFF:QOFF + P].set(xp)

    # interior-pixel mask in the padded frame
    m2 = jnp.zeros((Hp, Wp), jnp.float32).at[1:H + 1, 1:W + 1].set(1.0)
    mask = jnp.zeros((1, LOUT), jnp.float32).at[0, :P].set(m2.reshape(P))

    # embedding MLPs (SiLU -> Linear), hoisted out of the kernel and pre-summed
    # TODO(synk): these three tiny GEMVs stay in XLA; fusing them would add 6
    # extra kernel operands for negligible gain at these sizes.
    e = (_silu(time_emb) @ params['wt'] + params['bt']
         + _silu(label_emb) @ params['wl'] + params['bl']
         + _silu(log10pk) @ params['wp'] + params['bp'])           # (B, Cout)
    e = e.astype(jnp.float32)[:, :, None]                           # (B, Cout, 1)

    kernel = functools.partial(
        _fused_resnet_kernel, groups=groups, n_valid=H * W,
        tap_starts=tap_starts, qoff=QOFF)

    def full_spec(arr):
        nd = arr.ndim
        return pl.BlockSpec(arr.shape, lambda b, nd=nd: (0,) * nd)

    out_buf = pl.pallas_call(
        kernel,
        out_shape=jax.ShapeDtypeStruct((B, Cout, LOUT), jnp.float32),
        grid=(B,),
        in_specs=[
            pl.BlockSpec((1, Cin, LIN), lambda b: (b, 0, 0)),       # x (per batch)
            pl.BlockSpec((1, Cout, 1), lambda b: (b, 0, 0)),        # e (per batch)
            full_spec(mask),
            full_spec(params['w1']), full_spec(params['b1']),
            full_spec(params['g1']), full_spec(params['be1']),
            full_spec(params['w2']), full_spec(params['b2']),
            full_spec(params['g2']), full_spec(params['be2']),
            full_spec(params['wr']), full_spec(params['br']),
        ],
        out_specs=pl.BlockSpec((1, Cout, LOUT), lambda b: (b, 0, 0)),
        scratch_shapes=[pltpu.VMEM((Cout, LIN), jnp.float32)],       # staged h1
        compiler_params=pltpu.CompilerParams(
            dimension_semantics=("parallel",),
            vmem_limit_bytes=32 * 1024 * 1024,
        ),
    )(xbuf, e, mask,
      params['w1'], params['b1'], params['g1'], params['be1'],
      params['w2'], params['b2'], params['g2'], params['be2'],
      params['wr'], params['br'])

    # extract the valid HxW interior of the padded frame and return NCHW
    out = out_buf[:, :, :P].reshape(B, Cout, Hp, Wp)
    return out[:, :, 1:H + 1, 1:W + 1]


# ---------------- plain-JAX reference (mirrors the PyTorch forward) ------------
def _reference(x, time_emb, label_emb, log10pk, params, groups):
    def conv3x3(inp, w9, b):
        k9, co, ci = w9.shape
        w = jnp.transpose(w9.reshape(3, 3, co, ci), (2, 3, 0, 1))    # OIHW
        out = jax.lax.conv_general_dilated(
            inp, w, window_strides=(1, 1), padding=((1, 1), (1, 1)),
            dimension_numbers=('NCHW', 'OIHW', 'NCHW'))
        return out + b.reshape(1, -1, 1, 1)

    def group_norm(h, gamma, beta):
        Bh, C, Hh, Wh = h.shape
        hg = h.reshape(Bh, groups, C // groups, Hh, Wh)
        mu = hg.mean(axis=(2, 3, 4), keepdims=True)
        var = ((hg - mu) ** 2).mean(axis=(2, 3, 4), keepdims=True)
        hn = ((hg - mu) / jnp.sqrt(var + EPS)).reshape(Bh, C, Hh, Wh)
        return hn * gamma.reshape(1, -1, 1, 1) + beta.reshape(1, -1, 1, 1)

    h = _silu(group_norm(conv3x3(x, params['w1'], params['b1']),
                         params['g1'], params['be1']))
    e = (_silu(time_emb) @ params['wt'] + params['bt']
         + _silu(label_emb) @ params['wl'] + params['bl']
         + _silu(log10pk) @ params['wp'] + params['bp'])
    h = h + e[:, :, None, None]
    h = _silu(group_norm(conv3x3(h, params['w2'], params['b2']),
                         params['g2'], params['be2']))
    res = jnp.einsum('oc,bchw->bohw', params['wr'], x) + params['br'].reshape(1, -1, 1, 1)
    return h + res


def init_params(key, Cin, Cout, Dt, Dl, Dp):
    ks = jax.random.split(key, 16)
    n = lambda k, shape, s=0.1: (s * jax.random.normal(k, shape)).astype(jnp.float32)
    return dict(
        # conv weights stored as (9, Cout, Cin_) with tap t = 3*ky + kx
        w1=n(ks[0], (9, Cout, Cin)), b1=n(ks[1], (Cout, 1)),
        g1=1.0 + n(ks[2], (Cout, 1)), be1=n(ks[3], (Cout, 1)),
        w2=n(ks[4], (9, Cout, Cout)), b2=n(ks[5], (Cout, 1)),
        g2=1.0 + n(ks[6], (Cout, 1)), be2=n(ks[7], (Cout, 1)),
        wr=n(ks[8], (Cout, Cin)), br=n(ks[9], (Cout, 1)),
        wt=n(ks[10], (Dt, Cout)), bt=n(ks[11], (Cout,)),
        wl=n(ks[12], (Dl, Cout)), bl=n(ks[13], (Cout,)),
        wp=n(ks[14], (Dp, Cout)), bp=n(ks[15], (Cout,)),
    )


if __name__ == "__main__":
    # PkAwareResnetBlock(dim=4, dim_out=8, pk_dim=128, time_emb_dim=32,
    #                    groups=8, conditional=True, conditional_emb_dim=16)
    B, Cin, Cout, H, W = 2, 4, 8, 16, 16
    groups = 8
    Dt, Dl, Dp = 32, 16, 128

    key = jax.random.PRNGKey(0)
    kx, kt, kl, kp, kparam = jax.random.split(key, 5)
    x = jax.random.normal(kx, (B, Cin, H, W), jnp.float32)        # NCHW, like PyTorch
    time_emb = jax.random.normal(kt, (B, Dt), jnp.float32)
    label_emb = jax.random.normal(kl, (B, Dl), jnp.float32)
    log10pk = jax.random.normal(kp, (B, Dp), jnp.float32)
    params = init_params(kparam, Cin, Cout, Dt, Dl, Dp)

    out = pk_aware_resnet_block(x, time_emb, label_emb, log10pk, params, groups=groups)
    out = jax.block_until_ready(out)

    ref = _reference(x, time_emb, label_emb, log10pk, params, groups)
    assert out.shape == (B, Cout, H, W)
    err = float(jnp.max(jnp.abs(out - ref)))
    assert jnp.allclose(out, ref, atol=2e-3, rtol=2e-3), err
    print("KERNEL_OK")
</pallas_src>

<mosaic_0001>
module attributes {stable_mosaic.version = 11 : i64} {
  func.func @_fused_resnet_kernel(%arg0: i32, %arg1: memref<1x4x512xf32, #tpu.memory_space<vmem>>, %arg2: memref<1x8x1xf32, #tpu.memory_space<vmem>>, %arg3: memref<1x384xf32, #tpu.memory_space<vmem>>, %arg4: memref<9x8x4xf32, #tpu.memory_space<vmem>>, %arg5: memref<8x1xf32, #tpu.memory_space<vmem>>, %arg6: memref<8x1xf32, #tpu.memory_space<vmem>>, %arg7: memref<8x1xf32, #tpu.memory_space<vmem>>, %arg8: memref<9x8x8xf32, #tpu.memory_space<vmem>>, %arg9: memref<8x1xf32, #tpu.memory_space<vmem>>, %arg10: memref<8x1xf32, #tpu.memory_space<vmem>>, %arg11: memref<8x1xf32, #tpu.memory_space<vmem>>, %arg12: memref<8x4xf32, #tpu.memory_space<vmem>>, %arg13: memref<8x1xf32, #tpu.memory_space<vmem>>, %arg14: memref<1x8x384xf32, #tpu.memory_space<vmem>>, %arg15: memref<8x512xf32, #tpu.memory_space<vmem>>) attributes {dimension_semantics = [#tpu.dimension_semantics<parallel>], iteration_bounds = array<i64: 2>, scalar_prefetch = 0 : i64, scratch_operands = 1 : i64, tpu.core_type = #tpu.core_type<tc>, window_params = [{transform_indices = @transform_0, window_bounds = array<i64: 1, 4, 512>}, {transform_indices = @transform_1, window_bounds = array<i64: 1, 8, 1>}, {pipeline_mode = #tpu.pipeline_mode<synchronous>, transform_indices = @transform_2, window_bounds = array<i64: 1, 384>}, {pipeline_mode = #tpu.pipeline_mode<synchronous>, transform_indices = @transform_3, window_bounds = array<i64: 9, 8, 4>}, {pipeline_mode = #tpu.pipeline_mode<synchronous>, transform_indices = @transform_4, window_bounds = array<i64: 8, 1>}, {pipeline_mode = #tpu.pipeline_mode<synchronous>, transform_indices = @transform_5, window_bounds = array<i64: 8, 1>}, {pipeline_mode = #tpu.pipeline_mode<synchronous>, transform_indices = @transform_6, window_bounds = array<i64: 8, 1>}, {pipeline_mode = #tpu.pipeline_mode<synchronous>, transform_indices = @transform_7, window_bounds = array<i64: 9, 8, 8>}, {pipeline_mode = #tpu.pipeline_mode<synchronous>, transform_indices = @transform_8, window_bounds = array<i64: 8, 1>}, {pipeline_mode = #tpu.pipeline_mode<synchronous>, transform_indices = @transform_9, window_bounds = array<i64: 8, 1>}, {pipeline_mode = #tpu.pipeline_mode<synchronous>, transform_indices = @transform_10, window_bounds = array<i64: 8, 1>}, {pipeline_mode = #tpu.pipeline_mode<synchronous>, transform_indices = @transform_11, window_bounds = array<i64: 8, 4>}, {pipeline_mode = #tpu.pipeline_mode<synchronous>, transform_indices = @transform_12, window_bounds = array<i64: 8, 1>}, {transform_indices = @transform_13, window_bounds = array<i64: 1, 8, 384>}]} {
    %c0 = arith.constant 0 : index
    %c0_0 = arith.constant 0 : index
    %0 = vector.load %arg3[%c0, %c0_0] : memref<1x384xf32, #tpu.memory_space<vmem>>, vector<1x384xf32>
    %c0_1 = arith.constant 0 : index
    %c0_2 = arith.constant 0 : index
    %c0_3 = arith.constant 0 : index
    %1 = vector.load %arg2[%c0_1, %c0_2, %c0_3] : memref<1x8x1xf32, #tpu.memory_space<vmem>>, vector<1x8x1xf32>
    %2 = vector.shape_cast %1 : vector<1x8x1xf32> to vector<8x1xf32>
    %c0_4 = arith.constant 0 : index
    %c0_5 = arith.constant 0 : index
    %c0_6 = arith.constant 0 : index
    %3 = vector.load %arg4[%c0_4, %c0_5, %c0_6] : memref<9x8x4xf32, #tpu.memory_space<vmem>>, vector<1x8x4xf32>
    %4 = vector.shape_cast %3 : vector<1x8x4xf32> to vector<8x4xf32>
    %c0_7 = arith.constant 0 : index
    %c0_8 = arith.constant 0 : index
    %c0_9 = arith.constant 0 : index
    %5 = vector.load %arg1[%c0_7, %c0_8, %c0_9] : memref<1x4x512xf32, #tpu.memory_space<vmem>>, vector<1x4x384xf32>
    %6 = vector.shape_cast %5 : vector<1x4x384xf32> to vector<4x384xf32>
    %cst = arith.constant dense<0.000000e+00> : vector<8x384xf32>
    %7 = tpu.matmul %4, %6, %cst {dimension_numbers = #tpu.dot_dimension_numbers<[1], [0], [0], [1], [0, 0, 1, 1], [], []>} : vector<8x4xf32>, vector<4x384xf32>, vector<8x384xf32> -> vector<8x384xf32>
    %c1 = arith.constant 1 : index
    %c0_10 = arith.constant 0 : index
    %c0_11 = arith.constant 0 : index
    %8 = vector.load %arg4[%c1, %c0_10, %c0_11] : memref<9x8x4xf32, #tpu.memory_space<vmem>>, vector<1x8x4xf32>
    %9 = vector.shape_cast %8 : vector<1x8x4xf32> to vector<8x4xf32>
    %c0_12 = arith.constant 0 : index
    %c0_13 = arith.constant 0 : index
    %c1_14 = arith.constant 1 : index
    %10 = vector.load %arg1[%c0_12, %c0_13, %c1_14] : memref<1x4x512xf32, #tpu.memory_space<vmem>>, vector<1x4x384xf32>
    %11 = vector.shape_cast %10 : vector<1x4x384xf32> to vector<4x384xf32>
    %cst_15 = arith.constant dense<0.000000e+00> : vector<8x384xf32>
    %12 = tpu.matmul %9, %11, %cst_15 {dimension_numbers = #tpu.dot_dimension_numbers<[1], [0], [0], [1], [0, 0, 1, 1], [], []>} : vector<8x4xf32>, vector<4x384xf32>, vector<8x384xf32> -> vector<8x384xf32>
    %13 = arith.addf %7, %12 : vector<8x384xf32>
    %c2 = arith.constant 2 : index
    %c0_16 = arith.constant 0 : index
    %c0_17 = arith.constant 0 : index
    %14 = vector.load %arg4[%c2, %c0_16, %c0_17] : memref<9x8x4xf32, #tpu.memory_space<vmem>>, vector<1x8x4xf32>
    %15 = vector.shape_cast %14 : vector<1x8x4xf32> to vector<8x4xf32>
    %c0_18 = arith.constant 0 : index
    %c0_19 = arith.constant 0 : index
    %c2_20 = arith.constant 2 : index
    %16 = vector.load %arg1[%c0_18, %c0_19, %c2_20] : memref<1x4x512xf32, #tpu.memory_space<vmem>>, vector<1x4x384xf32>
    %17 = vector.shape_cast %16 : vector<1x4x384xf32> to vector<4x384xf32>
    %cst_21 = arith.constant dense<0.000000e+00> : vector<8x384xf32>
    %18 = tpu.matmul %15, %17, %cst_21 {dimension_numbers = #tpu.dot_dimension_numbers<[1], [0], [0], [1], [0, 0, 1, 1], [], []>} : vector<8x4xf32>, vector<4x384xf32>, vector<8x384xf32> -> vector<8x384xf32>
    %19 = arith.addf %13, %18 : vector<8x384xf32>
    %c3 = arith.constant 3 : index
    %c0_22 = arith.constant 0 : index
    %c0_23 = arith.constant 0 : index
    %20 = vector.load %arg4[%c3, %c0_22, %c0_23] : memref<9x8x4xf32, #tpu.memory_space<vmem>>, vector<1x8x4xf32>
    %21 = vector.shape_cast %20 : vector<1x8x4xf32> to vector<8x4xf32>
    %c0_24 = arith.constant 0 : index
    %c0_25 = arith.constant 0 : index
    %c18 = arith.constant 18 : index
    %22 = vector.load %arg1[%c0_24, %c0_25, %c18] : memref<1x4x512xf32, #tpu.memory_space<vmem>>, vector<1x4x384xf32>
    %23 = vector.shape_cast %22 : vector<1x4x384xf32> to vector<4x384xf32>
    %cst_26 = arith.constant dense<0.000000e+00> : vector<8x384xf32>
    %24 = tpu.matmul %21, %23, %cst_26 {dimension_numbers = #tpu.dot_dimension_numbers<[1], [0], [0], [1], [0, 0, 1, 1], [], []>} : vector<8x4xf32>, vector<4x384xf32>, vector<8x384xf32> -> vector<8x384xf32>
    %25 = arith.addf %19, %24 : vector<8x384xf32>
    %c4 = arith.constant 4 : index
    %c0_27 = arith.constant 0 : index
    %c0_28 = arith.constant 0 : index
    %26 = vector.load %arg4[%c4, %c0_27, %c0_28] : memref<9x8x4xf32, #tpu.memory_space<vmem>>, vector<1x8x4xf32>
    %27 = vector.shape_cast %26 : vector<1x8x4xf32> to vector<8x4xf32>
    %c0_29 = arith.constant 0 : index
    %c0_30 = arith.constant 0 : index
    %c19 = arith.constant 19 : index
    %28 = vector.load %arg1[%c0_29, %c0_30, %c19] : memref<1x4x512xf32, #tpu.memory_space<vmem>>, vector<1x4x384xf32>
    %29 = vector.shape_cast %28 : vector<1x4x384xf32> to vector<4x384xf32>
    %cst_31 = arith.constant dense<0.000000e+00> : vector<8x384xf32>
    %30 = tpu.matmul %27, %29, %cst_31 {dimension_numbers = #tpu.dot_dimension_numbers<[1], [0], [0], [1], [0, 0, 1, 1], [], []>} : vector<8x4xf32>, vector<4x384xf32>, vector<8x384xf32> -> vector<8x384xf32>
    %31 = arith.addf %25, %30 : vector<8x384xf32>
    %c5 = arith.constant 5 : index
    %c0_32 = arith.constant 0 : index
    %c0_33 = arith.constant 0 : index
    %32 = vector.load %arg4[%c5, %c0_32, %c0_33] : memref<9x8x4xf32, #tpu.memory_space<vmem>>, vector<1x8x4xf32>
    %33 = vector.shape_cast %32 : vector<1x8x4xf32> to vector<8x4xf32>
    %c0_34 = arith.constant 0 : index
    %c0_35 = arith.constant 0 : index
    %c20 = arith.constant 20 : index
    %34 = vector.load %arg1[%c0_34, %c0_35, %c20] : memref<1x4x512xf32, #tpu.memory_space<vmem>>, vector<1x4x384xf32>
    %35 = vector.shape_cast %34 : vector<1x4x384xf32> to vector<4x384xf32>
    %cst_36 = arith.constant dense<0.000000e+00> : vector<8x384xf32>
    %36 = tpu.matmul %33, %35, %cst_36 {dimension_numbers = #tpu.dot_dimension_numbers<[1], [0], [0], [1], [0, 0, 1, 1], [], []>} : vector<8x4xf32>, vector<4x384xf32>, vector<8x384xf32> -> vector<8x384xf32>
    %37 = arith.addf %31, %36 : vector<8x384xf32>
    %c6 = arith.constant 6 : index
    %c0_37 = arith.constant 0 : index
    %c0_38 = arith.constant 0 : index
    %38 = vector.load %arg4[%c6, %c0_37, %c0_38] : memref<9x8x4xf32, #tpu.memory_space<vmem>>, vector<1x8x4xf32>
    %39 = vector.shape_cast %38 : vector<1x8x4xf32> to vector<8x4xf32>
    %c0_39 = arith.constant 0 : index
    %c0_40 = arith.constant 0 : index
    %c36 = arith.constant 36 : index
    %40 = vector.load %arg1[%c0_39, %c0_40, %c36] : memref<1x4x512xf32, #tpu.memory_space<vmem>>, vector<1x4x384xf32>
    %41 = vector.shape_cast %40 : vector<1x4x384xf32> to vector<4x384xf32>
    %cst_41 = arith.constant dense<0.000000e+00> : vector<8x384xf32>
    %42 = tpu.matmul %39, %41, %cst_41 {dimension_numbers = #tpu.dot_dimension_numbers<[1], [0], [0], [1], [0, 0, 1, 1], [], []>} : vector<8x4xf32>, vector<4x384xf32>, vector<8x384xf32> -> vector<8x384xf32>
    %43 = arith.addf %37, %42 : vector<8x384xf32>
    %c7 = arith.constant 7 : index
    %c0_42 = arith.constant 0 : index
    %c0_43 = arith.constant 0 : index
    %44 = vector.load %arg4[%c7, %c0_42, %c0_43] : memref<9x8x4xf32, #tpu.memory_space<vmem>>, vector<1x8x4xf32>
    %45 = vector.shape_cast %44 : vector<1x8x4xf32> to vector<8x4xf32>
    %c0_44 = arith.constant 0 : index
    %c0_45 = arith.constant 0 : index
    %c37 = arith.constant 37 : index
    %46 = vector.load %arg1[%c0_44, %c0_45, %c37] : memref<1x4x512xf32, #tpu.memory_space<vmem>>, vector<1x4x384xf32>
    %47 = vector.shape_cast %46 : vector<1x4x384xf32> to vector<4x384xf32>
    %cst_46 = arith.constant dense<0.000000e+00> : vector<8x384xf32>
    %48 = tpu.matmul %45, %47, %cst_46 {dimension_numbers = #tpu.dot_dimension_numbers<[1], [0], [0], [1], [0, 0, 1, 1], [], []>} : vector<8x4xf32>, vector<4x384xf32>, vector<8x384xf32> -> vector<8x384xf32>
    %49 = arith.addf %43, %48 : vector<8x384xf32>
    %c8 = arith.constant 8 : index
    %c0_47 = arith.constant 0 : index
    %c0_48 = arith.constant 0 : index
    %50 = vector.load %arg4[%c8, %c0_47, %c0_48] : memref<9x8x4xf32, #tpu.memory_space<vmem>>, vector<1x8x4xf32>
    %51 = vector.shape_cast %50 : vector<1x8x4xf32> to vector<8x4xf32>
    %c0_49 = arith.constant 0 : index
    %c0_50 = arith.constant 0 : index
    %c38 = arith.constant 38 : index
    %52 = vector.load %arg1[%c0_49, %c0_50, %c38] : memref<1x4x512xf32, #tpu.memory_space<vmem>>, vector<1x4x384xf32>
    %53 = vector.shape_cast %52 : vector<1x4x384xf32> to vector<4x384xf32>
    %cst_51 = arith.constant dense<0.000000e+00> : vector<8x384xf32>
    %54 = tpu.matmul %51, %53, %cst_51 {dimension_numbers = #tpu.dot_dimension_numbers<[1], [0], [0], [1], [0, 0, 1, 1], [], []>} : vector<8x4xf32>, vector<4x384xf32>, vector<8x384xf32> -> vector<8x384xf32>
    %55 = arith.addf %49, %54 : vector<8x384xf32>
    %c0_52 = arith.constant 0 : index
    %c0_53 = arith.constant 0 : index
    %56 = vector.load %arg5[%c0_52, %c0_53] : memref<8x1xf32, #tpu.memory_space<vmem>>, vector<8x1xf32>
    %57 = vector.broadcast %56 : vector<8x1xf32> to vector<8x384xf32>
    %58 = arith.addf %55, %57 : vector<8x384xf32>
    %c0_54 = arith.constant 0 : index
    %c0_55 = arith.constant 0 : index
    %59 = vector.load %arg6[%c0_54, %c0_55] : memref<8x1xf32, #tpu.memory_space<vmem>>, vector<8x1xf32>
    %c0_56 = arith.constant 0 : index
    %c0_57 = arith.constant 0 : index
    %60 = vector.load %arg7[%c0_56, %c0_57] : memref<8x1xf32, #tpu.memory_space<vmem>>, vector<8x1xf32>
    %61 = vector.broadcast %0 : vector<1x384xf32> to vector<8x384xf32>
    %62 = arith.mulf %58, %61 : vector<8x384xf32>
    %cst_58 = arith.constant dense<0.000000e+00> : vector<8xf32>
    %63 = vector.multi_reduction <add>, %62, %cst_58 [1] : vector<8x384xf32> to vector<8xf32>
    %64 = vector.shape_cast %63 : vector<8xf32> to vector<8x1xf32>
    %cst_59 = arith.constant dense<0.000000e+00> : vector<8xf32>
    %65 = vector.multi_reduction <add>, %64, %cst_59 [1] : vector<8x1xf32> to vector<8xf32>
    %66 = vector.shape_cast %65 : vector<8xf32> to vector<8x1xf32>
    %cst_60 = arith.constant 2.560000e+02 : f32
    %67 = vector.broadcast %cst_60 : f32 to vector<8x1xf32>
    %68 = arith.divf %66, %67 : vector<8x1xf32>
    %69 = vector.broadcast %68 : vector<8x1xf32> to vector<8x384xf32>
    %70 = arith.subf %58, %69 : vector<8x384xf32>
    %71 = vector.broadcast %0 : vector<1x384xf32> to vector<8x384xf32>
    %72 = arith.mulf %70, %71 : vector<8x384xf32>
    %73 = arith.mulf %72, %72 : vector<8x384xf32>
    %cst_61 = arith.constant dense<0.000000e+00> : vector<8xf32>
    %74 = vector.multi_reduction <add>, %73, %cst_61 [1] : vector<8x384xf32> to vector<8xf32>
    %75 = vector.shape_cast %74 : vector<8xf32> to vector<8x1xf32>
    %cst_62 = arith.constant dense<0.000000e+00> : vector<8xf32>
    %76 = vector.multi_reduction <add>, %75, %cst_62 [1] : vector<8x1xf32> to vector<8xf32>
    %77 = vector.shape_cast %76 : vector<8xf32> to vector<8x1xf32>
    %cst_63 = arith.constant 2.560000e+02 : f32
    %78 = vector.broadcast %cst_63 : f32 to vector<8x1xf32>
    %79 = arith.divf %77, %78 : vector<8x1xf32>
    %80 = vector.broadcast %68 : vector<8x1xf32> to vector<8x384xf32>
    %81 = arith.subf %58, %80 : vector<8x384xf32>
    %cst_64 = arith.constant 9.99999974E-6 : f32
    %82 = vector.broadcast %cst_64 : f32 to vector<8x1xf32>
    %83 = arith.addf %79, %82 : vector<8x1xf32>
    %84 = math.rsqrt %83 : vector<8x1xf32>
    %85 = vector.broadcast %84 : vector<8x1xf32> to vector<8x384xf32>
    %86 = arith.mulf %81, %85 : vector<8x384xf32>
    %87 = vector.broadcast %59 : vector<8x1xf32> to vector<8x384xf32>
    %88 = arith.mulf %86, %87 : vector<8x384xf32>
    %89 = vector.broadcast %60 : vector<8x1xf32> to vector<8x384xf32>
    %90 = arith.addf %88, %89 : vector<8x384xf32>
    %91 = arith.negf %90 : vector<8x384xf32>
    %92 = math.exp %91 : vector<8x384xf32>
    %cst_65 = arith.constant 1.000000e+00 : f32
    %93 = vector.broadcast %cst_65 : f32 to vector<8x384xf32>
    %94 = arith.addf %93, %92 : vector<8x384xf32>
    %95 = arith.divf %93, %94 : vector<8x384xf32>
    %96 = arith.mulf %90, %95 : vector<8x384xf32>
    %97 = vector.broadcast %2 : vector<8x1xf32> to vector<8x384xf32>
    %98 = arith.addf %96, %97 : vector<8x384xf32>
    %99 = vector.broadcast %0 : vector<1x384xf32> to vector<8x384xf32>
    %100 = arith.mulf %98, %99 : vector<8x384xf32>
    %cst_66 = arith.constant 0.000000e+00 : f32
    %101 = vector.broadcast %cst_66 : f32 to vector<8x512xf32>
    %c0_67 = arith.constant 0 : index
    %c0_68 = arith.constant 0 : index
    %102 = vector.load %arg15[%c0_67, %c0_68] : memref<8x512xf32, #tpu.memory_space<vmem>>, vector<8x512xf32>
    tpu.vector_store %arg15[%c0_67, %c0_68], %101 {strides = array<i32>} : memref<8x512xf32, #tpu.memory_space<vmem>>, vector<8x512xf32>,
    %c0_69 = arith.constant 0 : index
    %c19_70 = arith.constant 19 : index
    %103 = vector.load %arg15[%c0_69, %c19_70] : memref<8x512xf32, #tpu.memory_space<vmem>>, vector<8x384xf32>
    tpu.vector_store %arg15[%c0_69, %c19_70], %100 {strides = array<i32>} : memref<8x512xf32, #tpu.memory_space<vmem>>, vector<8x384xf32>,
    %c0_71 = arith.constant 0 : index
    %c0_72 = arith.constant 0 : index
    %c0_73 = arith.constant 0 : index
    %104 = vector.load %arg8[%c0_71, %c0_72, %c0_73] : memref<9x8x8xf32, #tpu.memory_space<vmem>>, vector<1x8x8xf32>
    %105 = vector.shape_cast %104 : vector<1x8x8xf32> to vector<8x8xf32>
    %c0_74 = arith.constant 0 : index
    %c0_75 = arith.constant 0 : index
    %106 = vector.load %arg15[%c0_74, %c0_75] : memref<8x512xf32, #tpu.memory_space<vmem>>, vector<8x384xf32>
    %cst_76 = arith.constant dense<0.000000e+00> : vector<8x384xf32>
    %107 = tpu.matmul %105, %106, %cst_76 {dimension_numbers = #tpu.dot_dimension_numbers<[1], [0], [0], [1], [0, 0, 1, 1], [], []>} : vector<8x8xf32>, vector<8x384xf32>, vector<8x384xf32> -> vector<8x384xf32>
    %c1_77 = arith.constant 1 : index
    %c0_78 = arith.constant 0 : index
    %c0_79 = arith.constant 0 : index
    %108 = vector.load %arg8[%c1_77, %c0_78, %c0_79] : memref<9x8x8xf32, #tpu.memory_space<vmem>>, vector<1x8x8xf32>
    %109 = vector.shape_cast %108 : vector<1x8x8xf32> to vector<8x8xf32>
    %c0_80 = arith.constant 0 : index
    %c1_81 = arith.constant 1 : index
    %110 = vector.load %arg15[%c0_80, %c1_81] : memref<8x512xf32, #tpu.memory_space<vmem>>, vector<8x384xf32>
    %cst_82 = arith.constant dense<0.000000e+00> : vector<8x384xf32>
    %111 = tpu.matmul %109, %110, %cst_82 {dimension_numbers = #tpu.dot_dimension_numbers<[1], [0], [0], [1], [0, 0, 1, 1], [], []>} : vector<8x8xf32>, vector<8x384xf32>, vector<8x384xf32> -> vector<8x384xf32>
    %112 = arith.addf %107, %111 : vector<8x384xf32>
    %c2_83 = arith.constant 2 : index
    %c0_84 = arith.constant 0 : index
    %c0_85 = arith.constant 0 : index
    %113 = vector.load %arg8[%c2_83, %c0_84, %c0_85] : memref<9x8x8xf32, #tpu.memory_space<vmem>>, vector<1x8x8xf32>
    %114 = vector.shape_cast %113 : vector<1x8x8xf32> to vector<8x8xf32>
    %c0_86 = arith.constant 0 : index
    %c2_87 = arith.constant 2 : index
    %115 = vector.load %arg15[%c0_86, %c2_87] : memref<8x512xf32, #tpu.memory_space<vmem>>, vector<8x384xf32>
    %cst_88 = arith.constant dense<0.000000e+00> : vector<8x384xf32>
    %116 = tpu.matmul %114, %115, %cst_88 {dimension_numbers = #tpu.dot_dimension_numbers<[1], [0], [0], [1], [0, 0, 1, 1], [], []>} : vector<8x8xf32>, vector<8x384xf32>, vector<8x384xf32> -> vector<8x384xf32>
    %117 = arith.addf %112, %116 : vector<8x384xf32>
    %c3_89 = arith.constant 3 : index
    %c0_90 = arith.constant 0 : index
    %c0_91 = arith.constant 0 : index
    %118 = vector.load %arg8[%c3_89, %c0_90, %c0_91] : memref<9x8x8xf32, #tpu.memory_space<vmem>>, vector<1x8x8xf32>
    %119 = vector.shape_cast %118 : vector<1x8x8xf32> to vector<8x8xf32>
    %c0_92 = arith.constant 0 : index
    %c18_93 = arith.constant 18 : index
    %120 = vector.load %arg15[%c0_92, %c18_93] : memref<8x512xf32, #tpu.memory_space<vmem>>, vector<8x384xf32>
    %cst_94 = arith.constant dense<0.000000e+00> : vector<8x384xf32>
    %121 = tpu.matmul %119, %120, %cst_94 {dimension_numbers = #tpu.dot_dimension_numbers<[1], [0], [0], [1], [0, 0, 1, 1], [], []>} : vector<8x8xf32>, vector<8x384xf32>, vector<8x384xf32> -> vector<8x384xf32>
    %122 = arith.addf %117, %121 : vector<8x384xf32>
    %c4_95 = arith.constant 4 : index
    %c0_96 = arith.constant 0 : index
    %c0_97 = arith.constant 0 : index
    %123 = vector.load %arg8[%c4_95, %c0_96, %c0_97] : memref<9x8x8xf32, #tpu.memory_space<vmem>>, vector<1x8x8xf32>
    %124 = vector.shape_cast %123 : vector<1x8x8xf32> to vector<8x8xf32>
    %c0_98 = arith.constant 0 : index
    %c19_99 = arith.constant 19 : index
    %125 = vector.load %arg15[%c0_98, %c19_99] : memref<8x512xf32, #tpu.memory_space<vmem>>, vector<8x384xf32>
    %cst_100 = arith.constant dense<0.000000e+00> : vector<8x384xf32>
    %126 = tpu.matmul %124, %125, %cst_100 {dimension_numbers = #tpu.dot_dimension_numbers<[1], [0], [0], [1], [0, 0, 1, 1], [], []>} : vector<8x8xf32>, vector<8x384xf32>, vector<8x384xf32> -> vector<8x384xf32>
    %127 = arith.addf %122, %126 : vector<8x384xf32>
    %c5_101 = arith.constant 5 : index
    %c0_102 = arith.constant 0 : index
    %c0_103 = arith.constant 0 : index
    %128 = vector.load %arg8[%c5_101, %c0_102, %c0_103] : memref<9x8x8xf32, #tpu.memory_space<vmem>>, vector<1x8x8xf32>
    %129 = vector.shape_cast %128 : vector<1x8x8xf32> to vector<8x8xf32>
    %c0_104 = arith.constant 0 : index
    %c20_105 = arith.constant 20 : index
    %130 = vector.load %arg15[%c0_104, %c20_105] : memref<8x512xf32, #tpu.memory_space<vmem>>, vector<8x384xf32>
    %cst_106 = arith.constant dense<0.000000e+00> : vector<8x384xf32>
    %131 = tpu.matmul %129, %130, %cst_106 {dimension_numbers = #tpu.dot_dimension_numbers<[1], [0], [0], [1], [0, 0, 1, 1], [], []>} : vector<8x8xf32>, vector<8x384xf32>, vector<8x384xf32> -> vector<8x384xf32>
    %132 = arith.addf %127, %131 : vector<8x384xf32>
    %c6_107 = arith.constant 6 : index
    %c0_108 = arith.constant 0 : index
    %c0_109 = arith.constant 0 : index
    %133 = vector.load %arg8[%c6_107, %c0_108, %c0_109] : memref<9x8x8xf32, #tpu.memory_space<vmem>>, vector<1x8x8xf32>
    %134 = vector.shape_cast %133 : vector<1x8x8xf32> to vector<8x8xf32>
    %c0_110 = arith.constant 0 : index
    %c36_111 = arith.constant 36 : index
    %135 = vector.load %arg15[%c0_110, %c36_111] : memref<8x512xf32, #tpu.memory_space<vmem>>, vector<8x384xf32>
    %cst_112 = arith.constant dense<0.000000e+00> : vector<8x384xf32>
    %136 = tpu.matmul %134, %135, %cst_112 {dimension_numbers = #tpu.dot_dimension_numbers<[1], [0], [0], [1], [0, 0, 1, 1], [], []>} : vector<8x8xf32>, vector<8x384xf32>, vector<8x384xf32> -> vector<8x384xf32>
    %137 = arith.addf %132, %136 : vector<8x384xf32>
    %c7_113 = arith.constant 7 : index
    %c0_114 = arith.constant 0 : index
    %c0_115 = arith.constant 0 : index
    %138 = vector.load %arg8[%c7_113, %c0_114, %c0_115] : memref<9x8x8xf32, #tpu.memory_space<vmem>>, vector<1x8x8xf32>
    %139 = vector.shape_cast %138 : vector<1x8x8xf32> to vector<8x8xf32>
    %c0_116 = arith.constant 0 : index
    %c37_117 = arith.constant 37 : index
    %140 = vector.load %arg15[%c0_116, %c37_117] : memref<8x512xf32, #tpu.memory_space<vmem>>, vector<8x384xf32>
    %cst_118 = arith.constant dense<0.000000e+00> : vector<8x384xf32>
    %141 = tpu.matmul %139, %140, %cst_118 {dimension_numbers = #tpu.dot_dimension_numbers<[1], [0], [0], [1], [0, 0, 1, 1], [], []>} : vector<8x8xf32>, vector<8x384xf32>, vector<8x384xf32> -> vector<8x384xf32>
    %142 = arith.addf %137, %141 : vector<8x384xf32>
    %c8_119 = arith.constant 8 : index
    %c0_120 = arith.constant 0 : index
    %c0_121 = arith.constant 0 : index
    %143 = vector.load %arg8[%c8_119, %c0_120, %c0_121] : memref<9x8x8xf32, #tpu.memory_space<vmem>>, vector<1x8x8xf32>
    %144 = vector.shape_cast %143 : vector<1x8x8xf32> to vector<8x8xf32>
    %c0_122 = arith.constant 0 : index
    %c38_123 = arith.constant 38 : index
    %145 = vector.load %arg15[%c0_122, %c38_123] : memref<8x512xf32, #tpu.memory_space<vmem>>, vector<8x384xf32>
    %cst_124 = arith.constant dense<0.000000e+00> : vector<8x384xf32>
    %146 = tpu.matmul %144, %145, %cst_124 {dimension_numbers = #tpu.dot_dimension_numbers<[1], [0], [0], [1], [0, 0, 1, 1], [], []>} : vector<8x8xf32>, vector<8x384xf32>, vector<8x384xf32> -> vector<8x384xf32>
    %147 = arith.addf %142, %146 : vector<8x384xf32>
    %c0_125 = arith.constant 0 : index
    %c0_126 = arith.constant 0 : index
    %148 = vector.load %arg9[%c0_125, %c0_126] : memref<8x1xf32, #tpu.memory_space<vmem>>, vector<8x1xf32>
    %149 = vector.broadcast %148 : vector<8x1xf32> to vector<8x384xf32>
    %150 = arith.addf %147, %149 : vector<8x384xf32>
    %c0_127 = arith.constant 0 : index
    %c0_128 = arith.constant 0 : index
    %151 = vector.load %arg10[%c0_127, %c0_128] : memref<8x1xf32, #tpu.memory_space<vmem>>, vector<8x1xf32>
    %c0_129 = arith.constant 0 : index
    %c0_130 = arith.constant 0 : index
    %152 = vector.load %arg11[%c0_129, %c0_130] : memref<8x1xf32, #tpu.memory_space<vmem>>, vector<8x1xf32>
    %153 = vector.broadcast %0 : vector<1x384xf32> to vector<8x384xf32>
    %154 = arith.mulf %150, %153 : vector<8x384xf32>
    %cst_131 = arith.constant dense<0.000000e+00> : vector<8xf32>
    %155 = vector.multi_reduction <add>, %154, %cst_131 [1] : vector<8x384xf32> to vector<8xf32>
    %156 = vector.shape_cast %155 : vector<8xf32> to vector<8x1xf32>
    %cst_132 = arith.constant dense<0.000000e+00> : vector<8xf32>
    %157 = vector.multi_reduction <add>, %156, %cst_132 [1] : vector<8x1xf32> to vector<8xf32>
    %158 = vector.shape_cast %157 : vector<8xf32> to vector<8x1xf32>
    %cst_133 = arith.constant 2.560000e+02 : f32
    %159 = vector.broadcast %cst_133 : f32 to vector<8x1xf32>
    %160 = arith.divf %158, %159 : vector<8x1xf32>
    %161 = vector.broadcast %160 : vector<8x1xf32> to vector<8x384xf32>
    %162 = arith.subf %150, %161 : vector<8x384xf32>
    %163 = vector.broadcast %0 : vector<1x384xf32> to vector<8x384xf32>
    %164 = arith.mulf %162, %163 : vector<8x384xf32>
    %165 = arith.mulf %164, %164 : vector<8x384xf32>
    %cst_134 = arith.constant dense<0.000000e+00> : vector<8xf32>
    %166 = vector.multi_reduction <add>, %165, %cst_134 [1] : vector<8x384xf32> to vector<8xf32>
    %167 = vector.shape_cast %166 : vector<8xf32> to vector<8x1xf32>
    %cst_135 = arith.constant dense<0.000000e+00> : vector<8xf32>
    %168 = vector.multi_reduction <add>, %167, %cst_135 [1] : vector<8x1xf32> to vector<8xf32>
    %169 = vector.shape_cast %168 : vector<8xf32> to vector<8x1xf32>
    %cst_136 = arith.constant 2.560000e+02 : f32
    %170 = vector.broadcast %cst_136 : f32 to vector<8x1xf32>
    %171 = arith.divf %169, %170 : vector<8x1xf32>
    %172 = vector.broadcast %160 : vector<8x1xf32> to vector<8x384xf32>
    %173 = arith.subf %150, %172 : vector<8x384xf32>
    %cst_137 = arith.constant 9.99999974E-6 : f32
    %174 = vector.broadcast %cst_137 : f32 to vector<8x1xf32>
    %175 = arith.addf %171, %174 : vector<8x1xf32>
    %176 = math.rsqrt %175 : vector<8x1xf32>
    %177 = vector.broadcast %176 : vector<8x1xf32> to vector<8x384xf32>
    %178 = arith.mulf %173, %177 : vector<8x384xf32>
    %179 = vector.broadcast %151 : vector<8x1xf32> to vector<8x384xf32>
    %180 = arith.mulf %178, %179 : vector<8x384xf32>
    %181 = vector.broadcast %152 : vector<8x1xf32> to vector<8x384xf32>
    %182 = arith.addf %180, %181 : vector<8x384xf32>
    %183 = arith.negf %182 : vector<8x384xf32>
    %184 = math.exp %183 : vector<8x384xf32>
    %cst_138 = arith.constant 1.000000e+00 : f32
    %185 = vector.broadcast %cst_138 : f32 to vector<8x384xf32>
    %186 = arith.addf %185, %184 : vector<8x384xf32>
    %187 = arith.divf %185, %186 : vector<8x384xf32>
    %188 = arith.mulf %182, %187 : vector<8x384xf32>
    %c0_139 = arith.constant 0 : index
    %c0_140 = arith.constant 0 : index
    %189 = vector.load %arg12[%c0_139, %c0_140] : memref<8x4xf32, #tpu.memory_space<vmem>>, vector<8x4xf32>
    %c0_141 = arith.constant 0 : index
    %c0_142 = arith.constant 0 : index
    %c19_143 = arith.constant 19 : index
    %190 = vector.load %arg1[%c0_141, %c0_142, %c19_143] : memref<1x4x512xf32, #tpu.memory_space<vmem>>, vector<1x4x384xf32>
    %191 = vector.shape_cast %190 : vector<1x4x384xf32> to vector<4x384xf32>
    %cst_144 = arith.constant dense<0.000000e+00> : vector<8x384xf32>
    %192 = tpu.matmul %189, %191, %cst_144 {dimension_numbers = #tpu.dot_dimension_numbers<[1], [0], [0], [1], [0, 0, 1, 1], [], []>} : vector<8x4xf32>, vector<4x384xf32>, vector<8x384xf32> -> vector<8x384xf32>
    %c0_145 = arith.constant 0 : index
    %c0_146 = arith.constant 0 : index
    %193 = vector.load %arg13[%c0_145, %c0_146] : memref<8x1xf32, #tpu.memory_space<vmem>>, vector<8x1xf32>
    %194 = vector.broadcast %193 : vector<8x1xf32> to vector<8x384xf32>
    %195 = arith.addf %192, %194 : vector<8x384xf32>
    %196 = arith.addf %188, %195 : vector<8x384xf32>
    %197 = vector.broadcast %0 : vector<1x384xf32> to vector<8x384xf32>
    %198 = arith.mulf %196, %197 : vector<8x384xf32>
    %c0_147 = arith.constant 0 : index
    %c0_148 = arith.constant 0 : index
    %c0_149 = arith.constant 0 : index
    %199 = vector.load %arg14[%c0_147, %c0_148, %c0_149] : memref<1x8x384xf32, #tpu.memory_space<vmem>>, vector<1x8x384xf32>
    %200 = vector.shape_cast %199 : vector<1x8x384xf32> to vector<8x384xf32>
    %201 = vector.shape_cast %198 : vector<8x384xf32> to vector<1x8x384xf32>
    tpu.vector_store %arg14[%c0_147, %c0_148, %c0_149], %201 {strides = array<i32>} : memref<1x8x384xf32, #tpu.memory_space<vmem>>, vector<1x8x384xf32>,
    return
  }
  func.func @transform_0(%arg0: i32) -> (i32, i32, i32) {
    %c0_i32 = arith.constant 0 : i32
    %c0_i32_0 = arith.constant 0 : i32
    %c0_i32_1 = arith.constant 0 : i32
    return %arg0, %c0_i32, %c0_i32_0 : i32, i32, i32
  }
  func.func @transform_1(%arg0: i32) -> (i32, i32, i32) {
    %c0_i32 = arith.constant 0 : i32
    %c0_i32_0 = arith.constant 0 : i32
    %c0_i32_1 = arith.constant 0 : i32
    return %arg0, %c0_i32, %c0_i32_0 : i32, i32, i32
  }
  func.func @transform_2(%arg0: i32) -> (i32, i32) {
    %c0_i32 = arith.constant 0 : i32
    %c0_i32_0 = arith.constant 0 : i32
    %c0_i32_1 = arith.constant 0 : i32
    return %c0_i32, %c0_i32_0 : i32, i32
  }
  func.func @transform_3(%arg0: i32) -> (i32, i32, i32) {
    %c0_i32 = arith.constant 0 : i32
    %c0_i32_0 = arith.constant 0 : i32
    %c0_i32_1 = arith.constant 0 : i32
    %c0_i32_2 = arith.constant 0 : i32
    return %c0_i32, %c0_i32_0, %c0_i32_1 : i32, i32, i32
  }
  func.func @transform_4(%arg0: i32) -> (i32, i32) {
    %c0_i32 = arith.constant 0 : i32
    %c0_i32_0 = arith.constant 0 : i32
    %c0_i32_1 = arith.constant 0 : i32
    return %c0_i32, %c0_i32_0 : i32, i32
  }
  func.func @transform_5(%arg0: i32) -> (i32, i32) {
    %c0_i32 = arith.constant 0 : i32
    %c0_i32_0 = arith.constant 0 : i32
    %c0_i32_1 = arith.constant 0 : i32
    return %c0_i32, %c0_i32_0 : i32, i32
  }
  func.func @transform_6(%arg0: i32) -> (i32, i32) {
    %c0_i32 = arith.constant 0 : i32
    %c0_i32_0 = arith.constant 0 : i32
    %c0_i32_1 = arith.constant 0 : i32
    return %c0_i32, %c0_i32_0 : i32, i32
  }
  func.func @transform_7(%arg0: i32) -> (i32, i32, i32) {
    %c0_i32 = arith.constant 0 : i32
    %c0_i32_0 = arith.constant 0 : i32
    %c0_i32_1 = arith.constant 0 : i32
    %c0_i32_2 = arith.constant 0 : i32
    return %c0_i32, %c0_i32_0, %c0_i32_1 : i32, i32, i32
  }
  func.func @transform_8(%arg0: i32) -> (i32, i32) {
    %c0_i32 = arith.constant 0 : i32
    %c0_i32_0 = arith.constant 0 : i32
    %c0_i32_1 = arith.constant 0 : i32
    return %c0_i32, %c0_i32_0 : i32, i32
  }
  func.func @transform_9(%arg0: i32) -> (i32, i32) {
    %c0_i32 = arith.constant 0 : i32
    %c0_i32_0 = arith.constant 0 : i32
    %c0_i32_1 = arith.constant 0 : i32
    return %c0_i32, %c0_i32_0 : i32, i32
  }
  func.func @transform_10(%arg0: i32) -> (i32, i32) {
    %c0_i32 = arith.constant 0 : i32
    %c0_i32_0 = arith.constant 0 : i32
    %c0_i32_1 = arith.constant 0 : i32
    return %c0_i32, %c0_i32_0 : i32, i32
  }
  func.func @transform_11(%arg0: i32) -> (i32, i32) {
    %c0_i32 = arith.constant 0 : i32
    %c0_i32_0 = arith.constant 0 : i32
    %c0_i32_1 = arith.constant 0 : i32
    return %c0_i32, %c0_i32_0 : i32, i32
  }
  func.func @transform_12(%arg0: i32) -> (i32, i32) {
    %c0_i32 = arith.constant 0 : i32
    %c0_i32_0 = arith.constant 0 : i32
    %c0_i32_1 = arith.constant 0 : i32
    return %c0_i32, %c0_i32_0 : i32, i32
  }
  func.func @transform_13(%arg0: i32) -> (i32, i32, i32) {
    %c0_i32 = arith.constant 0 : i32
    %c0_i32_0 = arith.constant 0 : i32
    %c0_i32_1 = arith.constant 0 : i32
    return %arg0, %c0_i32, %c0_i32_0 : i32, i32, i32
  }
}

</mosaic_0001>

<llo_original>
// kernel: tpu_custom_call.1
$region0: #{tpu_custom_call.1}
  #allocation0 [shape = 'u32[]', space=smem, size = 0x4, offset = 0x4, fixed_abs, tag = 'smem constant byte address 0x4 - core index']
  #allocation1 [shape = 'u32[144,128]{1,0:T(1,128)}', space=vmem, size = 0x12000, scoped, tag = 'internal scratch']
  #allocation2 [shape = 'f32[8,512]{1,0:T(8,128)}', space=vmem, size = 0x4000, scoped, tag = 'scratch operand']
  %s0 = inlined_call_operand.vmem [shape: f32[2,4,512], index: 0, kind: input, shape index: {}]
  %s1 = inlined_call_operand.vmem [shape: f32[2,8,1], index: 1, kind: input, shape index: {}]
  %s2 = inlined_call_operand.vmem [shape: f32[1,384], index: 2, kind: input, shape index: {}]
  %s3 = inlined_call_operand.vmem [shape: f32[9,8,4], index: 3, kind: input, shape index: {}]
  %s4 = inlined_call_operand.vmem [shape: f32[8,1], index: 4, kind: input, shape index: {}]
  %s5 = inlined_call_operand.vmem [shape: f32[8,1], index: 5, kind: input, shape index: {}]
  %s6 = inlined_call_operand.vmem [shape: f32[8,1], index: 6, kind: input, shape index: {}]
  %s7 = inlined_call_operand.vmem [shape: f32[9,8,8], index: 7, kind: input, shape index: {}]
  %s8 = inlined_call_operand.vmem [shape: f32[8,1], index: 8, kind: input, shape index: {}]
  %s9 = inlined_call_operand.vmem [shape: f32[8,1], index: 9, kind: input, shape index: {}]
  %s10 = inlined_call_operand.vmem [shape: f32[8,1], index: 10, kind: input, shape index: {}]
  %s11 = inlined_call_operand.vmem [shape: f32[8,4], index: 11, kind: input, shape index: {}]
  %s12 = inlined_call_operand.vmem [shape: f32[8,1], index: 12, kind: input, shape index: {}]
  %s13 = inlined_call_operand.hbm [shape: f32[2,8,384], index: 13, kind: output, shape index: {}]
  %s14 = sld [smem:[#allocation0]]
  $region85: #{tpu_custom_call.1} parent=0
    _
  %s16 = ssub.s32 1, %s14
  %s17 = scalar_select 0, %s16, %s14
  $region1: #{tpu_custom_call.1} parent=0
    #allocation3 [shape = 'u8[24576]{0}', space=vmem, size = 0x6000, scoped, tag = 'output window, operand 0']
    #allocation4 [shape = 's32[2]{0}', space=sflag, size = 0x8, scoped, tag = 'scoped memory for tpu_custom_call.1']
    %18 = vsyncpa [#allocation4], 0
    %s19 = scalar_lea.sflag [#allocation4], 1
    %20 = vsyncpa %s19, 0
    loop: start=0, step=1, limit=4
    $region2: #{tpu_custom_call.1} parent=1 // loop_pre_header
      _
    $region3: #{tpu_custom_call.1} parent=1 // loop_header
      %s22 = sphi 0, %s26
      %p23 = scmp.ge.s32.totalorder %s22, 4
      %s32 = sphi 0, %s34
      %s35 = sphi 0, %s32
      %s36 = sphi 0, %s35
      %s52 = sphi 0, %s36
      %s58 = sphi 0, %s60
      %s61 = sphi 0, %s58
      %s62 = sphi 0, %s61
      %s78 = sphi 0, %s62
      %s82 = sphi 0, %s82
      %s84 = sphi 0, %s82
      %s85 = sphi 0, %s84
      %s99 = sphi 0, %s85
      %s103 = sphi 0, %s103
      %s105 = sphi 0, %s103
      %s106 = sphi 0, %s105
      %s120 = sphi 0, %s106
      %s124 = sphi 0, %s124
      %s126 = sphi 0, %s124
      %s127 = sphi 0, %s126
      %s141 = sphi 0, %s127
      %s145 = sphi 0, %s145
      %s147 = sphi 0, %s145
      %s148 = sphi 0, %s147
      %s162 = sphi 0, %s148
      %s166 = sphi 0, %s166
      %s168 = sphi 0, %s166
      %s169 = sphi 0, %s168
      %s183 = sphi 0, %s169
      %s187 = sphi 0, %s187
      %s189 = sphi 0, %s187
      %s190 = sphi 0, %s189
      %s204 = sphi 0, %s190
      %s208 = sphi 0, %s208
      %s210 = sphi 0, %s208
      %s211 = sphi 0, %s210
      %s225 = sphi 0, %s211
      %s229 = sphi 0, %s229
      %s231 = sphi 0, %s229
      %s232 = sphi 0, %s231
      %s246 = sphi 0, %s232
      %s250 = sphi 0, %s250
      %s252 = sphi 0, %s250
      %s253 = sphi 0, %s252
      %s267 = sphi 0, %s253
      %s271 = sphi 0, %s271
      %s273 = sphi 0, %s271
      %s274 = sphi 0, %s273
      %s288 = sphi 0, %s274
      %s292 = sphi 0, %s292
      %s294 = sphi 0, %s292
      %s295 = sphi 0, %s294
      %s309 = sphi 0, %s295
      %s315 = sphi 0, %s317
      %s318 = sphi 0, %s315
      %s319 = sphi 0, %s318
      %s335 = sphi 0, %s319
    $region4: #{tpu_custom_call.1} parent=1 // loop_header_branch
      %25 = sbr.rel (%p23) target = $region8
    $region5: #{tpu_custom_call.1} parent=1 // loop_body
      %s27 = ssub.s32 %s22, 1
      %s28 = ssub.s32 %s22, 2
      %s29 = sadd.s32 %s22, 1
      %s30 = ssub.s32 %s22, %s29
      %p31 = scmp.eq.s32.totalorder %s30, 0
      %s33 = sadd.s32 %s32, 1
      %s34 = scalar_select %p31, %s32, %s33
      %p37 = pneg %p31
      %p38 = scmp.eq.s32.totalorder %s22, 1
      %p39 = por %p37, %p38
      %p40 = scmp.ne.s32.totalorder %s32, %s35
      %p41 = scmp.eq.s32.totalorder %s22, 0
      %p42 = por %p40, %p41
      %p43 = scmp.ne.s32.totalorder %s32, %s35
      %p44 = scmp.eq.s32.totalorder %s27, 1
      %p45 = por %p43, %p44
      %p46 = scmp.ne.s32.totalorder %s35, %s36
      %p47 = scmp.eq.s32.totalorder %s27, 0
      %p48 = por %p46, %p47
      %p49 = scmp.ne.s32.totalorder %s35, %s36
      %p50 = scmp.eq.s32.totalorder %s28, 1
      %p51 = por %p49, %p50
      %p53 = scmp.ne.s32.totalorder %s36, %s52
      %p54 = scmp.eq.s32.totalorder %s28, 0
      %p55 = por %p53, %p54
      %s56 = ssub.s32 %s22, %s29
      %p57 = scmp.eq.s32.totalorder %s56, 0
      %s59 = sadd.s32 %s58, 1
      %s60 = scalar_select %p57, %s58, %s59
      %p63 = pneg %p57
      %p64 = scmp.eq.s32.totalorder %s22, 1
      %p65 = por %p63, %p64
      %p66 = scmp.ne.s32.totalorder %s58, %s61
      %p67 = scmp.eq.s32.totalorder %s22, 0
      %p68 = por %p66, %p67
      %p69 = scmp.ne.s32.totalorder %s58, %s61
      %p70 = scmp.eq.s32.totalorder %s27, 1
      %p71 = por %p69, %p70
      %p72 = scmp.ne.s32.totalorder %s61, %s62
      %p73 = scmp.eq.s32.totalorder %s27, 0
      %p74 = por %p72, %p73
      %p75 = scmp.ne.s32.totalorder %s61, %s62
      %p76 = scmp.eq.s32.totalorder %s28, 1
      %p77 = por %p75, %p76
      %p79 = scmp.ne.s32.totalorder %s62, %s78
      %p80 = scmp.eq.s32.totalorder %s28, 0
      %p81 = por %p79, %p80
      %s83 = sadd.s32 %s82, 1
      %p86 = scmp.eq.s32.totalorder %s22, 1
      %p87 = scmp.ne.s32.totalorder %s82, %s84
      %p88 = scmp.eq.s32.totalorder %s22, 0
      %p89 = por %p87, %p88
      %p90 = scmp.ne.s32.totalorder %s82, %s84
      %p91 = scmp.eq.s32.totalorder %s27, 1
      %p92 = por %p90, %p91
      %p93 = scmp.ne.s32.totalorder %s84, %s85
      %p94 = scmp.eq.s32.totalorder %s27, 0
      %p95 = por %p93, %p94
      %p96 = scmp.ne.s32.totalorder %s84, %s85
      %p97 = scmp.eq.s32.totalorder %s28, 1
      %p98 = por %p96, %p97
      %p100 = scmp.ne.s32.totalorder %s85, %s99
      %p101 = scmp.eq.s32.totalorder %s28, 0
      %p102 = por %p100, %p101
      %s104 = sadd.s32 %s103, 1
      %p107 = scmp.eq.s32.totalorder %s22, 1
      %p108 = scmp.ne.s32.totalorder %s103, %s105
      %p109 = scmp.eq.s32.totalorder %s22, 0
      %p110 = por %p108, %p109
      %p111 = scmp.ne.s32.totalorder %s103, %s105
      %p112 = scmp.eq.s32.totalorder %s27, 1
      %p113 = por %p111, %p112
      %p114 = scmp.ne.s32.totalorder %s105, %s106
      %p115 = scmp.eq.s32.totalorder %s27, 0
      %p116 = por %p114, %p115
      %p117 = scmp.ne.s32.totalorder %s105, %s106
      %p118 = scmp.eq.s32.totalorder %s28, 1
      %p119 = por %p117, %p118
      %p121 = scmp.ne.s32.totalorder %s106, %s120
      %p122 = scmp.eq.s32.totalorder %s28, 0
      %p123 = por %p121, %p122
      %s125 = sadd.s32 %s124, 1
      %p128 = scmp.eq.s32.totalorder %s22, 1
      %p129 = scmp.ne.s32.totalorder %s124, %s126
      %p130 = scmp.eq.s32.totalorder %s22, 0
      %p131 = por %p129, %p130
      %p132 = scmp.ne.s32.totalorder %s124, %s126
      %p133 = scmp.eq.s32.totalorder %s27, 1
      %p134 = por %p132, %p133
      %p135 = scmp.ne.s32.totalorder %s126, %s127
      %p136 = scmp.eq.s32.totalorder %s27, 0
      %p137 = por %p135, %p136
      %p138 = scmp.ne.s32.totalorder %s126, %s127
      %p139 = scmp.eq.s32.totalorder %s28, 1
      %p140 = por %p138, %p139
      %p142 = scmp.ne.s32.totalorder %s127, %s141
      %p143 = scmp.eq.s32.totalorder %s28, 0
      %p144 = por %p142, %p143
      %s146 = sadd.s32 %s145, 1
      %p149 = scmp.eq.s32.totalorder %s22, 1
      %p150 = scmp.ne.s32.totalorder %s145, %s147
      %p151 = scmp.eq.s32.totalorder %s22, 0
      %p152 = por %p150, %p151
      %p153 = scmp.ne.s32.totalorder %s145, %s147
      %p154 = scmp.eq.s32.totalorder %s27, 1
      %p155 = por %p153, %p154
      %p156 = scmp.ne.s32.totalorder %s147, %s148
      %p157 = scmp.eq.s32.totalorder %s27, 0
      %p158 = por %p156, %p157
      %p159 = scmp.ne.s32.totalorder %s147, %s148
      %p160 = scmp.eq.s32.totalorder %s28, 1
      %p161 = por %p159, %p160
      %p163 = scmp.ne.s32.totalorder %s148, %s162
      %p164 = scmp.eq.s32.totalorder %s28, 0
      %p165 = por %p163, %p164
      %s167 = sadd.s32 %s166, 1
      %p170 = scmp.eq.s32.totalorder %s22, 1
      %p171 = scmp.ne.s32.totalorder %s166, %s168
      %p172 = scmp.eq.s32.totalorder %s22, 0
      %p173 = por %p171, %p172
      %p174 = scmp.ne.s32.totalorder %s166, %s168
      %p175 = scmp.eq.s32.totalorder %s27, 1
      %p176 = por %p174, %p175
      %p177 = scmp.ne.s32.totalorder %s168, %s169
      %p178 = scmp.eq.s32.totalorder %s27, 0
      %p179 = por %p177, %p178
      %p180 = scmp.ne.s32.totalorder %s168, %s169
      %p181 = scmp.eq.s32.totalorder %s28, 1
      %p182 = por %p180, %p181
      %p184 = scmp.ne.s32.totalorder %s169, %s183
      %p185 = scmp.eq.s32.totalorder %s28, 0
      %p186 = por %p184, %p185
      %s188 = sadd.s32 %s187, 1
      %p191 = scmp.eq.s32.totalorder %s22, 1
      %p192 = scmp.ne.s32.totalorder %s187, %s189
      %p193 = scmp.eq.s32.totalorder %s22, 0
      %p194 = por %p192, %p193
      %p195 = scmp.ne.s32.totalorder %s187, %s189
      %p196 = scmp.eq.s32.totalorder %s27, 1
      %p197 = por %p195, %p196
      %p198 = scmp.ne.s32.totalorder %s189, %s190
      %p199 = scmp.eq.s32.totalorder %s27, 0
      %p200 = por %p198, %p199
      %p201 = scmp.ne.s32.totalorder %s189, %s190
      %p202 = scmp.eq.s32.totalorder %s28, 1
      %p203 = por %p201, %p202
      %p205 = scmp.ne.s32.totalorder %s190, %s204
      %p206 = scmp.eq.s32.totalorder %s28, 0
      %p207 = por %p205, %p206
      %s209 = sadd.s32 %s208, 1
      %p212 = scmp.eq.s32.totalorder %s22, 1
      %p213 = scmp.ne.s32.totalorder %s208, %s210
      %p214 = scmp.eq.s32.totalorder %s22, 0
      %p215 = por %p213, %p214
      %p216 = scmp.ne.s32.totalorder %s208, %s210
      %p217 = scmp.eq.s32.totalorder %s27, 1
      %p218 = por %p216, %p217
      %p219 = scmp.ne.s32.totalorder %s210, %s211
      %p220 = scmp.eq.s32.totalorder %s27, 0
      %p221 = por %p219, %p220
      %p222 = scmp.ne.s32.totalorder %s210, %s211
      %p223 = scmp.eq.s32.totalorder %s28, 1
      %p224 = por %p222, %p223
      %p226 = scmp.ne.s32.totalorder %s211, %s225
      %p227 = scmp.eq.s32.totalorder %s28, 0
      %p228 = por %p226, %p227
      %s230 = sadd.s32 %s229, 1
      %p233 = scmp.eq.s32.totalorder %s22, 1
      %p234 = scmp.ne.s32.totalorder %s229, %s231
      %p235 = scmp.eq.s32.totalorder %s22, 0
      %p236 = por %p234, %p235
      %p237 = scmp.ne.s32.totalorder %s229, %s231
      %p238 = scmp.eq.s32.totalorder %s27, 1
      %p239 = por %p237, %p238
      %p240 = scmp.ne.s32.totalorder %s231, %s232
      %p241 = scmp.eq.s32.totalorder %s27, 0
      %p242 = por %p240, %p241
      %p243 = scmp.ne.s32.totalorder %s231, %s232
      %p244 = scmp.eq.s32.totalorder %s28, 1
      %p245 = por %p243, %p244
      %p247 = scmp.ne.s32.totalorder %s232, %s246
      %p248 = scmp.eq.s32.totalorder %s28, 0
      %p249 = por %p247, %p248
      %s251 = sadd.s32 %s250, 1
      %p254 = scmp.eq.s32.totalorder %s22, 1
      %p255 = scmp.ne.s32.totalorder %s250, %s252
      %p256 = scmp.eq.s32.totalorder %s22, 0
      %p257 = por %p255, %p256
      %p258 = scmp.ne.s32.totalorder %s250, %s252
      %p259 = scmp.eq.s32.totalorder %s27, 1
      %p260 = por %p258, %p259
      %p261 = scmp.ne.s32.totalorder %s252, %s253
      %p262 = scmp.eq.s32.totalorder %s27, 0
      %p263 = por %p261, %p262
      %p264 = scmp.ne.s32.totalorder %s252, %s253
      %p265 = scmp.eq.s32.totalorder %s28, 1
      %p266 = por %p264, %p265
      %p268 = scmp.ne.s32.totalorder %s253, %s267
      %p269 = scmp.eq.s32.totalorder %s28, 0
      %p270 = por %p268, %p269
      %s272 = sadd.s32 %s271, 1
      %p275 = scmp.eq.s32.totalorder %s22, 1
      %p276 = scmp.ne.s32.totalorder %s271, %s273
      %p277 = scmp.eq.s32.totalorder %s22, 0
      %p278 = por %p276, %p277
      %p279 = scmp.ne.s32.totalorder %s271, %s273
      %p280 = scmp.eq.s32.totalorder %s27, 1
      %p281 = por %p279, %p280
      %p282 = scmp.ne.s32.totalorder %s273, %s274
      %p283 = scmp.eq.s32.totalorder %s27, 0
      %p284 = por %p282, %p283
      %p285 = scmp.ne.s32.totalorder %s273, %s274
      %p286 = scmp.eq.s32.totalorder %s28, 1
      %p287 = por %p285, %p286
      %p289 = scmp.ne.s32.totalorder %s274, %s288
      %p290 = scmp.eq.s32.totalorder %s28, 0
      %p291 = por %p289, %p290
      %s293 = sadd.s32 %s292, 1
      %p296 = scmp.eq.s32.totalorder %s22, 1
      %p297 = scmp.ne.s32.totalorder %s292, %s294
      %p298 = scmp.eq.s32.totalorder %s22, 0
      %p299 = por %p297, %p298
      %p300 = scmp.ne.s32.totalorder %s292, %s294
      %p301 = scmp.eq.s32.totalorder %s27, 1
      %p302 = por %p300, %p301
      %p303 = scmp.ne.s32.totalorder %s294, %s295
      %p304 = scmp.eq.s32.totalorder %s27, 0
      %p305 = por %p303, %p304
      %p306 = scmp.ne.s32.totalorder %s294, %s295
      %p307 = scmp.eq.s32.totalorder %s28, 1
      %p308 = por %p306, %p307
      %p310 = scmp.ne.s32.totalorder %s295, %s309
      %p311 = scmp.eq.s32.totalorder %s28, 0
      %p312 = por %p310, %p311
      %s313 = ssub.s32 %s22, %s29
      %p314 = scmp.eq.s32.totalorder %s313, 0
      %s316 = sadd.s32 %s315, 1
      %s317 = scalar_select %p314, %s315, %s316
      %p320 = pneg %p314
      %p321 = scmp.eq.s32.totalorder %s22, 1
      %p322 = por %p320, %p321
      %p323 = scmp.ne.s32.totalorder %s315, %s318
      %p324 = scmp.eq.s32.totalorder %s22, 0
      %p325 = por %p323, %p324
      %p326 = scmp.ne.s32.totalorder %s315, %s318
      %p327 = scmp.eq.s32.totalorder %s27, 1
      %p328 = por %p326, %p327
      %p329 = scmp.ne.s32.totalorder %s318, %s319
      %p330 = scmp.eq.s32.totalorder %s27, 0
      %p331 = por %p329, %p330
      %p332 = scmp.ne.s32.totalorder %s318, %s319
      %p333 = scmp.eq.s32.totalorder %s28, 1
      %p334 = por %p332, %p333
      %p336 = scmp.ne.s32.totalorder %s319, %s335
      %p337 = scmp.eq.s32.totalorder %s28, 0
      %p338 = por %p336, %p337
      %p339 = scmp.le.s32.totalorder 1, %s22
      %p340 = scmp.lt.s32.totalorder %s22, 3
      %p341 = pnand %p339, %p340
      %p342 = pneg %p341
      // Predicated region
      $region9: #{tpu_custom_call.1} parent=5 // pred_check
        _
      $region10: #{tpu_custom_call.1} parent=5 // pred_check_branch
        %344 = sbr.rel (%p341) target = $region12
      $region11: #{tpu_custom_call.1} parent=5 // pred_region
        %s345 = ssub.s32 %s22, 1
        // Predicated region
        $region13: #{tpu_custom_call.1} parent=11 // pred_check
          %p346 = pneg %p95
        $region14: #{tpu_custom_call.1} parent=11 // pred_check_branch
          %348 = sbr.rel (%p346) target = $region16
        $region15: #{tpu_custom_call.1} parent=11 // pred_region
          _
        $region16: #{tpu_custom_call.1} parent=11 // pred_fallthru
          _
        // Predicated region
        $region17: #{tpu_custom_call.1} parent=11 // pred_check
          %p349 = pneg %p116
        $region18: #{tpu_custom_call.1} parent=11 // pred_check_branch
          %351 = sbr.rel (%p349) target = $region20
        $region19: #{tpu_custom_call.1} parent=11 // pred_region
          _
        $region20: #{tpu_custom_call.1} parent=11 // pred_fallthru
          _
        // Predicated region
        $region21: #{tpu_custom_call.1} parent=11 // pred_check
          %p352 = pneg %p137
        $region22: #{tpu_custom_call.1} parent=11 // pred_check_branch
          %354 = sbr.rel (%p352) target = $region24
        $region23: #{tpu_custom_call.1} parent=11 // pred_region
          _
        $region24: #{tpu_custom_call.1} parent=11 // pred_fallthru
          _
        // Predicated region
        $region25: #{tpu_custom_call.1} parent=11 // pred_check
          %p355 = pneg %p158
        $region26: #{tpu_custom_call.1} parent=11 // pred_check_branch
          %357 = sbr.rel (%p355) target = $region28
        $region27: #{tpu_custom_call.1} parent=11 // pred_region
          _
        $region28: #{tpu_custom_call.1} parent=11 // pred_fallthru
          _
        // Predicated region
        $region29: #{tpu_custom_call.1} parent=11 // pred_check
          %p358 = pneg %p179
        $region30: #{tpu_custom_call.1} parent=11 // pred_check_branch
          %360 = sbr.rel (%p358) target = $region32
        $region31: #{tpu_custom_call.1} parent=11 // pred_region
          _
        $region32: #{tpu_custom_call.1} parent=11 // pred_fallthru
          _
        // Predicated region
        $region33: #{tpu_custom_call.1} parent=11 // pred_check
          %p361 = pneg %p200
        $region34: #{tpu_custom_call.1} parent=11 // pred_check_branch
          %363 = sbr.rel (%p361) target = $region36
        $region35: #{tpu_custom_call.1} parent=11 // pred_region
          _
        $region36: #{tpu_custom_call.1} parent=11 // pred_fallthru
          _
        // Predicated region
        $region37: #{tpu_custom_call.1} parent=11 // pred_check
          %p364 = pneg %p221
        $region38: #{tpu_custom_call.1} parent=11 // pred_check_branch
          %366 = sbr.rel (%p364) target = $region40
        $region39: #{tpu_custom_call.1} parent=11 // pred_region
          _
        $region40: #{tpu_custom_call.1} parent=11 // pred_fallthru
          _
        // Predicated region
        $region41: #{tpu_custom_call.1} parent=11 // pred_check
          %p367 = pneg %p242
        $region42: #{tpu_custom_call.1} parent=11 // pred_check_branch
          %369 = sbr.rel (%p367) target = $region44
        $region43: #{tpu_custom_call.1} parent=11 // pred_region
          _
        $region44: #{tpu_custom_call.1} parent=11 // pred_fallthru
          _
        // Predicated region
        $region45: #{tpu_custom_call.1} parent=11 // pred_check
          %p370 = pneg %p263
        $region46: #{tpu_custom_call.1} parent=11 // pred_check_branch
          %372 = sbr.rel (%p370) target = $region48
        $region47: #{tpu_custom_call.1} parent=11 // pred_region
          _
        $region48: #{tpu_custom_call.1} parent=11 // pred_fallthru
          _
        // Predicated region
        $region49: #{tpu_custom_call.1} parent=11 // pred_check
          %p373 = pneg %p284
        $region50: #{tpu_custom_call.1} parent=11 // pred_check_branch
          %375 = sbr.rel (%p373) target = $region52
        $region51: #{tpu_custom_call.1} parent=11 // pred_region
          _
        $region52: #{tpu_custom_call.1} parent=11 // pred_fallthru
          _
        // Predicated region
        $region53: #{tpu_custom_call.1} parent=11 // pred_check
          %p376 = pneg %p305
        $region54: #{tpu_custom_call.1} parent=11 // pred_check_branch
          %378 = sbr.rel (%p376) target = $region56
        $region55: #{tpu_custom_call.1} parent=11 // pred_region
          _
        $region56: #{tpu_custom_call.1} parent=11 // pred_fallthru
          _
      $region12: #{tpu_custom_call.1} parent=5 // pred_fallthru
        _
      %p379 = scmp.lt.s32.totalorder %s22, 2
      // Predicated region
      $region57: #{tpu_custom_call.1} parent=5 // pred_check
        %p380 = pneg %p379
      $region58: #{tpu_custom_call.1} parent=5 // pred_check_branch
        %382 = sbr.rel (%p380) target = $region60
      $region59: #{tpu_custom_call.1} parent=5 // pred_region
        // Predicated region
        $region61: #{tpu_custom_call.1} parent=59 // pred_check
          %p383 = pneg %p42
        $region62: #{tpu_custom_call.1} parent=59 // pred_check_branch
          %385 = sbr.rel (%p383) target = $region64
        $region63: #{tpu_custom_call.1} parent=59 // pred_region
          %p386 = scmp.lt.s32.totalorder %s22, 1
          %s387 = scalar_select %p386, %s22, 1
          %s388 = smul.addr %s387, 4
          %s389 = smul.addr %s388, 4
          %s390 = scalar_lea.vmem %s0, %s389
        $region64: #{tpu_custom_call.1} parent=59 // pred_fallthru
          _
        // Predicated region
        $region65: #{tpu_custom_call.1} parent=59 // pred_check
          %p391 = pneg %p68
        $region66: #{tpu_custom_call.1} parent=59 // pred_check_branch
          %393 = sbr.rel (%p391) target = $region68
        $region67: #{tpu_custom_call.1} parent=59 // pred_region
          %p394 = scmp.lt.s32.totalorder %s22, 1
          %s395 = scalar_select %p394, %s22, 1
          %s396 = smul.addr %s395, 8
          %s397 = scalar_lea.vmem %s1, %s396
        $region68: #{tpu_custom_call.1} parent=59 // pred_fallthru
          _
      $region60: #{tpu_custom_call.1} parent=5 // pred_fallthru
        _
      %p398 = scmp.le.s32.totalorder 1, %s22
      %p399 = scmp.lt.s32.totalorder %s22, 3
      %p400 = pnand %p398, %p399
      %p401 = pneg %p400
      // Predicated region
      $region69: #{tpu_custom_call.1} parent=5 // pred_check
        _
      $region70: #{tpu_custom_call.1} parent=5 // pred_check_branch
        %403 = sbr.rel (%p400) target = $region72
      $region71: #{tpu_custom_call.1} parent=5 // pred_region
        %s404 = ssub.s32 %s22, 1
        %p405 = scmp.lt.s32.totalorder %s27, 1
        %s406 = scalar_select %p405, %s27, 1
        %s407 = smul.addr %s406, 4
        %s408 = smul.addr %s407, 4
        %s409 = scalar_lea.vmem %s0, %s408
        %p410 = pneg %p48
        %p411 = pneg %p45
        %p412 = scmp.lt.s32.totalorder %s27, 1
        %s413 = scalar_select %p412, %s27, 1
        %s414 = smul.addr %s413, 8
        %s415 = scalar_lea.vmem %s1, %s414
        %p416 = pneg %p74
        %p417 = pneg %p71
        %p418 = pneg %p95
        %p419 = pneg %p92
        %p420 = pneg %p116
        %p421 = pneg %p113
        %p422 = pneg %p137
        %p423 = pneg %p134
        %p424 = pneg %p158
        %p425 = pneg %p155
        %p426 = pneg %p179
        %p427 = pneg %p176
        %p428 = pneg %p200
        %p429 = pneg %p197
        %p430 = pneg %p221
        %p431 = pneg %p218
        %p432 = pneg %p242
        %p433 = pneg %p239
        %p434 = pneg %p263
        %p435 = pneg %p260
        %p436 = pneg %p284
        %p437 = pneg %p281
        %p438 = pneg %p305
        %p439 = pneg %p302
        %p440 = pneg %p331
        %p441 = pneg %p328
        %s442 = sand.u32 %s318, 1
        %s443 = scalar_lea.sflag [#allocation4], %s442
        %s444 = sand.u32 %s318, 1
        %s445 = smul.addr %s444, 24
        %s446 = scalar_lea.vmem [#allocation3], %s445
        %p447 = scmp.lt.s32.totalorder %s27, 1
        %s448 = scalar_select %p447, %s27, 1
        %s449 = smul.addr %s448, 4
        %s450 = smul.addr %s449, 4
        %s451 = scalar_lea.vmem %s0, %s450
        %p452 = scmp.lt.s32.totalorder %s27, 1
        %s453 = scalar_select %p452, %s27, 1
        %s454 = smul.addr %s453, 8
        %s455 = scalar_lea.vmem %s1, %s454
        %v456 = vld [vmem:[%s2] sm:$0x7]
        %v457 = vld [vmem:[%s455] sm:$0xff]
        %v458 = vld [vmem:[%s3] sm:$0xff]
        %v459 = vld [vmem:[%s451] sm:$0xff]
        %v460 = vld [vmem:[%s451 + $0x8] sm:$0xf]
        %s461 = scalar_lea.vmem %s3, 8
        %v462 = vld [vmem:[%s461] sm:$0xff]
        %v463 = vld [vmem:[%s451] sm:$0xff]
        %v464 = vld [vmem:[%s451 + $0x8] sm:$0xff]
        %v467 = vcombine.high %v463, %v463
        %v468 = vcombine.high %v464, %v464
        %469 = vrot.lane.b32.xlu0 %v463, 127
        %v470 = vpop.permute.xlu0 %469
        %471 = vrot.lane.b32.xlu0 %v467, 127
        %v472 = vpop.permute.xlu0 %471
        %473 = vrot.lane.b32.xlu0 %v464, 127
        %v474 = vpop.permute.xlu0 %473
        %475 = vrot.lane.b32.xlu0 %v468, 127
        %v476 = vpop.permute.xlu0 %475
        %vm477 = vcmask 1039360
        %v478 = vsel %vm477, %v470, %v472
        %v479 = vsel %vm477, %v472, %v474
        %v480 = vsel %vm477, %v474, %v476
        %vm481 = vcmask 31744
        %v483 = vsel %vm481, %v462, 0
        %vm485 = vcmask 1043456
        %v486 = vsel %vm485, %v478, 0
        %v488 = vsel %vm485, %v479, 0
        %v490 = vsel %vm485, %v480, 0
        %492 = vmatprep.subr.mxu0 0.0
        %493 = vmatpush1.msra.mxu0 0.0
        %494 = vmatprep.subr.mxu0 0.0
        %495 = vmatpush1.msra.mxu0 0.0
        %496 = vmatprep.subr.mxu0 0.0
        %497 = vmatpush1.msra.mxu0 0.0
        %498 = vmatprep.subr.mxu0 0.0
        %499 = vmatpush1.msra.mxu0 0.0
        %500 = vmatprep.subr.mxu0 0.0
        %501 = vmatpush1.msra.mxu0 0.0
        %502 = vmatprep.subr.mxu0 0.0
        %503 = vmatpush1.msra.mxu0 0.0
        %504 = vmatprep.subr.mxu0 0.0
        %505 = vmatpush1.msra.mxu0 0.0
        %506 = vmatprep.subr.mxu0 0.0
        %507 = vmatpush1.msra.mxu0 0.0
        %508 = vmatprep.subr.mxu0 0.0
        %509 = vmatpush1.msra.mxu0 0.0
        %510 = vmatprep.subr.mxu0 0.0
        %511 = vmatpush1.msra.mxu0 0.0
        %512 = vmatprep.subr.mxu0 0.0
        %513 = vmatpush1.msra.mxu0 0.0
        %514 = vmatprep.subr.mxu0 0.0
        %515 = vmatpush1.msra.mxu0 0.0
        %516 = vmatprep.subr.mxu0 0.0
        %517 = vmatpush1.msra.mxu0 0.0
        %518 = vmatprep.subr.mxu0 0.0
        %519 = vmatpush1.msra.mxu0 0.0
        %520 = vmatprep.subr.mxu0 0.0
        %521 = vmatpush1.msra.mxu0 0.0
        %522 = vmatprep.subr.mxu0 %v488
        %523 = vmatpush1.msra.mxu0 %v486
        %524 = vmatprep.subr.mxu0 0.0
        %525 = vmatpush2.msra.mxu0 0.0
        %526 = vmatprep.subr.mxu0 0.0
        %527 = vmatpush2.msra.mxu0 0.0
        %528 = vmatprep.subr.mxu0 0.0
        %529 = vmatpush2.msra.mxu0 0.0
        %530 = vmatprep.subr.mxu0 0.0
        %531 = vmatpush2.msra.mxu0 0.0
        %532 = vmatprep.subr.mxu0 0.0
        %533 = vmatpush2.msra.mxu0 0.0
        %534 = vmatprep.subr.mxu0 0.0
        %535 = vmatpush2.msra.mxu0 0.0
        %536 = vmatprep.subr.mxu0 0.0
        %537 = vmatpush2.msra.mxu0 0.0
        %538 = vmatprep.subr.mxu0 0.0
        %539 = vmatpush2.msra.mxu0 0.0
        %540 = vmatprep.subr.mxu0 0.0
        %541 = vmatpush2.msra.mxu0 0.0
        %542 = vmatprep.subr.mxu0 0.0
        %543 = vmatpush2.msra.mxu0 0.0
        %544 = vmatprep.subr.mxu0 0.0
        %545 = vmatpush2.msra.mxu0 0.0
        %546 = vmatprep.subr.mxu0 0.0
        %547 = vmatpush2.msra.mxu0 0.0
        %548 = vmatprep.subr.mxu0 0.0
        %549 = vmatpush2.msra.mxu0 0.0
        %550 = vmatprep.subr.mxu0 0.0
        %551 = vmatpush2.msra.mxu0 0.0
        %552 = vmatprep.subr.mxu0 0.0
        %553 = vmatpush2.msra.mxu0 0.0
        %554 = vmatprep.subr.mxu0 0.0
        %555 = vmatpush2.msra.mxu0 0.0
        %556 = vmatprep.mubr.f32.mxu0 0.0
        %557 = vmatmul.mubr.f32.gmra.mxu0 %v483
        %v558 = vpop.f32.mrf.mxu0
        %v559 = vadd.f32 0.0, %v558
        %v560 = vpop.f32.mrf.mxu0
        %v561 = vadd.f32 0.0, %v560
        %562 = vdwg.mxu0
        %563 = vmatprep.subr.mxu0 0.0
        %564 = vmatpush1.msra.mxu0 0.0
        %565 = vmatprep.subr.mxu0 0.0
        %566 = vmatpush1.msra.mxu0 0.0
        %567 = vmatprep.subr.mxu0 0.0
        %568 = vmatpush1.msra.mxu0 0.0
        %569 = vmatprep.subr.mxu0 0.0
        %570 = vmatpush1.msra.mxu0 0.0
        %571 = vmatprep.subr.mxu0 0.0
        %572 = vmatpush1.msra.mxu0 0.0
        %573 = vmatprep.subr.mxu0 0.0
        %574 = vmatpush1.msra.mxu0 0.0
        %575 = vmatprep.subr.mxu0 0.0
        %576 = vmatpush1.msra.mxu0 0.0
        %577 = vmatprep.subr.mxu0 0.0
        %578 = vmatpush1.msra.mxu0 0.0
        %579 = vmatprep.subr.mxu0 0.0
        %580 = vmatpush1.msra.mxu0 0.0
        %581 = vmatprep.subr.mxu0 0.0
        %582 = vmatpush1.msra.mxu0 0.0
        %583 = vmatprep.subr.mxu0 0.0
        %584 = vmatpush1.msra.mxu0 0.0
        %585 = vmatprep.subr.mxu0 0.0
        %586 = vmatpush1.msra.mxu0 0.0
        %587 = vmatprep.subr.mxu0 0.0
        %588 = vmatpush1.msra.mxu0 0.0
        %589 = vmatprep.subr.mxu0 0.0
        %590 = vmatpush1.msra.mxu0 0.0
        %591 = vmatprep.subr.mxu0 0.0
        %592 = vmatpush1.msra.mxu0 0.0
        %593 = vmatprep.subr.mxu0 0.0
        %594 = vmatpush1.msra.mxu0 %v490
        %595 = vmatprep.subr.mxu0 0.0
        %596 = vmatpush2.msra.mxu0 0.0
        %597 = vmatprep.subr.mxu0 0.0
        %598 = vmatpush2.msra.mxu0 0.0
        %599 = vmatprep.subr.mxu0 0.0
        %600 = vmatpush2.msra.mxu0 0.0
        %601 = vmatprep.subr.mxu0 0.0
        %602 = vmatpush2.msra.mxu0 0.0
        %603 = vmatprep.subr.mxu0 0.0
        %604 = vmatpush2.msra.mxu0 0.0
        %605 = vmatprep.subr.mxu0 0.0
        %606 = vmatpush2.msra.mxu0 0.0
        %607 = vmatprep.subr.mxu0 0.0
        %608 = vmatpush2.msra.mxu0 0.0
        %609 = vmatprep.subr.mxu0 0.0
        %610 = vmatpush2.msra.mxu0 0.0
        %611 = vmatprep.subr.mxu0 0.0
        %612 = vmatpush2.msra.mxu0 0.0
        %613 = vmatprep.subr.mxu0 0.0
        %614 = vmatpush2.msra.mxu0 0.0
        %615 = vmatprep.subr.mxu0 0.0
        %616 = vmatpush2.msra.mxu0 0.0
        %617 = vmatprep.subr.mxu0 0.0
        %618 = vmatpush2.msra.mxu0 0.0
        %619 = vmatprep.subr.mxu0 0.0
        %620 = vmatpush2.msra.mxu0 0.0
        %621 = vmatprep.subr.mxu0 0.0
        %622 = vmatpush2.msra.mxu0 0.0
        %623 = vmatprep.subr.mxu0 0.0
        %624 = vmatpush2.msra.mxu0 0.0
        %625 = vmatprep.subr.mxu0 0.0
        %626 = vmatpush2.msra.mxu0 0.0
        %627 = vmatprep.mubr.f32.mxu0 0.0
        %628 = vmatmul.mubr.f32.gmra.mxu0 %v483
        %v629 = vpop.f32.mrf.mxu0
        %v630 = vadd.f32 0.0, %v629
        %v631 = vpop.f32.mrf.mxu0
        %632 = vdwg.mxu0
        %v635 = vcombine.high %v459, %v459
        %v637 = vsel %vm481, %v458, 0
        %v639 = vsel %vm485, %v459, 0
        %v641 = vsel %vm485, %v635, 0
        %v643 = vsel %vm485, %v460, 0
        %645 = vmatprep.subr.mxu0 0.0
        %646 = vmatpush1.msra.mxu0 0.0
        %647 = vmatprep.subr.mxu0 0.0
        %648 = vmatpush1.msra.mxu0 0.0
        %649 = vmatprep.subr.mxu0 0.0
        %650 = vmatpush1.msra.mxu0 0.0
        %651 = vmatprep.subr.mxu0 0.0
        %652 = vmatpush1.msra.mxu0 0.0
        %653 = vmatprep.subr.mxu0 0.0
        %654 = vmatpush1.msra.mxu0 0.0
        %655 = vmatprep.subr.mxu0 0.0
        %656 = vmatpush1.msra.mxu0 0.0
        %657 = vmatprep.subr.mxu0 0.0
        %658 = vmatpush1.msra.mxu0 0.0
        %659 = vmatprep.subr.mxu0 0.0
        %660 = vmatpush1.msra.mxu0 0.0
        %661 = vmatprep.subr.mxu0 0.0
        %662 = vmatpush1.msra.mxu0 0.0
        %663 = vmatprep.subr.mxu0 0.0
        %664 = vmatpush1.msra.mxu0 0.0
        %665 = vmatprep.subr.mxu0 0.0
        %666 = vmatpush1.msra.mxu0 0.0
        %667 = vmatprep.subr.mxu0 0.0
        %668 = vmatpush1.msra.mxu0 0.0
        %669 = vmatprep.subr.mxu0 0.0
        %670 = vmatpush1.msra.mxu0 0.0
        %671 = vmatprep.subr.mxu0 0.0
        %672 = vmatpush1.msra.mxu0 0.0
        %673 = vmatprep.subr.mxu0 0.0
        %674 = vmatpush1.msra.mxu0 0.0
        %675 = vmatprep.subr.mxu0 %v641
        %676 = vmatpush1.msra.mxu0 %v639
        %677 = vmatprep.subr.mxu0 0.0
        %678 = vmatpush2.msra.mxu0 0.0
        %679 = vmatprep.subr.mxu0 0.0
        %680 = vmatpush2.msra.mxu0 0.0
        %681 = vmatprep.subr.mxu0 0.0
        %682 = vmatpush2.msra.mxu0 0.0
        %683 = vmatprep.subr.mxu0 0.0
        %684 = vmatpush2.msra.mxu0 0.0
        %685 = vmatprep.subr.mxu0 0.0
        %686 = vmatpush2.msra.mxu0 0.0
        %687 = vmatprep.subr.mxu0 0.0
        %688 = vmatpush2.msra.mxu0 0.0
        %689 = vmatprep.subr.mxu0 0.0
        %690 = vmatpush2.msra.mxu0 0.0
        %691 = vmatprep.subr.mxu0 0.0
        %692 = vmatpush2.msra.mxu0 0.0
        %693 = vmatprep.subr.mxu0 0.0
        %694 = vmatpush2.msra.mxu0 0.0
        %695 = vmatprep.subr.mxu0 0.0
        %696 = vmatpush2.msra.mxu0 0.0
        %697 = vmatprep.subr.mxu0 0.0
        %698 = vmatpush2.msra.mxu0 0.0
        %699 = vmatprep.subr.mxu0 0.0
        %700 = vmatpush2.msra.mxu0 0.0
        %701 = vmatprep.subr.mxu0 0.0
        %702 = vmatpush2.msra.mxu0 0.0
        %703 = vmatprep.subr.mxu0 0.0
        %704 = vmatpush2.msra.mxu0 0.0
        %705 = vmatprep.subr.mxu0 0.0
        %706 = vmatpush2.msra.mxu0 0.0
        %707 = vmatprep.subr.mxu0 0.0
        %708 = vmatpush2.msra.mxu0 0.0
        %709 = vmatprep.mubr.f32.mxu0 0.0
        %710 = vmatmul.mubr.f32.gmra.mxu0 %v637
        %v711 = vpop.f32.mrf.mxu0
        %v712 = vadd.f32 %v559, %v711
        %v713 = vpop.f32.mrf.mxu0
        %v714 = vadd.f32 %v561, %v713
        %715 = vdwg.mxu0
        %716 = vmatprep.subr.mxu0 0.0
        %717 = vmatpush1.msra.mxu0 0.0
        %718 = vmatprep.subr.mxu0 0.0
        %719 = vmatpush1.msra.mxu0 0.0
        %720 = vmatprep.subr.mxu0 0.0
        %721 = vmatpush1.msra.mxu0 0.0
        %722 = vmatprep.subr.mxu0 0.0
        %723 = vmatpush1.msra.mxu0 0.0
        %724 = vmatprep.subr.mxu0 0.0
        %725 = vmatpush1.msra.mxu0 0.0
        %726 = vmatprep.subr.mxu0 0.0
        %727 = vmatpush1.msra.mxu0 0.0
        %728 = vmatprep.subr.mxu0 0.0
        %729 = vmatpush1.msra.mxu0 0.0
        %730 = vmatprep.subr.mxu0 0.0
        %731 = vmatpush1.msra.mxu0 0.0
        %732 = vmatprep.subr.mxu0 0.0
        %733 = vmatpush1.msra.mxu0 0.0
        %734 = vmatprep.subr.mxu0 0.0
        %735 = vmatpush1.msra.mxu0 0.0
        %736 = vmatprep.subr.mxu0 0.0
        %737 = vmatpush1.msra.mxu0 0.0
        %738 = vmatprep.subr.mxu0 0.0
        %739 = vmatpush1.msra.mxu0 0.0
        %740 = vmatprep.subr.mxu0 0.0
        %741 = vmatpush1.msra.mxu0 0.0
        %742 = vmatprep.subr.mxu0 0.0
        %743 = vmatpush1.msra.mxu0 0.0
        %744 = vmatprep.subr.mxu0 0.0
        %745 = vmatpush1.msra.mxu0 0.0
        %746 = vmatprep.subr.mxu0 0.0
        %747 = vmatpush1.msra.mxu0 %v643
        %748 = vmatprep.subr.mxu0 0.0
        %749 = vmatpush2.msra.mxu0 0.0
        %750 = vmatprep.subr.mxu0 0.0
        %751 = vmatpush2.msra.mxu0 0.0
        %752 = vmatprep.subr.mxu0 0.0
        %753 = vmatpush2.msra.mxu0 0.0
        %754 = vmatprep.subr.mxu0 0.0
        %755 = vmatpush2.msra.mxu0 0.0
        %756 = vmatprep.subr.mxu0 0.0
        %757 = vmatpush2.msra.mxu0 0.0
        %758 = vmatprep.subr.mxu0 0.0
        %759 = vmatpush2.msra.mxu0 0.0
        %760 = vmatprep.subr.mxu0 0.0
        %761 = vmatpush2.msra.mxu0 0.0
        %762 = vmatprep.subr.mxu0 0.0
        %763 = vmatpush2.msra.mxu0 0.0
        %764 = vmatprep.subr.mxu0 0.0
        %765 = vmatpush2.msra.mxu0 0.0
        %766 = vmatprep.subr.mxu0 0.0
        %767 = vmatpush2.msra.mxu0 0.0
        %768 = vmatprep.subr.mxu0 0.0
        %769 = vmatpush2.msra.mxu0 0.0
        %770 = vmatprep.subr.mxu0 0.0
        %771 = vmatpush2.msra.mxu0 0.0
        %772 = vmatprep.subr.mxu0 0.0
        %773 = vmatpush2.msra.mxu0 0.0
        %774 = vmatprep.subr.mxu0 0.0
        %775 = vmatpush2.msra.mxu0 0.0
        %776 = vmatprep.subr.mxu0 0.0
        %777 = vmatpush2.msra.mxu0 0.0
        %778 = vmatprep.subr.mxu0 0.0
        %779 = vmatpush2.msra.mxu0 0.0
        %780 = vmatprep.mubr.f32.mxu0 0.0
        %781 = vmatmul.mubr.f32.gmra.mxu0 %v637
        %v782 = vpop.f32.mrf.mxu0
        %v783 = vadd.f32 %v630, %v782
        %v784 = vpop.f32.mrf.mxu0
        %785 = vdwg.mxu0
        %s786 = scalar_lea.vmem %s3, 16
        %v787 = vld [vmem:[%s786] sm:$0xff]
        %v788 = vld [vmem:[%s451] sm:$0xff]
        %v789 = vld [vmem:[%s451 + $0x8] sm:$0xff]
        %v792 = vcombine.high %v788, %v788
        %v793 = vcombine.high %v789, %v789
        %794 = vrot.lane.b32.xlu0 %v788, 126
        %v795 = vpop.permute.xlu0 %794
        %796 = vrot.lane.b32.xlu0 %v792, 126
        %v797 = vpop.permute.xlu0 %796
        %798 = vrot.lane.b32.xlu0 %v789, 126
        %v799 = vpop.permute.xlu0 %798
        %800 = vrot.lane.b32.xlu0 %v793, 126
        %v801 = vpop.permute.xlu0 %800
        %vm802 = vcmask 1031168
        %v803 = vsel %vm802, %v795, %v797
        %v804 = vsel %vm802, %v797, %v799
        %v805 = vsel %vm802, %v799, %v801
        %v807 = vsel %vm481, %v787, 0
        %v809 = vsel %vm485, %v803, 0
        %v811 = vsel %vm485, %v804, 0
        %v813 = vsel %vm485, %v805, 0
        %815 = vmatprep.subr.mxu0 0.0
        %816 = vmatpush1.msra.mxu0 0.0
        %817 = vmatprep.subr.mxu0 0.0
        %818 = vmatpush1.msra.mxu0 0.0
        %819 = vmatprep.subr.mxu0 0.0
        %820 = vmatpush1.msra.mxu0 0.0
        %821 = vmatprep.subr.mxu0 0.0
        %822 = vmatpush1.msra.mxu0 0.0
        %823 = vmatprep.subr.mxu0 0.0
        %824 = vmatpush1.msra.mxu0 0.0
        %825 = vmatprep.subr.mxu0 0.0
        %826 = vmatpush1.msra.mxu0 0.0
        %827 = vmatprep.subr.mxu0 0.0
        %828 = vmatpush1.msra.mxu0 0.0
        %829 = vmatprep.subr.mxu0 0.0
        %830 = vmatpush1.msra.mxu0 0.0
        %831 = vmatprep.subr.mxu0 0.0
        %832 = vmatpush1.msra.mxu0 0.0
        %833 = vmatprep.subr.mxu0 0.0
        %834 = vmatpush1.msra.mxu0 0.0
        %835 = vmatprep.subr.mxu0 0.0
        %836 = vmatpush1.msra.mxu0 0.0
        %837 = vmatprep.subr.mxu0 0.0
        %838 = vmatpush1.msra.mxu0 0.0
        %839 = vmatprep.subr.mxu0 0.0
        %840 = vmatpush1.msra.mxu0 0.0
        %841 = vmatprep.subr.mxu0 0.0
        %842 = vmatpush1.msra.mxu0 0.0
        %843 = vmatprep.subr.mxu0 0.0
        %844 = vmatpush1.msra.mxu0 0.0
        %845 = vmatprep.subr.mxu0 %v811
        %846 = vmatpush1.msra.mxu0 %v809
        %847 = vmatprep.subr.mxu0 0.0
        %848 = vmatpush2.msra.mxu0 0.0
        %849 = vmatprep.subr.mxu0 0.0
        %850 = vmatpush2.msra.mxu0 0.0
        %851 = vmatprep.subr.mxu0 0.0
        %852 = vmatpush2.msra.mxu0 0.0
        %853 = vmatprep.subr.mxu0 0.0
        %854 = vmatpush2.msra.mxu0 0.0
        %855 = vmatprep.subr.mxu0 0.0
        %856 = vmatpush2.msra.mxu0 0.0
        %857 = vmatprep.subr.mxu0 0.0
        %858 = vmatpush2.msra.mxu0 0.0
        %859 = vmatprep.subr.mxu0 0.0
        %860 = vmatpush2.msra.mxu0 0.0
        %861 = vmatprep.subr.mxu0 0.0
        %862 = vmatpush2.msra.mxu0 0.0
        %863 = vmatprep.subr.mxu0 0.0
        %864 = vmatpush2.msra.mxu0 0.0
        %865 = vmatprep.subr.mxu0 0.0
        %866 = vmatpush2.msra.mxu0 0.0
        %867 = vmatprep.subr.mxu0 0.0
        %868 = vmatpush2.msra.mxu0 0.0
        %869 = vmatprep.subr.mxu0 0.0
        %870 = vmatpush2.msra.mxu0 0.0
        %871 = vmatprep.subr.mxu0 0.0
        %872 = vmatpush2.msra.mxu0 0.0
        %873 = vmatprep.subr.mxu0 0.0
        %874 = vmatpush2.msra.mxu0 0.0
        %875 = vmatprep.subr.mxu0 0.0
        %876 = vmatpush2.msra.mxu0 0.0
        %877 = vmatprep.subr.mxu0 0.0
        %878 = vmatpush2.msra.mxu0 0.0
        %879 = vmatprep.mubr.f32.mxu0 0.0
        %880 = vmatmul.mubr.f32.gmra.mxu0 %v807
        %v881 = vpop.f32.mrf.mxu0
        %v882 = vadd.f32 0.0, %v881
        %v883 = vpop.f32.mrf.mxu0
        %v884 = vadd.f32 0.0, %v883
        %885 = vdwg.mxu0
        %886 = vmatprep.subr.mxu0 0.0
        %887 = vmatpush1.msra.mxu0 0.0
        %888 = vmatprep.subr.mxu0 0.0
        %889 = vmatpush1.msra.mxu0 0.0
        %890 = vmatprep.subr.mxu0 0.0
        %891 = vmatpush1.msra.mxu0 0.0
        %892 = vmatprep.subr.mxu0 0.0
        %893 = vmatpush1.msra.mxu0 0.0
        %894 = vmatprep.subr.mxu0 0.0
        %895 = vmatpush1.msra.mxu0 0.0
        %896 = vmatprep.subr.mxu0 0.0
        %897 = vmatpush1.msra.mxu0 0.0
        %898 = vmatprep.subr.mxu0 0.0
        %899 = vmatpush1.msra.mxu0 0.0
        %900 = vmatprep.subr.mxu0 0.0
        %901 = vmatpush1.msra.mxu0 0.0
        %902 = vmatprep.subr.mxu0 0.0
        %903 = vmatpush1.msra.mxu0 0.0
        %904 = vmatprep.subr.mxu0 0.0
        %905 = vmatpush1.msra.mxu0 0.0
        %906 = vmatprep.subr.mxu0 0.0
        %907 = vmatpush1.msra.mxu0 0.0
        %908 = vmatprep.subr.mxu0 0.0
        %909 = vmatpush1.msra.mxu0 0.0
        %910 = vmatprep.subr.mxu0 0.0
        %911 = vmatpush1.msra.mxu0 0.0
        %912 = vmatprep.subr.mxu0 0.0
        %913 = vmatpush1.msra.mxu0 0.0
        %914 = vmatprep.subr.mxu0 0.0
        %915 = vmatpush1.msra.mxu0 0.0
        %916 = vmatprep.subr.mxu0 0.0
        %917 = vmatpush1.msra.mxu0 %v813
        %918 = vmatprep.subr.mxu0 0.0
        %919 = vmatpush2.msra.mxu0 0.0
        %920 = vmatprep.subr.mxu0 0.0
        %921 = vmatpush2.msra.mxu0 0.0
        %922 = vmatprep.subr.mxu0 0.0
        %923 = vmatpush2.msra.mxu0 0.0
        %924 = vmatprep.subr.mxu0 0.0
        %925 = vmatpush2.msra.mxu0 0.0
        %926 = vmatprep.subr.mxu0 0.0
        %927 = vmatpush2.msra.mxu0 0.0
        %928 = vmatprep.subr.mxu0 0.0
        %929 = vmatpush2.msra.mxu0 0.0
        %930 = vmatprep.subr.mxu0 0.0
        %931 = vmatpush2.msra.mxu0 0.0
        %932 = vmatprep.subr.mxu0 0.0
        %933 = vmatpush2.msra.mxu0 0.0
        %934 = vmatprep.subr.mxu0 0.0
        %935 = vmatpush2.msra.mxu0 0.0
        %936 = vmatprep.subr.mxu0 0.0
        %937 = vmatpush2.msra.mxu0 0.0
        %938 = vmatprep.subr.mxu0 0.0
        %939 = vmatpush2.msra.mxu0 0.0
        %940 = vmatprep.subr.mxu0 0.0
        %941 = vmatpush2.msra.mxu0 0.0
        %942 = vmatprep.subr.mxu0 0.0
        %943 = vmatpush2.msra.mxu0 0.0
        %944 = vmatprep.subr.mxu0 0.0
        %945 = vmatpush2.msra.mxu0 0.0
        %946 = vmatprep.subr.mxu0 0.0
        %947 = vmatpush2.msra.mxu0 0.0
        %948 = vmatprep.subr.mxu0 0.0
        %949 = vmatpush2.msra.mxu0 0.0
        %950 = vmatprep.mubr.f32.mxu0 0.0
        %951 = vmatmul.mubr.f32.gmra.mxu0 %v807
        %v952 = vpop.f32.mrf.mxu0
        %v953 = vadd.f32 0.0, %v952
        %v954 = vpop.f32.mrf.mxu0
        %955 = vdwg.mxu0
        %v956 = vadd.f32 %v712, %v882
        %v957 = vadd.f32 %v714, %v884
        %v958 = vadd.f32 %v783, %v953
        %s959 = scalar_lea.vmem %s3, 24
        %v960 = vld [vmem:[%s959] sm:$0xff]
        %v961 = vld [vmem:[%s451] sm:$0xff]
        %v962 = vld [vmem:[%s451 + $0x8] sm:$0xff]
        %v965 = vcombine.high %v961, %v961
        %v966 = vcombine.high %v962, %v962
        %967 = vrot.lane.b32.xlu0 %v961, 110
        %v968 = vpop.permute.xlu0 %967
        %969 = vrot.lane.b32.xlu0 %v965, 110
        %v970 = vpop.permute.xlu0 %969
        %971 = vrot.lane.b32.xlu0 %v962, 110
        %v972 = vpop.permute.xlu0 %971
        %973 = vrot.lane.b32.xlu0 %v966, 110
        %v974 = vpop.permute.xlu0 %973
        %vm975 = vcmask 900096
        %v976 = vsel %vm975, %v968, %v970
        %v977 = vsel %vm975, %v970, %v972
        %v978 = vsel %vm975, %v972, %v974
        %v980 = vsel %vm481, %v960, 0
        %v982 = vsel %vm485, %v976, 0
        %v984 = vsel %vm485, %v977, 0
        %v986 = vsel %vm485, %v978, 0
        %988 = vmatprep.subr.mxu0 0.0
        %989 = vmatpush1.msra.mxu0 0.0
        %990 = vmatprep.subr.mxu0 0.0
        %991 = vmatpush1.msra.mxu0 0.0
        %992 = vmatprep.subr.mxu0 0.0
        %993 = vmatpush1.msra.mxu0 0.0
        %994 = vmatprep.subr.mxu0 0.0
        %995 = vmatpush1.msra.mxu0 0.0
        %996 = vmatprep.subr.mxu0 0.0
        %997 = vmatpush1.msra.mxu0 0.0
        %998 = vmatprep.subr.mxu0 0.0
        %999 = vmatpush1.msra.mxu0 0.0
        %1000 = vmatprep.subr.mxu0 0.0
        %1001 = vmatpush1.msra.mxu0 0.0
        %1002 = vmatprep.subr.mxu0 0.0
        %1003 = vmatpush1.msra.mxu0 0.0
        %1004 = vmatprep.subr.mxu0 0.0
        %1005 = vmatpush1.msra.mxu0 0.0
        %1006 = vmatprep.subr.mxu0 0.0
        %1007 = vmatpush1.msra.mxu0 0.0
        %1008 = vmatprep.subr.mxu0 0.0
        %1009 = vmatpush1.msra.mxu0 0.0
        %1010 = vmatprep.subr.mxu0 0.0
        %1011 = vmatpush1.msra.mxu0 0.0
        %1012 = vmatprep.subr.mxu0 0.0
        %1013 = vmatpush1.msra.mxu0 0.0
        %1014 = vmatprep.subr.mxu0 0.0
        %1015 = vmatpush1.msra.mxu0 0.0
        %1016 = vmatprep.subr.mxu0 0.0
        %1017 = vmatpush1.msra.mxu0 0.0
        %1018 = vmatprep.subr.mxu0 %v984
        %1019 = vmatpush1.msra.mxu0 %v982
        %1020 = vmatprep.subr.mxu0 0.0
        %1021 = vmatpush2.msra.mxu0 0.0
        %1022 = vmatprep.subr.mxu0 0.0
        %1023 = vmatpush2.msra.mxu0 0.0
        %1024 = vmatprep.subr.mxu0 0.0
        %1025 = vmatpush2.msra.mxu0 0.0
        %1026 = vmatprep.subr.mxu0 0.0
        %1027 = vmatpush2.msra.mxu0 0.0
        %1028 = vmatprep.subr.mxu0 0.0
        %1029 = vmatpush2.msra.mxu0 0.0
        %1030 = vmatprep.subr.mxu0 0.0
        %1031 = vmatpush2.msra.mxu0 0.0
        %1032 = vmatprep.subr.mxu0 0.0
        %1033 = vmatpush2.msra.mxu0 0.0
        %1034 = vmatprep.subr.mxu0 0.0
        %1035 = vmatpush2.msra.mxu0 0.0
        %1036 = vmatprep.subr.mxu0 0.0
        %1037 = vmatpush2.msra.mxu0 0.0
        %1038 = vmatprep.subr.mxu0 0.0
        %1039 = vmatpush2.msra.mxu0 0.0
        %1040 = vmatprep.subr.mxu0 0.0
        %1041 = vmatpush2.msra.mxu0 0.0
        %1042 = vmatprep.subr.mxu0 0.0
        %1043 = vmatpush2.msra.mxu0 0.0
        %1044 = vmatprep.subr.mxu0 0.0
        %1045 = vmatpush2.msra.mxu0 0.0
        %1046 = vmatprep.subr.mxu0 0.0
        %1047 = vmatpush2.msra.mxu0 0.0
        %1048 = vmatprep.subr.mxu0 0.0
        %1049 = vmatpush2.msra.mxu0 0.0
        %1050 = vmatprep.subr.mxu0 0.0
        %1051 = vmatpush2.msra.mxu0 0.0
        %1052 = vmatprep.mubr.f32.mxu0 0.0
        %1053 = vmatmul.mubr.f32.gmra.mxu0 %v980
        %v1054 = vpop.f32.mrf.mxu0
        %v1055 = vadd.f32 0.0, %v1054
        %v1056 = vpop.f32.mrf.mxu0
        %v1057 = vadd.f32 0.0, %v1056
        %1058 = vdwg.mxu0
        %1059 = vmatprep.subr.mxu0 0.0
        %1060 = vmatpush1.msra.mxu0 0.0
        %1061 = vmatprep.subr.mxu0 0.0
        %1062 = vmatpush1.msra.mxu0 0.0
        %1063 = vmatprep.subr.mxu0 0.0
        %1064 = vmatpush1.msra.mxu0 0.0
        %1065 = vmatprep.subr.mxu0 0.0
        %1066 = vmatpush1.msra.mxu0 0.0
        %1067 = vmatprep.subr.mxu0 0.0
        %1068 = vmatpush1.msra.mxu0 0.0
        %1069 = vmatprep.subr.mxu0 0.0
        %1070 = vmatpush1.msra.mxu0 0.0
        %1071 = vmatprep.subr.mxu0 0.0
        %1072 = vmatpush1.msra.mxu0 0.0
        %1073 = vmatprep.subr.mxu0 0.0
        %1074 = vmatpush1.msra.mxu0 0.0
        %1075 = vmatprep.subr.mxu0 0.0
        %1076 = vmatpush1.msra.mxu0 0.0
        %1077 = vmatprep.subr.mxu0 0.0
        %1078 = vmatpush1.msra.mxu0 0.0
        %1079 = vmatprep.subr.mxu0 0.0
        %1080 = vmatpush1.msra.mxu0 0.0
        %1081 = vmatprep.subr.mxu0 0.0
        %1082 = vmatpush1.msra.mxu0 0.0
        %1083 = vmatprep.subr.mxu0 0.0
        %1084 = vmatpush1.msra.mxu0 0.0
        %1085 = vmatprep.subr.mxu0 0.0
        %1086 = vmatpush1.msra.mxu0 0.0
        %1087 = vmatprep.subr.mxu0 0.0
        %1088 = vmatpush1.msra.mxu0 0.0
        %1089 = vmatprep.subr.mxu0 0.0
        %1090 = vmatpush1.msra.mxu0 %v986
        %1091 = vmatprep.subr.mxu0 0.0
        %1092 = vmatpush2.msra.mxu0 0.0
        %1093 = vmatprep.subr.mxu0 0.0
        %1094 = vmatpush2.msra.mxu0 0.0
        %1095 = vmatprep.subr.mxu0 0.0
        %1096 = vmatpush2.msra.mxu0 0.0
        %1097 = vmatprep.subr.mxu0 0.0
        %1098 = vmatpush2.msra.mxu0 0.0
        %1099 = vmatprep.subr.mxu0 0.0
        %1100 = vmatpush2.msra.mxu0 0.0
        %1101 = vmatprep.subr.mxu0 0.0
        %1102 = vmatpush2.msra.mxu0 0.0
        %1103 = vmatprep.subr.mxu0 0.0
        %1104 = vmatpush2.msra.mxu0 0.0
        %1105 = vmatprep.subr.mxu0 0.0
        %1106 = vmatpush2.msra.mxu0 0.0
        %1107 = vmatprep.subr.mxu0 0.0
        %1108 = vmatpush2.msra.mxu0 0.0
        %1109 = vmatprep.subr.mxu0 0.0
        %1110 = vmatpush2.msra.mxu0 0.0
        %1111 = vmatprep.subr.mxu0 0.0
        %1112 = vmatpush2.msra.mxu0 0.0
        %1113 = vmatprep.subr.mxu0 0.0
        %1114 = vmatpush2.msra.mxu0 0.0
        %1115 = vmatprep.subr.mxu0 0.0
        %1116 = vmatpush2.msra.mxu0 0.0
        %1117 = vmatprep.subr.mxu0 0.0
        %1118 = vmatpush2.msra.mxu0 0.0
        %1119 = vmatprep.subr.mxu0 0.0
        %1120 = vmatpush2.msra.mxu0 0.0
        %1121 = vmatprep.subr.mxu0 0.0
        %1122 = vmatpush2.msra.mxu0 0.0
        %1123 = vmatprep.mubr.f32.mxu0 0.0
        %1124 = vmatmul.mubr.f32.gmra.mxu0 %v980
        %v1125 = vpop.f32.mrf.mxu0
        %v1126 = vadd.f32 0.0, %v1125
        %v1127 = vpop.f32.mrf.mxu0
        %1128 = vdwg.mxu0
        %v1129 = vadd.f32 %v956, %v1055
        %v1130 = vadd.f32 %v957, %v1057
        %v1131 = vadd.f32 %v958, %v1126
        %s1132 = scalar_lea.vmem %s3, 32
        %v1133 = vld [vmem:[%s1132] sm:$0xff]
        %v1134 = vld [vmem:[%s451] sm:$0xff]
        %v1135 = vld [vmem:[%s451 + $0x8] sm:$0xff]
        %v1138 = vcombine.high %v1134, %v1134
        %v1139 = vcombine.high %v1135, %v1135
        %1140 = vrot.lane.b32.xlu0 %v1134, 109
        %v1141 = vpop.permute.xlu0 %1140
        %1142 = vrot.lane.b32.xlu0 %v1138, 109
        %v1143 = vpop.permute.xlu0 %1142
        %1144 = vrot.lane.b32.xlu0 %v1135, 109
        %v1145 = vpop.permute.xlu0 %1144
        %1146 = vrot.lane.b32.xlu0 %v1139, 109
        %v1147 = vpop.permute.xlu0 %1146
        %vm1148 = vcmask 891904
        %v1149 = vsel %vm1148, %v1141, %v1143
        %v1150 = vsel %vm1148, %v1143, %v1145
        %v1151 = vsel %vm1148, %v1145, %v1147
        %v1153 = vsel %vm481, %v1133, 0
        %v1155 = vsel %vm485, %v1149, 0
        %v1157 = vsel %vm485, %v1150, 0
        %v1159 = vsel %vm485, %v1151, 0
        %1161 = vmatprep.subr.mxu0 0.0
        %1162 = vmatpush1.msra.mxu0 0.0
        %1163 = vmatprep.subr.mxu0 0.0
        %1164 = vmatpush1.msra.mxu0 0.0
        %1165 = vmatprep.subr.mxu0 0.0
        %1166 = vmatpush1.msra.mxu0 0.0
        %1167 = vmatprep.subr.mxu0 0.0
        %1168 = vmatpush1.msra.mxu0 0.0
        %1169 = vmatprep.subr.mxu0 0.0
        %1170 = vmatpush1.msra.mxu0 0.0
        %1171 = vmatprep.subr.mxu0 0.0
        %1172 = vmatpush1.msra.mxu0 0.0
        %1173 = vmatprep.subr.mxu0 0.0
        %1174 = vmatpush1.msra.mxu0 0.0
        %1175 = vmatprep.subr.mxu0 0.0
        %1176 = vmatpush1.msra.mxu0 0.0
        %1177 = vmatprep.subr.mxu0 0.0
        %1178 = vmatpush1.msra.mxu0 0.0
        %1179 = vmatprep.subr.mxu0 0.0
        %1180 = vmatpush1.msra.mxu0 0.0
        %1181 = vmatprep.subr.mxu0 0.0
        %1182 = vmatpush1.msra.mxu0 0.0
        %1183 = vmatprep.subr.mxu0 0.0
        %1184 = vmatpush1.msra.mxu0 0.0
        %1185 = vmatprep.subr.mxu0 0.0
        %1186 = vmatpush1.msra.mxu0 0.0
        %1187 = vmatprep.subr.mxu0 0.0
        %1188 = vmatpush1.msra.mxu0 0.0
        %1189 = vmatprep.subr.mxu0 0.0
        %1190 = vmatpush1.msra.mxu0 0.0
        %1191 = vmatprep.subr.mxu0 %v1157
        %1192 = vmatpush1.msra.mxu0 %v1155
        %1193 = vmatprep.subr.mxu0 0.0
        %1194 = vmatpush2.msra.mxu0 0.0
        %1195 = vmatprep.subr.mxu0 0.0
        %1196 = vmatpush2.msra.mxu0 0.0
        %1197 = vmatprep.subr.mxu0 0.0
        %1198 = vmatpush2.msra.mxu0 0.0
        %1199 = vmatprep.subr.mxu0 0.0
        %1200 = vmatpush2.msra.mxu0 0.0
        %1201 = vmatprep.subr.mxu0 0.0
        %1202 = vmatpush2.msra.mxu0 0.0
        %1203 = vmatprep.subr.mxu0 0.0
        %1204 = vmatpush2.msra.mxu0 0.0
        %1205 = vmatprep.subr.mxu0 0.0
        %1206 = vmatpush2.msra.mxu0 0.0
        %1207 = vmatprep.subr.mxu0 0.0
        %1208 = vmatpush2.msra.mxu0 0.0
        %1209 = vmatprep.subr.mxu0 0.0
        %1210 = vmatpush2.msra.mxu0 0.0
        %1211 = vmatprep.subr.mxu0 0.0
        %1212 = vmatpush2.msra.mxu0 0.0
        %1213 = vmatprep.subr.mxu0 0.0
        %1214 = vmatpush2.msra.mxu0 0.0
        %1215 = vmatprep.subr.mxu0 0.0
        %1216 = vmatpush2.msra.mxu0 0.0
        %1217 = vmatprep.subr.mxu0 0.0
        %1218 = vmatpush2.msra.mxu0 0.0
        %1219 = vmatprep.subr.mxu0 0.0
        %1220 = vmatpush2.msra.mxu0 0.0
        %1221 = vmatprep.subr.mxu0 0.0
        %1222 = vmatpush2.msra.mxu0 0.0
        %1223 = vmatprep.subr.mxu0 0.0
        %1224 = vmatpush2.msra.mxu0 0.0
        %1225 = vmatprep.mubr.f32.mxu0 0.0
        %1226 = vmatmul.mubr.f32.gmra.mxu0 %v1153
        %v1227 = vpop.f32.mrf.mxu0
        %v1228 = vadd.f32 0.0, %v1227
        %v1229 = vpop.f32.mrf.mxu0
        %v1230 = vadd.f32 0.0, %v1229
        %1231 = vdwg.mxu0
        %1232 = vmatprep.subr.mxu0 0.0
        %1233 = vmatpush1.msra.mxu0 0.0
        %1234 = vmatprep.subr.mxu0 0.0
        %1235 = vmatpush1.msra.mxu0 0.0
        %1236 = vmatprep.subr.mxu0 0.0
        %1237 = vmatpush1.msra.mxu0 0.0
        %1238 = vmatprep.subr.mxu0 0.0
        %1239 = vmatpush1.msra.mxu0 0.0
        %1240 = vmatprep.subr.mxu0 0.0
        %1241 = vmatpush1.msra.mxu0 0.0
        %1242 = vmatprep.subr.mxu0 0.0
        %1243 = vmatpush1.msra.mxu0 0.0
        %1244 = vmatprep.subr.mxu0 0.0
        %1245 = vmatpush1.msra.mxu0 0.0
        %1246 = vmatprep.subr.mxu0 0.0
        %1247 = vmatpush1.msra.mxu0 0.0
        %1248 = vmatprep.subr.mxu0 0.0
        %1249 = vmatpush1.msra.mxu0 0.0
        %1250 = vmatprep.subr.mxu0 0.0
        %1251 = vmatpush1.msra.mxu0 0.0
        %1252 = vmatprep.subr.mxu0 0.0
        %1253 = vmatpush1.msra.mxu0 0.0
        %1254 = vmatprep.subr.mxu0 0.0
        %1255 = vmatpush1.msra.mxu0 0.0
        %1256 = vmatprep.subr.mxu0 0.0
        %1257 = vmatpush1.msra.mxu0 0.0
        %1258 = vmatprep.subr.mxu0 0.0
        %1259 = vmatpush1.msra.mxu0 0.0
        %1260 = vmatprep.subr.mxu0 0.0
        %1261 = vmatpush1.msra.mxu0 0.0
        %1262 = vmatprep.subr.mxu0 0.0
        %1263 = vmatpush1.msra.mxu0 %v1159
        %1264 = vmatprep.subr.mxu0 0.0
        %1265 = vmatpush2.msra.mxu0 0.0
        %1266 = vmatprep.subr.mxu0 0.0
        %1267 = vmatpush2.msra.mxu0 0.0
        %1268 = vmatprep.subr.mxu0 0.0
        %1269 = vmatpush2.msra.mxu0 0.0
        %1270 = vmatprep.subr.mxu0 0.0
        %1271 = vmatpush2.msra.mxu0 0.0
        %1272 = vmatprep.subr.mxu0 0.0
        %1273 = vmatpush2.msra.mxu0 0.0
        %1274 = vmatprep.subr.mxu0 0.0
        %1275 = vmatpush2.msra.mxu0 0.0
        %1276 = vmatprep.subr.mxu0 0.0
        %1277 = vmatpush2.msra.mxu0 0.0
        %1278 = vmatprep.subr.mxu0 0.0
        %1279 = vmatpush2.msra.mxu0 0.0
        %1280 = vmatprep.subr.mxu0 0.0
        %1281 = vmatpush2.msra.mxu0 0.0
        %1282 = vmatprep.subr.mxu0 0.0
        %1283 = vmatpush2.msra.mxu0 0.0
        %1284 = vmatprep.subr.mxu0 0.0
        %1285 = vmatpush2.msra.mxu0 0.0
        %1286 = vmatprep.subr.mxu0 0.0
        %1287 = vmatpush2.msra.mxu0 0.0
        %1288 = vmatprep.subr.mxu0 0.0
        %1289 = vmatpush2.msra.mxu0 0.0
        %1290 = vmatprep.subr.mxu0 0.0
        %1291 = vmatpush2.msra.mxu0 0.0
        %1292 = vmatprep.subr.mxu0 0.0
        %1293 = vmatpush2.msra.mxu0 0.0
        %1294 = vmatprep.subr.mxu0 0.0
        %1295 = vmatpush2.msra.mxu0 0.0
        %1296 = vmatprep.mubr.f32.mxu0 0.0
        %1297 = vmatmul.mubr.f32.gmra.mxu0 %v1153
        %v1298 = vpop.f32.mrf.mxu0
        %v1299 = vadd.f32 0.0, %v1298
        %v1300 = vpop.f32.mrf.mxu0
        %1301 = vdwg.mxu0
        %v1302 = vadd.f32 %v1129, %v1228
        %v1303 = vadd.f32 %v1130, %v1230
        %v1304 = vadd.f32 %v1131, %v1299
        %s1305 = scalar_lea.vmem %s3, 40
        %v1306 = vld [vmem:[%s1305] sm:$0xff]
        %v1307 = vld [vmem:[%s451] sm:$0xff]
        %v1308 = vld [vmem:[%s451 + $0x8] sm:$0xff]
        %v1311 = vcombine.high %v1307, %v1307
        %v1312 = vcombine.high %v1308, %v1308
        %1313 = vrot.lane.b32.xlu0 %v1307, 108
        %v1314 = vpop.permute.xlu0 %1313
        %1315 = vrot.lane.b32.xlu0 %v1311, 108
        %v1316 = vpop.permute.xlu0 %1315
        %1317 = vrot.lane.b32.xlu0 %v1308, 108
        %v1318 = vpop.permute.xlu0 %1317
        %1319 = vrot.lane.b32.xlu0 %v1312, 108
        %v1320 = vpop.permute.xlu0 %1319
        %vm1321 = vcmask 883712
        %v1322 = vsel %vm1321, %v1314, %v1316
        %v1323 = vsel %vm1321, %v1316, %v1318
        %v1324 = vsel %vm1321, %v1318, %v1320
        %v1326 = vsel %vm481, %v1306, 0
        %v1328 = vsel %vm485, %v1322, 0
        %v1330 = vsel %vm485, %v1323, 0
        %v1332 = vsel %vm485, %v1324, 0
        %1334 = vmatprep.subr.mxu0 0.0
        %1335 = vmatpush1.msra.mxu0 0.0
        %1336 = vmatprep.subr.mxu0 0.0
        %1337 = vmatpush1.msra.mxu0 0.0
        %1338 = vmatprep.subr.mxu0 0.0
        %1339 = vmatpush1.msra.mxu0 0.0
        %1340 = vmatprep.subr.mxu0 0.0
        %1341 = vmatpush1.msra.mxu0 0.0
        %1342 = vmatprep.subr.mxu0 0.0
        %1343 = vmatpush1.msra.mxu0 0.0
        %1344 = vmatprep.subr.mxu0 0.0
        %1345 = vmatpush1.msra.mxu0 0.0
        %1346 = vmatprep.subr.mxu0 0.0
        %1347 = vmatpush1.msra.mxu0 0.0
        %1348 = vmatprep.subr.mxu0 0.0
        %1349 = vmatpush1.msra.mxu0 0.0
        %1350 = vmatprep.subr.mxu0 0.0
        %1351 = vmatpush1.msra.mxu0 0.0
        %1352 = vmatprep.subr.mxu0 0.0
        %1353 = vmatpush1.msra.mxu0 0.0
        %1354 = vmatprep.subr.mxu0 0.0
        %1355 = vmatpush1.msra.mxu0 0.0
        %1356 = vmatprep.subr.mxu0 0.0
        %1357 = vmatpush1.msra.mxu0 0.0
        %1358 = vmatprep.subr.mxu0 0.0
        %1359 = vmatpush1.msra.mxu0 0.0
        %1360 = vmatprep.subr.mxu0 0.0
        %1361 = vmatpush1.msra.mxu0 0.0
        %1362 = vmatprep.subr.mxu0 0.0
        %1363 = vmatpush1.msra.mxu0 0.0
        %1364 = vmatprep.subr.mxu0 %v1330
        %1365 = vmatpush1.msra.mxu0 %v1328
        %1366 = vmatprep.subr.mxu0 0.0
        %1367 = vmatpush2.msra.mxu0 0.0
        %1368 = vmatprep.subr.mxu0 0.0
        %1369 = vmatpush2.msra.mxu0 0.0
        %1370 = vmatprep.subr.mxu0 0.0
        %1371 = vmatpush2.msra.mxu0 0.0
        %1372 = vmatprep.subr.mxu0 0.0
        %1373 = vmatpush2.msra.mxu0 0.0
        %1374 = vmatprep.subr.mxu0 0.0
        %1375 = vmatpush2.msra.mxu0 0.0
        %1376 = vmatprep.subr.mxu0 0.0
        %1377 = vmatpush2.msra.mxu0 0.0
        %1378 = vmatprep.subr.mxu0 0.0
        %1379 = vmatpush2.msra.mxu0 0.0
        %1380 = vmatprep.subr.mxu0 0.0
        %1381 = vmatpush2.msra.mxu0 0.0
        %1382 = vmatprep.subr.mxu0 0.0
        %1383 = vmatpush2.msra.mxu0 0.0
        %1384 = vmatprep.subr.mxu0 0.0
        %1385 = vmatpush2.msra.mxu0 0.0
        %1386 = vmatprep.subr.mxu0 0.0
        %1387 = vmatpush2.msra.mxu0 0.0
        %1388 = vmatprep.subr.mxu0 0.0
        %1389 = vmatpush2.msra.mxu0 0.0
        %1390 = vmatprep.subr.mxu0 0.0
        %1391 = vmatpush2.msra.mxu0 0.0
        %1392 = vmatprep.subr.mxu0 0.0
        %1393 = vmatpush2.msra.mxu0 0.0
        %1394 = vmatprep.subr.mxu0 0.0
        %1395 = vmatpush2.msra.mxu0 0.0
        %1396 = vmatprep.subr.mxu0 0.0
        %1397 = vmatpush2.msra.mxu0 0.0
        %1398 = vmatprep.mubr.f32.mxu0 0.0
        %1399 = vmatmul.mubr.f32.gmra.mxu0 %v1326
        %v1400 = vpop.f32.mrf.mxu0
        %v1401 = vadd.f32 0.0, %v1400
        %v1402 = vpop.f32.mrf.mxu0
        %v1403 = vadd.f32 0.0, %v1402
        %1404 = vdwg.mxu0
        %1405 = vmatprep.subr.mxu0 0.0
        %1406 = vmatpush1.msra.mxu0 0.0
        %1407 = vmatprep.subr.mxu0 0.0
        %1408 = vmatpush1.msra.mxu0 0.0
        %1409 = vmatprep.subr.mxu0 0.0
        %1410 = vmatpush1.msra.mxu0 0.0
        %1411 = vmatprep.subr.mxu0 0.0
        %1412 = vmatpush1.msra.mxu0 0.0
        %1413 = vmatprep.subr.mxu0 0.0
        %1414 = vmatpush1.msra.mxu0 0.0
        %1415 = vmatprep.subr.mxu0 0.0
        %1416 = vmatpush1.msra.mxu0 0.0
        %1417 = vmatprep.subr.mxu0 0.0
        %1418 = vmatpush1.msra.mxu0 0.0
        %1419 = vmatprep.subr.mxu0 0.0
        %1420 = vmatpush1.msra.mxu0 0.0
        %1421 = vmatprep.subr.mxu0 0.0
        %1422 = vmatpush1.msra.mxu0 0.0
        %1423 = vmatprep.subr.mxu0 0.0
        %1424 = vmatpush1.msra.mxu0 0.0
        %1425 = vmatprep.subr.mxu0 0.0
        %1426 = vmatpush1.msra.mxu0 0.0
        %1427 = vmatprep.subr.mxu0 0.0
        %1428 = vmatpush1.msra.mxu0 0.0
        %1429 = vmatprep.subr.mxu0 0.0
        %1430 = vmatpush1.msra.mxu0 0.0
        %1431 = vmatprep.subr.mxu0 0.0
        %1432 = vmatpush1.msra.mxu0 0.0
        %1433 = vmatprep.subr.mxu0 0.0
        %1434 = vmatpush1.msra.mxu0 0.0
        %1435 = vmatprep.subr.mxu0 0.0
        %1436 = vmatpush1.msra.mxu0 %v1332
        %1437 = vmatprep.subr.mxu0 0.0
        %1438 = vmatpush2.msra.mxu0 0.0
        %1439 = vmatprep.subr.mxu0 0.0
        %1440 = vmatpush2.msra.mxu0 0.0
        %1441 = vmatprep.subr.mxu0 0.0
        %1442 = vmatpush2.msra.mxu0 0.0
        %1443 = vmatprep.subr.mxu0 0.0
        %1444 = vmatpush2.msra.mxu0 0.0
        %1445 = vmatprep.subr.mxu0 0.0
        %1446 = vmatpush2.msra.mxu0 0.0
        %1447 = vmatprep.subr.mxu0 0.0
        %1448 = vmatpush2.msra.mxu0 0.0
        %1449 = vmatprep.subr.mxu0 0.0
        %1450 = vmatpush2.msra.mxu0 0.0
        %1451 = vmatprep.subr.mxu0 0.0
        %1452 = vmatpush2.msra.mxu0 0.0
        %1453 = vmatprep.subr.mxu0 0.0
        %1454 = vmatpush2.msra.mxu0 0.0
        %1455 = vmatprep.subr.mxu0 0.0
        %1456 = vmatpush2.msra.mxu0 0.0
        %1457 = vmatprep.subr.mxu0 0.0
        %1458 = vmatpush2.msra.mxu0 0.0
        %1459 = vmatprep.subr.mxu0 0.0
        %1460 = vmatpush2.msra.mxu0 0.0
        %1461 = vmatprep.subr.mxu0 0.0
        %1462 = vmatpush2.msra.mxu0 0.0
        %1463 = vmatprep.subr.mxu0 0.0
        %1464 = vmatpush2.msra.mxu0 0.0
        %1465 = vmatprep.subr.mxu0 0.0
        %1466 = vmatpush2.msra.mxu0 0.0
        %1467 = vmatprep.subr.mxu0 0.0
        %1468 = vmatpush2.msra.mxu0 0.0
        %1469 = vmatprep.mubr.f32.mxu0 0.0
        %1470 = vmatmul.mubr.f32.gmra.mxu0 %v1326
        %v1471 = vpop.f32.mrf.mxu0
        %v1472 = vadd.f32 0.0, %v1471
        %v1473 = vpop.f32.mrf.mxu0
        %1474 = vdwg.mxu0
        %v1475 = vadd.f32 %v1302, %v1401
        %v1476 = vadd.f32 %v1303, %v1403
        %v1477 = vadd.f32 %v1304, %v1472
        %s1478 = scalar_lea.vmem %s3, 48
        %v1479 = vld [vmem:[%s1478] sm:$0xff]
        %v1480 = vld [vmem:[%s451] sm:$0xff]
        %v1481 = vld [vmem:[%s451 + $0x8] sm:$0xff]
        %v1484 = vcombine.high %v1480, %v1480
        %v1485 = vcombine.high %v1481, %v1481
        %1486 = vrot.lane.b32.xlu0 %v1480, 92
        %v1487 = vpop.permute.xlu0 %1486
        %1488 = vrot.lane.b32.xlu0 %v1484, 92
        %v1489 = vpop.permute.xlu0 %1488
        %1490 = vrot.lane.b32.xlu0 %v1481, 92
        %v1491 = vpop.permute.xlu0 %1490
        %1492 = vrot.lane.b32.xlu0 %v1485, 92
        %v1493 = vpop.permute.xlu0 %1492
        %vm1494 = vcmask 752640
        %v1495 = vsel %vm1494, %v1487, %v1489
        %v1496 = vsel %vm1494, %v1489, %v1491
        %v1497 = vsel %vm1494, %v1491, %v1493
        %v1499 = vsel %vm481, %v1479, 0
        %v1501 = vsel %vm485, %v1495, 0
        %v1503 = vsel %vm485, %v1496, 0
        %v1505 = vsel %vm485, %v1497, 0
        %1507 = vmatprep.subr.mxu0 0.0
        %1508 = vmatpush1.msra.mxu0 0.0
        %1509 = vmatprep.subr.mxu0 0.0
        %1510 = vmatpush1.msra.mxu0 0.0
        %1511 = vmatprep.subr.mxu0 0.0
        %1512 = vmatpush1.msra.mxu0 0.0
        %1513 = vmatprep.subr.mxu0 0.0
        %1514 = vmatpush1.msra.mxu0 0.0
        %1515 = vmatprep.subr.mxu0 0.0
        %1516 = vmatpush1.msra.mxu0 0.0
        %1517 = vmatprep.subr.mxu0 0.0
        %1518 = vmatpush1.msra.mxu0 0.0
        %1519 = vmatprep.subr.mxu0 0.0
        %1520 = vmatpush1.msra.mxu0 0.0
        %1521 = vmatprep.subr.mxu0 0.0
        %1522 = vmatpush1.msra.mxu0 0.0
        %1523 = vmatprep.subr.mxu0 0.0
        %1524 = vmatpush1.msra.mxu0 0.0
        %1525 = vmatprep.subr.mxu0 0.0
        %1526 = vmatpush1.msra.mxu0 0.0
        %1527 = vmatprep.subr.mxu0 0.0
        %1528 = vmatpush1.msra.mxu0 0.0
        %1529 = vmatprep.subr.mxu0 0.0
        %1530 = vmatpush1.msra.mxu0 0.0
        %1531 = vmatprep.subr.mxu0 0.0
        %1532 = vmatpush1.msra.mxu0 0.0
        %1533 = vmatprep.subr.mxu0 0.0
        %1534 = vmatpush1.msra.mxu0 0.0
        %1535 = vmatprep.subr.mxu0 0.0
        %1536 = vmatpush1.msra.mxu0 0.0
        %1537 = vmatprep.subr.mxu0 %v1503
        %1538 = vmatpush1.msra.mxu0 %v1501
        %1539 = vmatprep.subr.mxu0 0.0
        %1540 = vmatpush2.msra.mxu0 0.0
        %1541 = vmatprep.subr.mxu0 0.0
        %1542 = vmatpush2.msra.mxu0 0.0
        %1543 = vmatprep.subr.mxu0 0.0
        %1544 = vmatpush2.msra.mxu0 0.0
        %1545 = vmatprep.subr.mxu0 0.0
        %1546 = vmatpush2.msra.mxu0 0.0
        %1547 = vmatprep.subr.mxu0 0.0
        %1548 = vmatpush2.msra.mxu0 0.0
        %1549 = vmatprep.subr.mxu0 0.0
        %1550 = vmatpush2.msra.mxu0 0.0
        %1551 = vmatprep.subr.mxu0 0.0
        %1552 = vmatpush2.msra.mxu0 0.0
        %1553 = vmatprep.subr.mxu0 0.0
        %1554 = vmatpush2.msra.mxu0 0.0
        %1555 = vmatprep.subr.mxu0 0.0
        %1556 = vmatpush2.msra.mxu0 0.0
        %1557 = vmatprep.subr.mxu0 0.0
        %1558 = vmatpush2.msra.mxu0 0.0
        %1559 = vmatprep.subr.mxu0 0.0
        %1560 = vmatpush2.msra.mxu0 0.0
        %1561 = vmatprep.subr.mxu0 0.0
        %1562 = vmatpush2.msra.mxu0 0.0
        %1563 = vmatprep.subr.mxu0 0.0
        %1564 = vmatpush2.msra.mxu0 0.0
        %1565 = vmatprep.subr.mxu0 0.0
        %1566 = vmatpush2.msra.mxu0 0.0
        %1567 = vmatprep.subr.mxu0 0.0
        %1568 = vmatpush2.msra.mxu0 0.0
        %1569 = vmatprep.subr.mxu0 0.0
        %1570 = vmatpush2.msra.mxu0 0.0
        %1571 = vmatprep.mubr.f32.mxu0 0.0
        %1572 = vmatmul.mubr.f32.gmra.mxu0 %v1499
        %v1573 = vpop.f32.mrf.mxu0
        %v1574 = vadd.f32 0.0, %v1573
        %v1575 = vpop.f32.mrf.mxu0
        %v1576 = vadd.f32 0.0, %v1575
        %1577 = vdwg.mxu0
        %1578 = vmatprep.subr.mxu0 0.0
        %1579 = vmatpush1.msra.mxu0 0.0
        %1580 = vmatprep.subr.mxu0 0.0
        %1581 = vmatpush1.msra.mxu0 0.0
        %1582 = vmatprep.subr.mxu0 0.0
        %1583 = vmatpush1.msra.mxu0 0.0
        %1584 = vmatprep.subr.mxu0 0.0
        %1585 = vmatpush1.msra.mxu0 0.0
        %1586 = vmatprep.subr.mxu0 0.0
        %1587 = vmatpush1.msra.mxu0 0.0
        %1588 = vmatprep.subr.mxu0 0.0
        %1589 = vmatpush1.msra.mxu0 0.0
        %1590 = vmatprep.subr.mxu0 0.0
        %1591 = vmatpush1.msra.mxu0 0.0
        %1592 = vmatprep.subr.mxu0 0.0
        %1593 = vmatpush1.msra.mxu0 0.0
        %1594 = vmatprep.subr.mxu0 0.0
        %1595 = vmatpush1.msra.mxu0 0.0
        %1596 = vmatprep.subr.mxu0 0.0
        %1597 = vmatpush1.msra.mxu0 0.0
        %1598 = vmatprep.subr.mxu0 0.0
        %1599 = vmatpush1.msra.mxu0 0.0
        %1600 = vmatprep.subr.mxu0 0.0
        %1601 = vmatpush1.msra.mxu0 0.0
        %1602 = vmatprep.subr.mxu0 0.0
        %1603 = vmatpush1.msra.mxu0 0.0
        %1604 = vmatprep.subr.mxu0 0.0
        %1605 = vmatpush1.msra.mxu0 0.0
        %1606 = vmatprep.subr.mxu0 0.0
        %1607 = vmatpush1.msra.mxu0 0.0
        %1608 = vmatprep.subr.mxu0 0.0
        %1609 = vmatpush1.msra.mxu0 %v1505
        %1610 = vmatprep.subr.mxu0 0.0
        %1611 = vmatpush2.msra.mxu0 0.0
        %1612 = vmatprep.subr.mxu0 0.0
        %1613 = vmatpush2.msra.mxu0 0.0
        %1614 = vmatprep.subr.mxu0 0.0
        %1615 = vmatpush2.msra.mxu0 0.0
        %1616 = vmatprep.subr.mxu0 0.0
        %1617 = vmatpush2.msra.mxu0 0.0
        %1618 = vmatprep.subr.mxu0 0.0
        %1619 = vmatpush2.msra.mxu0 0.0
        %1620 = vmatprep.subr.mxu0 0.0
        %1621 = vmatpush2.msra.mxu0 0.0
        %1622 = vmatprep.subr.mxu0 0.0
        %1623 = vmatpush2.msra.mxu0 0.0
        %1624 = vmatprep.subr.mxu0 0.0
        %1625 = vmatpush2.msra.mxu0 0.0
        %1626 = vmatprep.subr.mxu0 0.0
        %1627 = vmatpush2.msra.mxu0 0.0
        %1628 = vmatprep.subr.mxu0 0.0
        %1629 = vmatpush2.msra.mxu0 0.0
        %1630 = vmatprep.subr.mxu0 0.0
        %1631 = vmatpush2.msra.mxu0 0.0
        %1632 = vmatprep.subr.mxu0 0.0
        %1633 = vmatpush2.msra.mxu0 0.0
        %1634 = vmatprep.subr.mxu0 0.0
        %1635 = vmatpush2.msra.mxu0 0.0
        %1636 = vmatprep.subr.mxu0 0.0
        %1637 = vmatpush2.msra.mxu0 0.0
        %1638 = vmatprep.subr.mxu0 0.0
        %1639 = vmatpush2.msra.mxu0 0.0
        %1640 = vmatprep.subr.mxu0 0.0
        %1641 = vmatpush2.msra.mxu0 0.0
        %1642 = vmatprep.mubr.f32.mxu0 0.0
        %1643 = vmatmul.mubr.f32.gmra.mxu0 %v1499
        %v1644 = vpop.f32.mrf.mxu0
        %v1645 = vadd.f32 0.0, %v1644
        %v1646 = vpop.f32.mrf.mxu0
        %1647 = vdwg.mxu0
        %v1648 = vadd.f32 %v1475, %v1574
        %v1649 = vadd.f32 %v1476, %v1576
        %v1650 = vadd.f32 %v1477, %v1645
        %s1651 = scalar_lea.vmem %s3, 56
        %v1652 = vld [vmem:[%s1651] sm:$0xff]
        %v1653 = vld [vmem:[%s451] sm:$0xff]
        %v1654 = vld [vmem:[%s451 + $0x8] sm:$0xff]
        %v1657 = vcombine.high %v1653, %v1653
        %v1658 = vcombine.high %v1654, %v1654
        %1659 = vrot.lane.b32.xlu0 %v1653, 91
        %v1660 = vpop.permute.xlu0 %1659
        %1661 = vrot.lane.b32.xlu0 %v1657, 91
        %v1662 = vpop.permute.xlu0 %1661
        %1663 = vrot.lane.b32.xlu0 %v1654, 91
        %v1664 = vpop.permute.xlu0 %1663
        %1665 = vrot.lane.b32.xlu0 %v1658, 91
        %v1666 = vpop.permute.xlu0 %1665
        %vm1667 = vcmask 744448
        %v1668 = vsel %vm1667, %v1660, %v1662
        %v1669 = vsel %vm1667, %v1662, %v1664
        %v1670 = vsel %vm1667, %v1664, %v1666
        %v1672 = vsel %vm481, %v1652, 0
        %v1674 = vsel %vm485, %v1668, 0
        %v1676 = vsel %vm485, %v1669, 0
        %v1678 = vsel %vm485, %v1670, 0
        %1680 = vmatprep.subr.mxu0 0.0
        %1681 = vmatpush1.msra.mxu0 0.0
        %1682 = vmatprep.subr.mxu0 0.0
        %1683 = vmatpush1.msra.mxu0 0.0
        %1684 = vmatprep.subr.mxu0 0.0
        %1685 = vmatpush1.msra.mxu0 0.0
        %1686 = vmatprep.subr.mxu0 0.0
        %1687 = vmatpush1.msra.mxu0 0.0
        %1688 = vmatprep.subr.mxu0 0.0
        %1689 = vmatpush1.msra.mxu0 0.0
        %1690 = vmatprep.subr.mxu0 0.0
        %1691 = vmatpush1.msra.mxu0 0.0
        %1692 = vmatprep.subr.mxu0 0.0
        %1693 = vmatpush1.msra.mxu0 0.0
        %1694 = vmatprep.subr.mxu0 0.0
        %1695 = vmatpush1.msra.mxu0 0.0
        %1696 = vmatprep.subr.mxu0 0.0
        %1697 = vmatpush1.msra.mxu0 0.0
        %1698 = vmatprep.subr.mxu0 0.0
        %1699 = vmatpush1.msra.mxu0 0.0
        %1700 = vmatprep.subr.mxu0 0.0
        %1701 = vmatpush1.msra.mxu0 0.0
        %1702 = vmatprep.subr.mxu0 0.0
        %1703 = vmatpush1.msra.mxu0 0.0
        %1704 = vmatprep.subr.mxu0 0.0
        %1705 = vmatpush1.msra.mxu0 0.0
        %1706 = vmatprep.subr.mxu0 0.0
        %1707 = vmatpush1.msra.mxu0 0.0
        %1708 = vmatprep.subr.mxu0 0.0
        %1709 = vmatpush1.msra.mxu0 0.0
        %1710 = vmatprep.subr.mxu0 %v1676
        %1711 = vmatpush1.msra.mxu0 %v1674
        %1712 = vmatprep.subr.mxu0 0.0
        %1713 = vmatpush2.msra.mxu0 0.0
        %1714 = vmatprep.subr.mxu0 0.0
        %1715 = vmatpush2.msra.mxu0 0.0
        %1716 = vmatprep.subr.mxu0 0.0
        %1717 = vmatpush2.msra.mxu0 0.0
        %1718 = vmatprep.subr.mxu0 0.0
        %1719 = vmatpush2.msra.mxu0 0.0
        %1720 = vmatprep.subr.mxu0 0.0
        %1721 = vmatpush2.msra.mxu0 0.0
        %1722 = vmatprep.subr.mxu0 0.0
        %1723 = vmatpush2.msra.mxu0 0.0
        %1724 = vmatprep.subr.mxu0 0.0
        %1725 = vmatpush2.msra.mxu0 0.0
        %1726 = vmatprep.subr.mxu0 0.0
        %1727 = vmatpush2.msra.mxu0 0.0
        %1728 = vmatprep.subr.mxu0 0.0
        %1729 = vmatpush2.msra.mxu0 0.0
        %1730 = vmatprep.subr.mxu0 0.0
        %1731 = vmatpush2.msra.mxu0 0.0
        %1732 = vmatprep.subr.mxu0 0.0
        %1733 = vmatpush2.msra.mxu0 0.0
        %1734 = vmatprep.subr.mxu0 0.0
        %1735 = vmatpush2.msra.mxu0 0.0
        %1736 = vmatprep.subr.mxu0 0.0
        %1737 = vmatpush2.msra.mxu0 0.0
        %1738 = vmatprep.subr.mxu0 0.0
        %1739 = vmatpush2.msra.mxu0 0.0
        %1740 = vmatprep.subr.mxu0 0.0
        %1741 = vmatpush2.msra.mxu0 0.0
        %1742 = vmatprep.subr.mxu0 0.0
        %1743 = vmatpush2.msra.mxu0 0.0
        %1744 = vmatprep.mubr.f32.mxu0 0.0
        %1745 = vmatmul.mubr.f32.gmra.mxu0 %v1672
        %v1746 = vpop.f32.mrf.mxu0
        %v1747 = vadd.f32 0.0, %v1746
        %v1748 = vpop.f32.mrf.mxu0
        %v1749 = vadd.f32 0.0, %v1748
        %1750 = vdwg.mxu0
        %1751 = vmatprep.subr.mxu0 0.0
        %1752 = vmatpush1.msra.mxu0 0.0
        %1753 = vmatprep.subr.mxu0 0.0
        %1754 = vmatpush1.msra.mxu0 0.0
        %1755 = vmatprep.subr.mxu0 0.0
        %1756 = vmatpush1.msra.mxu0 0.0
        %1757 = vmatprep.subr.mxu0 0.0
        %1758 = vmatpush1.msra.mxu0 0.0
        %1759 = vmatprep.subr.mxu0 0.0
        %1760 = vmatpush1.msra.mxu0 0.0
        %1761 = vmatprep.subr.mxu0 0.0
        %1762 = vmatpush1.msra.mxu0 0.0
        %1763 = vmatprep.subr.mxu0 0.0
        %1764 = vmatpush1.msra.mxu0 0.0
        %1765 = vmatprep.subr.mxu0 0.0
        %1766 = vmatpush1.msra.mxu0 0.0
        %1767 = vmatprep.subr.mxu0 0.0
        %1768 = vmatpush1.msra.mxu0 0.0
        %1769 = vmatprep.subr.mxu0 0.0
        %1770 = vmatpush1.msra.mxu0 0.0
        %1771 = vmatprep.subr.mxu0 0.0
        %1772 = vmatpush1.msra.mxu0 0.0
        %1773 = vmatprep.subr.mxu0 0.0
        %1774 = vmatpush1.msra.mxu0 0.0
        %1775 = vmatprep.subr.mxu0 0.0
        %1776 = vmatpush1.msra.mxu0 0.0
        %1777 = vmatprep.subr.mxu0 0.0
        %1778 = vmatpush1.msra.mxu0 0.0
        %1779 = vmatprep.subr.mxu0 0.0
        %1780 = vmatpush1.msra.mxu0 0.0
        %1781 = vmatprep.subr.mxu0 0.0
        %1782 = vmatpush1.msra.mxu0 %v1678
        %1783 = vmatprep.subr.mxu0 0.0
        %1784 = vmatpush2.msra.mxu0 0.0
        %1785 = vmatprep.subr.mxu0 0.0
        %1786 = vmatpush2.msra.mxu0 0.0
        %1787 = vmatprep.subr.mxu0 0.0
        %1788 = vmatpush2.msra.mxu0 0.0
        %1789 = vmatprep.subr.mxu0 0.0
        %1790 = vmatpush2.msra.mxu0 0.0
        %1791 = vmatprep.subr.mxu0 0.0
        %1792 = vmatpush2.msra.mxu0 0.0
        %1793 = vmatprep.subr.mxu0 0.0
        %1794 = vmatpush2.msra.mxu0 0.0
        %1795 = vmatprep.subr.mxu0 0.0
        %1796 = vmatpush2.msra.mxu0 0.0
        %1797 = vmatprep.subr.mxu0 0.0
        %1798 = vmatpush2.msra.mxu0 0.0
        %1799 = vmatprep.subr.mxu0 0.0
        %1800 = vmatpush2.msra.mxu0 0.0
        %1801 = vmatprep.subr.mxu0 0.0
        %1802 = vmatpush2.msra.mxu0 0.0
        %1803 = vmatprep.subr.mxu0 0.0
        %1804 = vmatpush2.msra.mxu0 0.0
        %1805 = vmatprep.subr.mxu0 0.0
        %1806 = vmatpush2.msra.mxu0 0.0
        %1807 = vmatprep.subr.mxu0 0.0
        %1808 = vmatpush2.msra.mxu0 0.0
        %1809 = vmatprep.subr.mxu0 0.0
        %1810 = vmatpush2.msra.mxu0 0.0
        %1811 = vmatprep.subr.mxu0 0.0
        %1812 = vmatpush2.msra.mxu0 0.0
        %1813 = vmatprep.subr.mxu0 0.0
        %1814 = vmatpush2.msra.mxu0 0.0
        %1815 = vmatprep.mubr.f32.mxu0 0.0
        %1816 = vmatmul.mubr.f32.gmra.mxu0 %v1672
        %v1817 = vpop.f32.mrf.mxu0
        %v1818 = vadd.f32 0.0, %v1817
        %v1819 = vpop.f32.mrf.mxu0
        %1820 = vdwg.mxu0
        %v1821 = vadd.f32 %v1648, %v1747
        %v1822 = vadd.f32 %v1649, %v1749
        %v1823 = vadd.f32 %v1650, %v1818
        %s1824 = scalar_lea.vmem %s3, 64
        %v1825 = vld [vmem:[%s1824] sm:$0xff]
        %v1826 = vld [vmem:[%s451] sm:$0xff]
        %v1827 = vld [vmem:[%s451 + $0x8] sm:$0xff]
        %v1830 = vcombine.high %v1826, %v1826
        %v1831 = vcombine.high %v1827, %v1827
        %1832 = vrot.lane.b32.xlu0 %v1826, 90
        %v1833 = vpop.permute.xlu0 %1832
        %1834 = vrot.lane.b32.xlu0 %v1830, 90
        %v1835 = vpop.permute.xlu0 %1834
        %1836 = vrot.lane.b32.xlu0 %v1827, 90
        %v1837 = vpop.permute.xlu0 %1836
        %1838 = vrot.lane.b32.xlu0 %v1831, 90
        %v1839 = vpop.permute.xlu0 %1838
        %vm1840 = vcmask 736256
        %v1841 = vsel %vm1840, %v1833, %v1835
        %v1842 = vsel %vm1840, %v1835, %v1837
        %v1843 = vsel %vm1840, %v1837, %v1839
        %v1845 = vsel %vm481, %v1825, 0
        %v1847 = vsel %vm485, %v1841, 0
        %v1849 = vsel %vm485, %v1842, 0
        %v1851 = vsel %vm485, %v1843, 0
        %1853 = vmatprep.subr.mxu0 0.0
        %1854 = vmatpush1.msra.mxu0 0.0
        %1855 = vmatprep.subr.mxu0 0.0
        %1856 = vmatpush1.msra.mxu0 0.0
        %1857 = vmatprep.subr.mxu0 0.0
        %1858 = vmatpush1.msra.mxu0 0.0
        %1859 = vmatprep.subr.mxu0 0.0
        %1860 = vmatpush1.msra.mxu0 0.0
        %1861 = vmatprep.subr.mxu0 0.0
        %1862 = vmatpush1.msra.mxu0 0.0
        %1863 = vmatprep.subr.mxu0 0.0
        %1864 = vmatpush1.msra.mxu0 0.0
        %1865 = vmatprep.subr.mxu0 0.0
        %1866 = vmatpush1.msra.mxu0 0.0
        %1867 = vmatprep.subr.mxu0 0.0
        %1868 = vmatpush1.msra.mxu0 0.0
        %1869 = vmatprep.subr.mxu0 0.0
        %1870 = vmatpush1.msra.mxu0 0.0
        %1871 = vmatprep.subr.mxu0 0.0
        %1872 = vmatpush1.msra.mxu0 0.0
        %1873 = vmatprep.subr.mxu0 0.0
        %1874 = vmatpush1.msra.mxu0 0.0
        %1875 = vmatprep.subr.mxu0 0.0
        %1876 = vmatpush1.msra.mxu0 0.0
        %1877 = vmatprep.subr.mxu0 0.0
        %1878 = vmatpush1.msra.mxu0 0.0
        %1879 = vmatprep.subr.mxu0 0.0
        %1880 = vmatpush1.msra.mxu0 0.0
        %1881 = vmatprep.subr.mxu0 0.0
        %1882 = vmatpush1.msra.mxu0 0.0
        %1883 = vmatprep.subr.mxu0 %v1849
        %1884 = vmatpush1.msra.mxu0 %v1847
        %1885 = vmatprep.subr.mxu0 0.0
        %1886 = vmatpush2.msra.mxu0 0.0
        %1887 = vmatprep.subr.mxu0 0.0
        %1888 = vmatpush2.msra.mxu0 0.0
        %1889 = vmatprep.subr.mxu0 0.0
        %1890 = vmatpush2.msra.mxu0 0.0
        %1891 = vmatprep.subr.mxu0 0.0
        %1892 = vmatpush2.msra.mxu0 0.0
        %1893 = vmatprep.subr.mxu0 0.0
        %1894 = vmatpush2.msra.mxu0 0.0
        %1895 = vmatprep.subr.mxu0 0.0
        %1896 = vmatpush2.msra.mxu0 0.0
        %1897 = vmatprep.subr.mxu0 0.0
        %1898 = vmatpush2.msra.mxu0 0.0
        %1899 = vmatprep.subr.mxu0 0.0
        %1900 = vmatpush2.msra.mxu0 0.0
        %1901 = vmatprep.subr.mxu0 0.0
        %1902 = vmatpush2.msra.mxu0 0.0
        %1903 = vmatprep.subr.mxu0 0.0
        %1904 = vmatpush2.msra.mxu0 0.0
        %1905 = vmatprep.subr.mxu0 0.0
        %1906 = vmatpush2.msra.mxu0 0.0
        %1907 = vmatprep.subr.mxu0 0.0
        %1908 = vmatpush2.msra.mxu0 0.0
        %1909 = vmatprep.subr.mxu0 0.0
        %1910 = vmatpush2.msra.mxu0 0.0
        %1911 = vmatprep.subr.mxu0 0.0
        %1912 = vmatpush2.msra.mxu0 0.0
        %1913 = vmatprep.subr.mxu0 0.0
        %1914 = vmatpush2.msra.mxu0 0.0
        %1915 = vmatprep.subr.mxu0 0.0
        %1916 = vmatpush2.msra.mxu0 0.0
        %1917 = vmatprep.mubr.f32.mxu0 0.0
        %1918 = vmatmul.mubr.f32.gmra.mxu0 %v1845
        %v1919 = vpop.f32.mrf.mxu0
        %v1920 = vadd.f32 0.0, %v1919
        %v1921 = vpop.f32.mrf.mxu0
        %v1922 = vadd.f32 0.0, %v1921
        %1923 = vdwg.mxu0
        %1924 = vmatprep.subr.mxu0 0.0
        %1925 = vmatpush1.msra.mxu0 0.0
        %1926 = vmatprep.subr.mxu0 0.0
        %1927 = vmatpush1.msra.mxu0 0.0
        %1928 = vmatprep.subr.mxu0 0.0
        %1929 = vmatpush1.msra.mxu0 0.0
        %1930 = vmatprep.subr.mxu0 0.0
        %1931 = vmatpush1.msra.mxu0 0.0
        %1932 = vmatprep.subr.mxu0 0.0
        %1933 = vmatpush1.msra.mxu0 0.0
        %1934 = vmatprep.subr.mxu0 0.0
        %1935 = vmatpush1.msra.mxu0 0.0
        %1936 = vmatprep.subr.mxu0 0.0
        %1937 = vmatpush1.msra.mxu0 0.0
        %1938 = vmatprep.subr.mxu0 0.0
        %1939 = vmatpush1.msra.mxu0 0.0
        %1940 = vmatprep.subr.mxu0 0.0
        %1941 = vmatpush1.msra.mxu0 0.0
        %1942 = vmatprep.subr.mxu0 0.0
        %1943 = vmatpush1.msra.mxu0 0.0
        %1944 = vmatprep.subr.mxu0 0.0
        %1945 = vmatpush1.msra.mxu0 0.0
        %1946 = vmatprep.subr.mxu0 0.0
        %1947 = vmatpush1.msra.mxu0 0.0
        %1948 = vmatprep.subr.mxu0 0.0
        %1949 = vmatpush1.msra.mxu0 0.0
        %1950 = vmatprep.subr.mxu0 0.0
        %1951 = vmatpush1.msra.mxu0 0.0
        %1952 = vmatprep.subr.mxu0 0.0
        %1953 = vmatpush1.msra.mxu0 0.0
        %1954 = vmatprep.subr.mxu0 0.0
        %1955 = vmatpush1.msra.mxu0 %v1851
        %1956 = vmatprep.subr.mxu0 0.0
        %1957 = vmatpush2.msra.mxu0 0.0
        %1958 = vmatprep.subr.mxu0 0.0
        %1959 = vmatpush2.msra.mxu0 0.0
        %1960 = vmatprep.subr.mxu0 0.0
        %1961 = vmatpush2.msra.mxu0 0.0
        %1962 = vmatprep.subr.mxu0 0.0
        %1963 = vmatpush2.msra.mxu0 0.0
        %1964 = vmatprep.subr.mxu0 0.0
        %1965 = vmatpush2.msra.mxu0 0.0
        %1966 = vmatprep.subr.mxu0 0.0
        %1967 = vmatpush2.msra.mxu0 0.0
        %1968 = vmatprep.subr.mxu0 0.0
        %1969 = vmatpush2.msra.mxu0 0.0
        %1970 = vmatprep.subr.mxu0 0.0
        %1971 = vmatpush2.msra.mxu0 0.0
        %1972 = vmatprep.subr.mxu0 0.0
        %1973 = vmatpush2.msra.mxu0 0.0
        %1974 = vmatprep.subr.mxu0 0.0
        %1975 = vmatpush2.msra.mxu0 0.0
        %1976 = vmatprep.subr.mxu0 0.0
        %1977 = vmatpush2.msra.mxu0 0.0
        %1978 = vmatprep.subr.mxu0 0.0
        %1979 = vmatpush2.msra.mxu0 0.0
        %1980 = vmatprep.subr.mxu0 0.0
        %1981 = vmatpush2.msra.mxu0 0.0
        %1982 = vmatprep.subr.mxu0 0.0
        %1983 = vmatpush2.msra.mxu0 0.0
        %1984 = vmatprep.subr.mxu0 0.0
        %1985 = vmatpush2.msra.mxu0 0.0
        %1986 = vmatprep.subr.mxu0 0.0
        %1987 = vmatpush2.msra.mxu0 0.0
        %1988 = vmatprep.mubr.f32.mxu0 0.0
        %1989 = vmatmul.mubr.f32.gmra.mxu0 %v1845
        %v1990 = vpop.f32.mrf.mxu0
        %v1991 = vadd.f32 0.0, %v1990
        %v1992 = vpop.f32.mrf.mxu0
        %1993 = vdwg.mxu0
        %v1994 = vadd.f32 %v1821, %v1920
        %v1995 = vadd.f32 %v1822, %v1922
        %v1996 = vadd.f32 %v1823, %v1991
        %v1997 = vld [vmem:[%s4] sm:$0xff]
        %1999 = vset.pattern.permute.xlu0 0
        %2000 = vperm.xlu0 %1999, %v1997
        %v2001 = vpop.permute.xlu0 %2000
        %v2003 = vadd.f32 %v1994, %v2001
        %v2004 = vadd.f32 %v1995, %v2001
        %v2005 = vadd.f32 %v1996, %v2001
        %v2006 = vld [vmem:[%s5] sm:$0xff]
        %v2007 = vld [vmem:[%s6] sm:$0xff]
        %v2009 = vlaneseq
        %v2010 = vshrl.u32 %v2009, 7
        %v2011 = vsub.s32 0, %v2010
        %v2012 = vrot.slane %v456, %v2011
        %v2013 = vlaneseq
        %v2014 = vshrl.u32 %v2013, 7
        %v2015 = vsub.s32 1, %v2014
        %v2016 = vrot.slane %v456, %v2015
        %v2017 = vlaneseq
        %v2018 = vshrl.u32 %v2017, 7
        %v2019 = vsub.s32 2, %v2018
        %v2020 = vrot.slane %v456, %v2019
        %v2024 = vmul.f32 %v2003, %v2012
        %v2025 = vmul.f32 %v2004, %v2016
        %v2026 = vmul.f32 %v2005, %v2020
        %v2027 = vadd.f32 %v2024, %v2025
        %v2028 = vadd.f32 %v2027, %v2026
        %2029 = vadd.xlane.f32.xlu0 %v2028
        %v2030 = vpop.xlane.xlu0 %2029
        %v2031 = vadd.f32 %v2030, 0.0
        %v2032 = vrcp.pop 256.0
        %v2033 = vmul.f32 %v2031, %v2032
        %v2034 = vsub.f32 %v2003, %v2033
        %v2035 = vsub.f32 %v2004, %v2033
        %v2036 = vsub.f32 %v2005, %v2033
        %v2037 = vmul.f32 %v2034, %v2012
        %v2038 = vmul.f32 %v2035, %v2016
        %v2039 = vmul.f32 %v2036, %v2020
        %v2040 = vmul.f32 %v2037, %v2037
        %v2041 = vmul.f32 %v2038, %v2038
        %v2042 = vmul.f32 %v2039, %v2039
        %v2043 = vadd.f32 %v2040, %v2041
        %v2044 = vadd.f32 %v2043, %v2042
        %2045 = vadd.xlane.f32.xlu0 %v2044
        %v2046 = vpop.xlane.xlu0 %2045
        %v2047 = vadd.f32 %v2046, 0.0
        %v2048 = vmul.f32 %v2047, %v2032
        %v2049 = vadd.f32 %v2048, 1e-05
        %v2050 = vrsqrt.pop %v2049
        %v2051 = vmul.f32 %v2034, %v2050
        %v2052 = vmul.f32 %v2035, %v2050
        %v2053 = vmul.f32 %v2036, %v2050
        %2055 = vset.pattern.permute.xlu0 0
        %2056 = vperm.xlu0 %2055, %v2006
        %v2057 = vpop.permute.xlu0 %2056
        %v2059 = vmul.f32 %v2051, %v2057
        %v2060 = vmul.f32 %v2052, %v2057
        %v2061 = vmul.f32 %v2053, %v2057
        %2063 = vset.pattern.permute.xlu0 0
        %2064 = vperm.xlu0 %2063, %v2007
        %v2065 = vpop.permute.xlu0 %2064
        %v2067 = vadd.f32 %v2059, %v2065
        %v2068 = vadd.f32 %v2060, %v2065
        %v2069 = vadd.f32 %v2061, %v2065
        %v2070 = vxor.u32 %v2067, 2147483648
        %v2071 = vxor.u32 %v2068, 2147483648
        %v2072 = vxor.u32 %v2069, 2147483648
        %v2073 = vmul.f32 %v2070, 1.442695
        %v2074 = vpow.pop %v2073
        %v2075 = vmul.f32 %v2071, 1.442695
        %v2076 = vpow.pop %v2075
        %v2077 = vmul.f32 %v2072, 1.442695
        %v2078 = vpow.pop %v2077
        %v2079 = vadd.f32 %v2074, 1.0
        %v2080 = vadd.f32 %v2076, 1.0
        %v2081 = vadd.f32 %v2078, 1.0
        %v2082 = vrcp.pop %v2079
        %v2083 = vmul.f32 1.0, %v2082
        %v2084 = vrcp.pop %v2080
        %v2085 = vmul.f32 1.0, %v2084
        %v2086 = vrcp.pop %v2081
        %v2087 = vmul.f32 1.0, %v2086
        %v2088 = vmul.f32 %v2067, %v2083
        %v2089 = vmul.f32 %v2068, %v2085
        %v2090 = vmul.f32 %v2069, %v2087
        %2092 = vset.pattern.permute.xlu0 0
        %2093 = vperm.xlu0 %2092, %v457
        %v2094 = vpop.permute.xlu0 %2093
        %v2096 = vadd.f32 %v2088, %v2094
        %v2097 = vadd.f32 %v2089, %v2094
        %v2098 = vadd.f32 %v2090, %v2094
        %v2099 = vmul.f32 %v2096, %v2012
        %v2100 = vmul.f32 %v2097, %v2016
        %v2101 = vmul.f32 %v2098, %v2020
        %2102 = vst [vmem:[#allocation2] sm:$0xff] 0.0
        %2103 = vst [vmem:[#allocation2 + $0x8] sm:$0xff] 0.0
        %2104 = vst [vmem:[#allocation2 + $0x10] sm:$0xff] 0.0
        %2105 = vst [vmem:[#allocation2 + $0x18] sm:$0xff] 0.0
        %2109 = vrot.lane.b32.xlu0 %v2099, 19
        %v2110 = vpop.permute.xlu0 %2109
        %2111 = vrot.lane.b32.xlu0 %v2100, 19
        %v2112 = vpop.permute.xlu0 %2111
        %2113 = vrot.lane.b32.xlu0 %v2101, 19
        %v2114 = vpop.permute.xlu0 %2113
        %vm2115 = vcmask 154624
        %v2116 = vsel %vm2115, %v2110, %v2112
        %v2117 = vsel %vm2115, %v2112, %v2114
        %vm2122 = vcmask 1047704
        %2123 = vst.msk [vmem:[#allocation2] sm:$0xff] %vm2122, %v2110
        %2124 = vst [vmem:[#allocation2 + $0x8] sm:$0xff] %v2116
        %2125 = vst [vmem:[#allocation2 + $0x10] sm:$0xff] %v2117
        %2126 = vst.msk [vmem:[#allocation2 + $0x18] sm:$0xff] %vm2115, %v2114
        %v2127 = vld [vmem:[%s7] sm:$0xff]
        %v2128 = vld [vmem:[#allocation2] sm:$0xff]
        %v2129 = vld [vmem:[#allocation2 + $0x8] sm:$0xff]
        %v2130 = vld [vmem:[#allocation2 + $0x10] sm:$0xff]
        %s2131 = scalar_lea.vmem %s7, 8
        %v2132 = vld [vmem:[%s2131] sm:$0xff]
        %v2133 = vld [vmem:[#allocation2] sm:$0xff]
        %v2134 = vld [vmem:[#allocation2 + $0x8] sm:$0xff]
        %v2135 = vld [vmem:[#allocation2 + $0x10] sm:$0xff]
        %v2136 = vld [vmem:[#allocation2 + $0x18] sm:$0xff]
        %2141 = vrot.lane.b32.xlu0 %v2133, 127
        %v2142 = vpop.permute.xlu0 %2141
        %2143 = vrot.lane.b32.xlu0 %v2134, 127
        %v2144 = vpop.permute.xlu0 %2143
        %2145 = vrot.lane.b32.xlu0 %v2135, 127
        %v2146 = vpop.permute.xlu0 %2145
        %2147 = vrot.lane.b32.xlu0 %v2136, 127
        %v2148 = vpop.permute.xlu0 %2147
        %v2149 = vsel %vm477, %v2142, %v2144
        %v2150 = vsel %vm477, %v2144, %v2146
        %v2151 = vsel %vm477, %v2146, %v2148
        %vm2155 = vcmask 64512
        %v2157 = vsel %vm2155, %v2132, 0
        %2159 = vmatprep.subr.mxu0 0.0
        %2160 = vmatpush1.msra.mxu0 0.0
        %2161 = vmatprep.subr.mxu0 0.0
        %2162 = vmatpush1.msra.mxu0 0.0
        %2163 = vmatprep.subr.mxu0 0.0
        %2164 = vmatpush1.msra.mxu0 0.0
        %2165 = vmatprep.subr.mxu0 0.0
        %2166 = vmatpush1.msra.mxu0 0.0
        %2167 = vmatprep.subr.mxu0 0.0
        %2168 = vmatpush1.msra.mxu0 0.0
        %2169 = vmatprep.subr.mxu0 0.0
        %2170 = vmatpush1.msra.mxu0 0.0
        %2171 = vmatprep.subr.mxu0 0.0
        %2172 = vmatpush1.msra.mxu0 0.0
        %2173 = vmatprep.subr.mxu0 0.0
        %2174 = vmatpush1.msra.mxu0 0.0
        %2175 = vmatprep.subr.mxu0 0.0
        %2176 = vmatpush1.msra.mxu0 0.0
        %2177 = vmatprep.subr.mxu0 0.0
        %2178 = vmatpush1.msra.mxu0 0.0
        %2179 = vmatprep.subr.mxu0 0.0
        %2180 = vmatpush1.msra.mxu0 0.0
        %2181 = vmatprep.subr.mxu0 0.0
        %2182 = vmatpush1.msra.mxu0 0.0
        %2183 = vmatprep.subr.mxu0 0.0
        %2184 = vmatpush1.msra.mxu0 0.0
        %2185 = vmatprep.subr.mxu0 0.0
        %2186 = vmatpush1.msra.mxu0 0.0
        %2187 = vmatprep.subr.mxu0 0.0
        %2188 = vmatpush1.msra.mxu0 0.0
        %2189 = vmatprep.subr.mxu0 %v2150
        %2190 = vmatpush1.msra.mxu0 %v2149
        %2191 = vmatprep.subr.mxu0 0.0
        %2192 = vmatpush2.msra.mxu0 0.0
        %2193 = vmatprep.subr.mxu0 0.0
        %2194 = vmatpush2.msra.mxu0 0.0
        %2195 = vmatprep.subr.mxu0 0.0
        %2196 = vmatpush2.msra.mxu0 0.0
        %2197 = vmatprep.subr.mxu0 0.0
        %2198 = vmatpush2.msra.mxu0 0.0
        %2199 = vmatprep.subr.mxu0 0.0
        %2200 = vmatpush2.msra.mxu0 0.0
        %2201 = vmatprep.subr.mxu0 0.0
        %2202 = vmatpush2.msra.mxu0 0.0
        %2203 = vmatprep.subr.mxu0 0.0
        %2204 = vmatpush2.msra.mxu0 0.0
        %2205 = vmatprep.subr.mxu0 0.0
        %2206 = vmatpush2.msra.mxu0 0.0
        %2207 = vmatprep.subr.mxu0 0.0
        %2208 = vmatpush2.msra.mxu0 0.0
        %2209 = vmatprep.subr.mxu0 0.0
        %2210 = vmatpush2.msra.mxu0 0.0
        %2211 = vmatprep.subr.mxu0 0.0
        %2212 = vmatpush2.msra.mxu0 0.0
        %2213 = vmatprep.subr.mxu0 0.0
        %2214 = vmatpush2.msra.mxu0 0.0
        %2215 = vmatprep.subr.mxu0 0.0
        %2216 = vmatpush2.msra.mxu0 0.0
        %2217 = vmatprep.subr.mxu0 0.0
        %2218 = vmatpush2.msra.mxu0 0.0
        %2219 = vmatprep.subr.mxu0 0.0
        %2220 = vmatpush2.msra.mxu0 0.0
        %2221 = vmatprep.subr.mxu0 0.0
        %2222 = vmatpush2.msra.mxu0 0.0
        %2223 = vmatprep.mubr.f32.mxu0 0.0
        %2224 = vmatmul.mubr.f32.gmra.mxu0 %v2157
        %v2225 = vpop.f32.mrf.mxu0
        %v2226 = vadd.f32 0.0, %v2225
        %v2227 = vpop.f32.mrf.mxu0
        %v2228 = vadd.f32 0.0, %v2227
        %2229 = vdwg.mxu0
        %2230 = vmatprep.subr.mxu0 0.0
        %2231 = vmatpush1.msra.mxu0 0.0
        %2232 = vmatprep.subr.mxu0 0.0
        %2233 = vmatpush1.msra.mxu0 0.0
        %2234 = vmatprep.subr.mxu0 0.0
        %2235 = vmatpush1.msra.mxu0 0.0
        %2236 = vmatprep.subr.mxu0 0.0
        %2237 = vmatpush1.msra.mxu0 0.0
        %2238 = vmatprep.subr.mxu0 0.0
        %2239 = vmatpush1.msra.mxu0 0.0
        %2240 = vmatprep.subr.mxu0 0.0
        %2241 = vmatpush1.msra.mxu0 0.0
        %2242 = vmatprep.subr.mxu0 0.0
        %2243 = vmatpush1.msra.mxu0 0.0
        %2244 = vmatprep.subr.mxu0 0.0
        %2245 = vmatpush1.msra.mxu0 0.0
        %2246 = vmatprep.subr.mxu0 0.0
        %2247 = vmatpush1.msra.mxu0 0.0
        %2248 = vmatprep.subr.mxu0 0.0
        %2249 = vmatpush1.msra.mxu0 0.0
        %2250 = vmatprep.subr.mxu0 0.0
        %2251 = vmatpush1.msra.mxu0 0.0
        %2252 = vmatprep.subr.mxu0 0.0
        %2253 = vmatpush1.msra.mxu0 0.0
        %2254 = vmatprep.subr.mxu0 0.0
        %2255 = vmatpush1.msra.mxu0 0.0
        %2256 = vmatprep.subr.mxu0 0.0
        %2257 = vmatpush1.msra.mxu0 0.0
        %2258 = vmatprep.subr.mxu0 0.0
        %2259 = vmatpush1.msra.mxu0 0.0
        %2260 = vmatprep.subr.mxu0 0.0
        %2261 = vmatpush1.msra.mxu0 %v2151
        %2262 = vmatprep.subr.mxu0 0.0
        %2263 = vmatpush2.msra.mxu0 0.0
        %2264 = vmatprep.subr.mxu0 0.0
        %2265 = vmatpush2.msra.mxu0 0.0
        %2266 = vmatprep.subr.mxu0 0.0
        %2267 = vmatpush2.msra.mxu0 0.0
        %2268 = vmatprep.subr.mxu0 0.0
        %2269 = vmatpush2.msra.mxu0 0.0
        %2270 = vmatprep.subr.mxu0 0.0
        %2271 = vmatpush2.msra.mxu0 0.0
        %2272 = vmatprep.subr.mxu0 0.0
        %2273 = vmatpush2.msra.mxu0 0.0
        %2274 = vmatprep.subr.mxu0 0.0
        %2275 = vmatpush2.msra.mxu0 0.0
        %2276 = vmatprep.subr.mxu0 0.0
        %2277 = vmatpush2.msra.mxu0 0.0
        %2278 = vmatprep.subr.mxu0 0.0
        %2279 = vmatpush2.msra.mxu0 0.0
        %2280 = vmatprep.subr.mxu0 0.0
        %2281 = vmatpush2.msra.mxu0 0.0
        %2282 = vmatprep.subr.mxu0 0.0
        %2283 = vmatpush2.msra.mxu0 0.0
        %2284 = vmatprep.subr.mxu0 0.0
        %2285 = vmatpush2.msra.mxu0 0.0
        %2286 = vmatprep.subr.mxu0 0.0
        %2287 = vmatpush2.msra.mxu0 0.0
        %2288 = vmatprep.subr.mxu0 0.0
        %2289 = vmatpush2.msra.mxu0 0.0
        %2290 = vmatprep.subr.mxu0 0.0
        %2291 = vmatpush2.msra.mxu0 0.0
        %2292 = vmatprep.subr.mxu0 0.0
        %2293 = vmatpush2.msra.mxu0 0.0
        %2294 = vmatprep.mubr.f32.mxu0 0.0
        %2295 = vmatmul.mubr.f32.gmra.mxu0 %v2157
        %v2296 = vpop.f32.mrf.mxu0
        %v2297 = vadd.f32 0.0, %v2296
        %v2298 = vpop.f32.mrf.mxu0
        %2299 = vdwg.mxu0
        %v2301 = vsel %vm2155, %v2127, 0
        %2303 = vmatprep.subr.mxu0 0.0
        %2304 = vmatpush1.msra.mxu0 0.0
        %2305 = vmatprep.subr.mxu0 0.0
        %2306 = vmatpush1.msra.mxu0 0.0
        %2307 = vmatprep.subr.mxu0 0.0
        %2308 = vmatpush1.msra.mxu0 0.0
        %2309 = vmatprep.subr.mxu0 0.0
        %2310 = vmatpush1.msra.mxu0 0.0
        %2311 = vmatprep.subr.mxu0 0.0
        %2312 = vmatpush1.msra.mxu0 0.0
        %2313 = vmatprep.subr.mxu0 0.0
        %2314 = vmatpush1.msra.mxu0 0.0
        %2315 = vmatprep.subr.mxu0 0.0
        %2316 = vmatpush1.msra.mxu0 0.0
        %2317 = vmatprep.subr.mxu0 0.0
        %2318 = vmatpush1.msra.mxu0 0.0
        %2319 = vmatprep.subr.mxu0 0.0
        %2320 = vmatpush1.msra.mxu0 0.0
        %2321 = vmatprep.subr.mxu0 0.0
        %2322 = vmatpush1.msra.mxu0 0.0
        %2323 = vmatprep.subr.mxu0 0.0
        %2324 = vmatpush1.msra.mxu0 0.0
        %2325 = vmatprep.subr.mxu0 0.0
        %2326 = vmatpush1.msra.mxu0 0.0
        %2327 = vmatprep.subr.mxu0 0.0
        %2328 = vmatpush1.msra.mxu0 0.0
        %2329 = vmatprep.subr.mxu0 0.0
        %2330 = vmatpush1.msra.mxu0 0.0
        %2331 = vmatprep.subr.mxu0 0.0
        %2332 = vmatpush1.msra.mxu0 0.0
        %2333 = vmatprep.subr.mxu0 %v2129
        %2334 = vmatpush1.msra.mxu0 %v2128
        %2335 = vmatprep.subr.mxu0 0.0
        %2336 = vmatpush2.msra.mxu0 0.0
        %2337 = vmatprep.subr.mxu0 0.0
        %2338 = vmatpush2.msra.mxu0 0.0
        %2339 = vmatprep.subr.mxu0 0.0
        %2340 = vmatpush2.msra.mxu0 0.0
        %2341 = vmatprep.subr.mxu0 0.0
        %2342 = vmatpush2.msra.mxu0 0.0
        %2343 = vmatprep.subr.mxu0 0.0
        %2344 = vmatpush2.msra.mxu0 0.0
        %2345 = vmatprep.subr.mxu0 0.0
        %2346 = vmatpush2.msra.mxu0 0.0
        %2347 = vmatprep.subr.mxu0 0.0
        %2348 = vmatpush2.msra.mxu0 0.0
        %2349 = vmatprep.subr.mxu0 0.0
        %2350 = vmatpush2.msra.mxu0 0.0
        %2351 = vmatprep.subr.mxu0 0.0
        %2352 = vmatpush2.msra.mxu0 0.0
        %2353 = vmatprep.subr.mxu0 0.0
        %2354 = vmatpush2.msra.mxu0 0.0
        %2355 = vmatprep.subr.mxu0 0.0
        %2356 = vmatpush2.msra.mxu0 0.0
        %2357 = vmatprep.subr.mxu0 0.0
        %2358 = vmatpush2.msra.mxu0 0.0
        %2359 = vmatprep.subr.mxu0 0.0
        %2360 = vmatpush2.msra.mxu0 0.0
        %2361 = vmatprep.subr.mxu0 0.0
        %2362 = vmatpush2.msra.mxu0 0.0
        %2363 = vmatprep.subr.mxu0 0.0
        %2364 = vmatpush2.msra.mxu0 0.0
        %2365 = vmatprep.subr.mxu0 0.0
        %2366 = vmatpush2.msra.mxu0 0.0
        %2367 = vmatprep.mubr.f32.mxu0 0.0
        %2368 = vmatmul.mubr.f32.gmra.mxu0 %v2301
        %v2369 = vpop.f32.mrf.mxu0
        %v2370 = vadd.f32 %v2226, %v2369
        %v2371 = vpop.f32.mrf.mxu0
        %v2372 = vadd.f32 %v2228, %v2371
        %2373 = vdwg.mxu0
        %2374 = vmatprep.subr.mxu0 0.0
        %2375 = vmatpush1.msra.mxu0 0.0
        %2376 = vmatprep.subr.mxu0 0.0
        %2377 = vmatpush1.msra.mxu0 0.0
        %2378 = vmatprep.subr.mxu0 0.0
        %2379 = vmatpush1.msra.mxu0 0.0
        %2380 = vmatprep.subr.mxu0 0.0
        %2381 = vmatpush1.msra.mxu0 0.0
        %2382 = vmatprep.subr.mxu0 0.0
        %2383 = vmatpush1.msra.mxu0 0.0
        %2384 = vmatprep.subr.mxu0 0.0
        %2385 = vmatpush1.msra.mxu0 0.0
        %2386 = vmatprep.subr.mxu0 0.0
        %2387 = vmatpush1.msra.mxu0 0.0
        %2388 = vmatprep.subr.mxu0 0.0
        %2389 = vmatpush1.msra.mxu0 0.0
        %2390 = vmatprep.subr.mxu0 0.0
        %2391 = vmatpush1.msra.mxu0 0.0
        %2392 = vmatprep.subr.mxu0 0.0
        %2393 = vmatpush1.msra.mxu0 0.0
        %2394 = vmatprep.subr.mxu0 0.0
        %2395 = vmatpush1.msra.mxu0 0.0
        %2396 = vmatprep.subr.mxu0 0.0
        %2397 = vmatpush1.msra.mxu0 0.0
        %2398 = vmatprep.subr.mxu0 0.0
        %2399 = vmatpush1.msra.mxu0 0.0
        %2400 = vmatprep.subr.mxu0 0.0
        %2401 = vmatpush1.msra.mxu0 0.0
        %2402 = vmatprep.subr.mxu0 0.0
        %2403 = vmatpush1.msra.mxu0 0.0
        %2404 = vmatprep.subr.mxu0 0.0
        %2405 = vmatpush1.msra.mxu0 %v2130
        %2406 = vmatprep.subr.mxu0 0.0
        %2407 = vmatpush2.msra.mxu0 0.0
        %2408 = vmatprep.subr.mxu0 0.0
        %2409 = vmatpush2.msra.mxu0 0.0
        %2410 = vmatprep.subr.mxu0 0.0
        %2411 = vmatpush2.msra.mxu0 0.0
        %2412 = vmatprep.subr.mxu0 0.0
        %2413 = vmatpush2.msra.mxu0 0.0
        %2414 = vmatprep.subr.mxu0 0.0
        %2415 = vmatpush2.msra.mxu0 0.0
        %2416 = vmatprep.subr.mxu0 0.0
        %2417 = vmatpush2.msra.mxu0 0.0
        %2418 = vmatprep.subr.mxu0 0.0
        %2419 = vmatpush2.msra.mxu0 0.0
        %2420 = vmatprep.subr.mxu0 0.0
        %2421 = vmatpush2.msra.mxu0 0.0
        %2422 = vmatprep.subr.mxu0 0.0
        %2423 = vmatpush2.msra.mxu0 0.0
        %2424 = vmatprep.subr.mxu0 0.0
        %2425 = vmatpush2.msra.mxu0 0.0
        %2426 = vmatprep.subr.mxu0 0.0
        %2427 = vmatpush2.msra.mxu0 0.0
        %2428 = vmatprep.subr.mxu0 0.0
        %2429 = vmatpush2.msra.mxu0 0.0
        %2430 = vmatprep.subr.mxu0 0.0
        %2431 = vmatpush2.msra.mxu0 0.0
        %2432 = vmatprep.subr.mxu0 0.0
        %2433 = vmatpush2.msra.mxu0 0.0
        %2434 = vmatprep.subr.mxu0 0.0
        %2435 = vmatpush2.msra.mxu0 0.0
        %2436 = vmatprep.subr.mxu0 0.0
        %2437 = vmatpush2.msra.mxu0 0.0
        %2438 = vmatprep.mubr.f32.mxu0 0.0
        %2439 = vmatmul.mubr.f32.gmra.mxu0 %v2301
        %v2440 = vpop.f32.mrf.mxu0
        %v2441 = vadd.f32 %v2297, %v2440
        %v2442 = vpop.f32.mrf.mxu0
        %2443 = vdwg.mxu0
        %s2444 = scalar_lea.vmem %s7, 16
        %v2445 = vld [vmem:[%s2444] sm:$0xff]
        %2446 = vrot.lane.b32.xlu0 %v2133, 126
        %v2447 = vpop.permute.xlu0 %2446
        %2448 = vrot.lane.b32.xlu0 %v2134, 126
        %v2449 = vpop.permute.xlu0 %2448
        %2450 = vrot.lane.b32.xlu0 %v2135, 126
        %v2451 = vpop.permute.xlu0 %2450
        %2452 = vrot.lane.b32.xlu0 %v2136, 126
        %v2453 = vpop.permute.xlu0 %2452
        %v2454 = vsel %vm802, %v2447, %v2449
        %v2455 = vsel %vm802, %v2449, %v2451
        %v2456 = vsel %vm802, %v2451, %v2453
        %v2461 = vsel %vm2155, %v2445, 0
        %2463 = vmatprep.subr.mxu0 0.0
        %2464 = vmatpush1.msra.mxu0 0.0
        %2465 = vmatprep.subr.mxu0 0.0
        %2466 = vmatpush1.msra.mxu0 0.0
        %2467 = vmatprep.subr.mxu0 0.0
        %2468 = vmatpush1.msra.mxu0 0.0
        %2469 = vmatprep.subr.mxu0 0.0
        %2470 = vmatpush1.msra.mxu0 0.0
        %2471 = vmatprep.subr.mxu0 0.0
        %2472 = vmatpush1.msra.mxu0 0.0
        %2473 = vmatprep.subr.mxu0 0.0
        %2474 = vmatpush1.msra.mxu0 0.0
        %2475 = vmatprep.subr.mxu0 0.0
        %2476 = vmatpush1.msra.mxu0 0.0
        %2477 = vmatprep.subr.mxu0 0.0
        %2478 = vmatpush1.msra.mxu0 0.0
        %2479 = vmatprep.subr.mxu0 0.0
        %2480 = vmatpush1.msra.mxu0 0.0
        %2481 = vmatprep.subr.mxu0 0.0
        %2482 = vmatpush1.msra.mxu0 0.0
        %2483 = vmatprep.subr.mxu0 0.0
        %2484 = vmatpush1.msra.mxu0 0.0
        %2485 = vmatprep.subr.mxu0 0.0
        %2486 = vmatpush1.msra.mxu0 0.0
        %2487 = vmatprep.subr.mxu0 0.0
        %2488 = vmatpush1.msra.mxu0 0.0
        %2489 = vmatprep.subr.mxu0 0.0
        %2490 = vmatpush1.msra.mxu0 0.0
        %2491 = vmatprep.subr.mxu0 0.0
        %2492 = vmatpush1.msra.mxu0 0.0
        %2493 = vmatprep.subr.mxu0 %v2455
        %2494 = vmatpush1.msra.mxu0 %v2454
        %2495 = vmatprep.subr.mxu0 0.0
        %2496 = vmatpush2.msra.mxu0 0.0
        %2497 = vmatprep.subr.mxu0 0.0
        %2498 = vmatpush2.msra.mxu0 0.0
        %2499 = vmatprep.subr.mxu0 0.0
        %2500 = vmatpush2.msra.mxu0 0.0
        %2501 = vmatprep.subr.mxu0 0.0
        %2502 = vmatpush2.msra.mxu0 0.0
        %2503 = vmatprep.subr.mxu0 0.0
        %2504 = vmatpush2.msra.mxu0 0.0
        %2505 = vmatprep.subr.mxu0 0.0
        %2506 = vmatpush2.msra.mxu0 0.0
        %2507 = vmatprep.subr.mxu0 0.0
        %2508 = vmatpush2.msra.mxu0 0.0
        %2509 = vmatprep.subr.mxu0 0.0
        %2510 = vmatpush2.msra.mxu0 0.0
        %2511 = vmatprep.subr.mxu0 0.0
        %2512 = vmatpush2.msra.mxu0 0.0
        %2513 = vmatprep.subr.mxu0 0.0
        %2514 = vmatpush2.msra.mxu0 0.0
        %2515 = vmatprep.subr.mxu0 0.0
        %2516 = vmatpush2.msra.mxu0 0.0
        %2517 = vmatprep.subr.mxu0 0.0
        %2518 = vmatpush2.msra.mxu0 0.0
        %2519 = vmatprep.subr.mxu0 0.0
        %2520 = vmatpush2.msra.mxu0 0.0
        %2521 = vmatprep.subr.mxu0 0.0
        %2522 = vmatpush2.msra.mxu0 0.0
        %2523 = vmatprep.subr.mxu0 0.0
        %2524 = vmatpush2.msra.mxu0 0.0
        %2525 = vmatprep.subr.mxu0 0.0
        %2526 = vmatpush2.msra.mxu0 0.0
        %2527 = vmatprep.mubr.f32.mxu0 0.0
        %2528 = vmatmul.mubr.f32.gmra.mxu0 %v2461
        %v2529 = vpop.f32.mrf.mxu0
        %v2530 = vadd.f32 0.0, %v2529
        %v2531 = vpop.f32.mrf.mxu0
        %v2532 = vadd.f32 0.0, %v2531
        %2533 = vdwg.mxu0
        %2534 = vmatprep.subr.mxu0 0.0
        %2535 = vmatpush1.msra.mxu0 0.0
        %2536 = vmatprep.subr.mxu0 0.0
        %2537 = vmatpush1.msra.mxu0 0.0
        %2538 = vmatprep.subr.mxu0 0.0
        %2539 = vmatpush1.msra.mxu0 0.0
        %2540 = vmatprep.subr.mxu0 0.0
        %2541 = vmatpush1.msra.mxu0 0.0
        %2542 = vmatprep.subr.mxu0 0.0
        %2543 = vmatpush1.msra.mxu0 0.0
        %2544 = vmatprep.subr.mxu0 0.0
        %2545 = vmatpush1.msra.mxu0 0.0
        %2546 = vmatprep.subr.mxu0 0.0
        %2547 = vmatpush1.msra.mxu0 0.0
        %2548 = vmatprep.subr.mxu0 0.0
        %2549 = vmatpush1.msra.mxu0 0.0
        %2550 = vmatprep.subr.mxu0 0.0
        %2551 = vmatpush1.msra.mxu0 0.0
        %2552 = vmatprep.subr.mxu0 0.0
        %2553 = vmatpush1.msra.mxu0 0.0
        %2554 = vmatprep.subr.mxu0 0.0
        %2555 = vmatpush1.msra.mxu0 0.0
        %2556 = vmatprep.subr.mxu0 0.0
        %2557 = vmatpush1.msra.mxu0 0.0
        %2558 = vmatprep.subr.mxu0 0.0
        %2559 = vmatpush1.msra.mxu0 0.0
        %2560 = vmatprep.subr.mxu0 0.0
        %2561 = vmatpush1.msra.mxu0 0.0
        %2562 = vmatprep.subr.mxu0 0.0
        %2563 = vmatpush1.msra.mxu0 0.0
        %2564 = vmatprep.subr.mxu0 0.0
        %2565 = vmatpush1.msra.mxu0 %v2456
        %2566 = vmatprep.subr.mxu0 0.0
        %2567 = vmatpush2.msra.mxu0 0.0
        %2568 = vmatprep.subr.mxu0 0.0
        %2569 = vmatpush2.msra.mxu0 0.0
        %2570 = vmatprep.subr.mxu0 0.0
        %2571 = vmatpush2.msra.mxu0 0.0
        %2572 = vmatprep.subr.mxu0 0.0
        %2573 = vmatpush2.msra.mxu0 0.0
        %2574 = vmatprep.subr.mxu0 0.0
        %2575 = vmatpush2.msra.mxu0 0.0
        %2576 = vmatprep.subr.mxu0 0.0
        %2577 = vmatpush2.msra.mxu0 0.0
        %2578 = vmatprep.subr.mxu0 0.0
        %2579 = vmatpush2.msra.mxu0 0.0
        %2580 = vmatprep.subr.mxu0 0.0
        %2581 = vmatpush2.msra.mxu0 0.0
        %2582 = vmatprep.subr.mxu0 0.0
        %2583 = vmatpush2.msra.mxu0 0.0
        %2584 = vmatprep.subr.mxu0 0.0
        %2585 = vmatpush2.msra.mxu0 0.0
        %2586 = vmatprep.subr.mxu0 0.0
        %2587 = vmatpush2.msra.mxu0 0.0
        %2588 = vmatprep.subr.mxu0 0.0
        %2589 = vmatpush2.msra.mxu0 0.0
        %2590 = vmatprep.subr.mxu0 0.0
        %2591 = vmatpush2.msra.mxu0 0.0
        %2592 = vmatprep.subr.mxu0 0.0
        %2593 = vmatpush2.msra.mxu0 0.0
        %2594 = vmatprep.subr.mxu0 0.0
        %2595 = vmatpush2.msra.mxu0 0.0
        %2596 = vmatprep.subr.mxu0 0.0
        %2597 = vmatpush2.msra.mxu0 0.0
        %2598 = vmatprep.mubr.f32.mxu0 0.0
        %2599 = vmatmul.mubr.f32.gmra.mxu0 %v2461
        %v2600 = vpop.f32.mrf.mxu0
        %v2601 = vadd.f32 0.0, %v2600
        %v2602 = vpop.f32.mrf.mxu0
        %2603 = vdwg.mxu0
        %v2604 = vadd.f32 %v2370, %v2530
        %v2605 = vadd.f32 %v2372, %v2532
        %v2606 = vadd.f32 %v2441, %v2601
        %s2607 = scalar_lea.vmem %s7, 24
        %v2608 = vld [vmem:[%s2607] sm:$0xff]
        %2609 = vrot.lane.b32.xlu0 %v2133, 110
        %v2610 = vpop.permute.xlu0 %2609
        %2611 = vrot.lane.b32.xlu0 %v2134, 110
        %v2612 = vpop.permute.xlu0 %2611
        %2613 = vrot.lane.b32.xlu0 %v2135, 110
        %v2614 = vpop.permute.xlu0 %2613
        %2615 = vrot.lane.b32.xlu0 %v2136, 110
        %v2616 = vpop.permute.xlu0 %2615
        %v2617 = vsel %vm975, %v2610, %v2612
        %v2618 = vsel %vm975, %v2612, %v2614
        %v2619 = vsel %vm975, %v2614, %v2616
        %v2624 = vsel %vm2155, %v2608, 0
        %2626 = vmatprep.subr.mxu0 0.0
        %2627 = vmatpush1.msra.mxu0 0.0
        %2628 = vmatprep.subr.mxu0 0.0
        %2629 = vmatpush1.msra.mxu0 0.0
        %2630 = vmatprep.subr.mxu0 0.0
        %2631 = vmatpush1.msra.mxu0 0.0
        %2632 = vmatprep.subr.mxu0 0.0
        %2633 = vmatpush1.msra.mxu0 0.0
        %2634 = vmatprep.subr.mxu0 0.0
        %2635 = vmatpush1.msra.mxu0 0.0
        %2636 = vmatprep.subr.mxu0 0.0
        %2637 = vmatpush1.msra.mxu0 0.0
        %2638 = vmatprep.subr.mxu0 0.0
        %2639 = vmatpush1.msra.mxu0 0.0
        %2640 = vmatprep.subr.mxu0 0.0
        %2641 = vmatpush1.msra.mxu0 0.0
        %2642 = vmatprep.subr.mxu0 0.0
        %2643 = vmatpush1.msra.mxu0 0.0
        %2644 = vmatprep.subr.mxu0 0.0
        %2645 = vmatpush1.msra.mxu0 0.0
        %2646 = vmatprep.subr.mxu0 0.0
        %2647 = vmatpush1.msra.mxu0 0.0
        %2648 = vmatprep.subr.mxu0 0.0
        %2649 = vmatpush1.msra.mxu0 0.0
        %2650 = vmatprep.subr.mxu0 0.0
        %2651 = vmatpush1.msra.mxu0 0.0
        %2652 = vmatprep.subr.mxu0 0.0
        %2653 = vmatpush1.msra.mxu0 0.0
        %2654 = vmatprep.subr.mxu0 0.0
        %2655 = vmatpush1.msra.mxu0 0.0
        %2656 = vmatprep.subr.mxu0 %v2618
        %2657 = vmatpush1.msra.mxu0 %v2617
        %2658 = vmatprep.subr.mxu0 0.0
        %2659 = vmatpush2.msra.mxu0 0.0
        %2660 = vmatprep.subr.mxu0 0.0
        %2661 = vmatpush2.msra.mxu0 0.0
        %2662 = vmatprep.subr.mxu0 0.0
        %2663 = vmatpush2.msra.mxu0 0.0
        %2664 = vmatprep.subr.mxu0 0.0
        %2665 = vmatpush2.msra.mxu0 0.0
        %2666 = vmatprep.subr.mxu0 0.0
        %2667 = vmatpush2.msra.mxu0 0.0
        %2668 = vmatprep.subr.mxu0 0.0
        %2669 = vmatpush2.msra.mxu0 0.0
        %2670 = vmatprep.subr.mxu0 0.0
        %2671 = vmatpush2.msra.mxu0 0.0
        %2672 = vmatprep.subr.mxu0 0.0
        %2673 = vmatpush2.msra.mxu0 0.0
        %2674 = vmatprep.subr.mxu0 0.0
        %2675 = vmatpush2.msra.mxu0 0.0
        %2676 = vmatprep.subr.mxu0 0.0
        %2677 = vmatpush2.msra.mxu0 0.0
        %2678 = vmatprep.subr.mxu0 0.0
        %2679 = vmatpush2.msra.mxu0 0.0
        %2680 = vmatprep.subr.mxu0 0.0
        %2681 = vmatpush2.msra.mxu0 0.0
        %2682 = vmatprep.subr.mxu0 0.0
        %2683 = vmatpush2.msra.mxu0 0.0
        %2684 = vmatprep.subr.mxu0 0.0
        %2685 = vmatpush2.msra.mxu0 0.0
        %2686 = vmatprep.subr.mxu0 0.0
        %2687 = vmatpush2.msra.mxu0 0.0
        %2688 = vmatprep.subr.mxu0 0.0
        %2689 = vmatpush2.msra.mxu0 0.0
        %2690 = vmatprep.mubr.f32.mxu0 0.0
        %2691 = vmatmul.mubr.f32.gmra.mxu0 %v2624
        %v2692 = vpop.f32.mrf.mxu0
        %v2693 = vadd.f32 0.0, %v2692
        %v2694 = vpop.f32.mrf.mxu0
        %v2695 = vadd.f32 0.0, %v2694
        %2696 = vdwg.mxu0
        %2697 = vmatprep.subr.mxu0 0.0
        %2698 = vmatpush1.msra.mxu0 0.0
        %2699 = vmatprep.subr.mxu0 0.0
        %2700 = vmatpush1.msra.mxu0 0.0
        %2701 = vmatprep.subr.mxu0 0.0
        %2702 = vmatpush1.msra.mxu0 0.0
        %2703 = vmatprep.subr.mxu0 0.0
        %2704 = vmatpush1.msra.mxu0 0.0
        %2705 = vmatprep.subr.mxu0 0.0
        %2706 = vmatpush1.msra.mxu0 0.0
        %2707 = vmatprep.subr.mxu0 0.0
        %2708 = vmatpush1.msra.mxu0 0.0
        %2709 = vmatprep.subr.mxu0 0.0
        %2710 = vmatpush1.msra.mxu0 0.0
        %2711 = vmatprep.subr.mxu0 0.0
        %2712 = vmatpush1.msra.mxu0 0.0
        %2713 = vmatprep.subr.mxu0 0.0
        %2714 = vmatpush1.msra.mxu0 0.0
        %2715 = vmatprep.subr.mxu0 0.0
        %2716 = vmatpush1.msra.mxu0 0.0
        %2717 = vmatprep.subr.mxu0 0.0
        %2718 = vmatpush1.msra.mxu0 0.0
        %2719 = vmatprep.subr.mxu0 0.0
        %2720 = vmatpush1.msra.mxu0 0.0
        %2721 = vmatprep.subr.mxu0 0.0
        %2722 = vmatpush1.msra.mxu0 0.0
        %2723 = vmatprep.subr.mxu0 0.0
        %2724 = vmatpush1.msra.mxu0 0.0
        %2725 = vmatprep.subr.mxu0 0.0
        %2726 = vmatpush1.msra.mxu0 0.0
        %2727 = vmatprep.subr.mxu0 0.0
        %2728 = vmatpush1.msra.mxu0 %v2619
        %2729 = vmatprep.subr.mxu0 0.0
        %2730 = vmatpush2.msra.mxu0 0.0
        %2731 = vmatprep.subr.mxu0 0.0
        %2732 = vmatpush2.msra.mxu0 0.0
        %2733 = vmatprep.subr.mxu0 0.0
        %2734 = vmatpush2.msra.mxu0 0.0
        %2735 = vmatprep.subr.mxu0 0.0
        %2736 = vmatpush2.msra.mxu0 0.0
        %2737 = vmatprep.subr.mxu0 0.0
        %2738 = vmatpush2.msra.mxu0 0.0
        %2739 = vmatprep.subr.mxu0 0.0
        %2740 = vmatpush2.msra.mxu0 0.0
        %2741 = vmatprep.subr.mxu0 0.0
        %2742 = vmatpush2.msra.mxu0 0.0
        %2743 = vmatprep.subr.mxu0 0.0
        %2744 = vmatpush2.msra.mxu0 0.0
        %2745 = vmatprep.subr.mxu0 0.0
        %2746 = vmatpush2.msra.mxu0 0.0
        %2747 = vmatprep.subr.mxu0 0.0
        %2748 = vmatpush2.msra.mxu0 0.0
        %2749 = vmatprep.subr.mxu0 0.0
        %2750 = vmatpush2.msra.mxu0 0.0
        %2751 = vmatprep.subr.mxu0 0.0
        %2752 = vmatpush2.msra.mxu0 0.0
        %2753 = vmatprep.subr.mxu0 0.0
        %2754 = vmatpush2.msra.mxu0 0.0
        %2755 = vmatprep.subr.mxu0 0.0
        %2756 = vmatpush2.msra.mxu0 0.0
        %2757 = vmatprep.subr.mxu0 0.0
        %2758 = vmatpush2.msra.mxu0 0.0
        %2759 = vmatprep.subr.mxu0 0.0
        %2760 = vmatpush2.msra.mxu0 0.0
        %2761 = vmatprep.mubr.f32.mxu0 0.0
        %2762 = vmatmul.mubr.f32.gmra.mxu0 %v2624
        %v2763 = vpop.f32.mrf.mxu0
        %v2764 = vadd.f32 0.0, %v2763
        %v2765 = vpop.f32.mrf.mxu0
        %2766 = vdwg.mxu0
        %v2767 = vadd.f32 %v2604, %v2693
        %v2768 = vadd.f32 %v2605, %v2695
        %v2769 = vadd.f32 %v2606, %v2764
        %s2770 = scalar_lea.vmem %s7, 32
        %v2771 = vld [vmem:[%s2770] sm:$0xff]
        %2772 = vrot.lane.b32.xlu0 %v2133, 109
        %v2773 = vpop.permute.xlu0 %2772
        %2774 = vrot.lane.b32.xlu0 %v2134, 109
        %v2775 = vpop.permute.xlu0 %2774
        %2776 = vrot.lane.b32.xlu0 %v2135, 109
        %v2777 = vpop.permute.xlu0 %2776
        %2778 = vrot.lane.b32.xlu0 %v2136, 109
        %v2779 = vpop.permute.xlu0 %2778
        %v2780 = vsel %vm1148, %v2773, %v2775
        %v2781 = vsel %vm1148, %v2775, %v2777
        %v2782 = vsel %vm1148, %v2777, %v2779
        %v2787 = vsel %vm2155, %v2771, 0
        %2789 = vmatprep.subr.mxu0 0.0
        %2790 = vmatpush1.msra.mxu0 0.0
        %2791 = vmatprep.subr.mxu0 0.0
        %2792 = vmatpush1.msra.mxu0 0.0
        %2793 = vmatprep.subr.mxu0 0.0
        %2794 = vmatpush1.msra.mxu0 0.0
        %2795 = vmatprep.subr.mxu0 0.0
        %2796 = vmatpush1.msra.mxu0 0.0
        %2797 = vmatprep.subr.mxu0 0.0
        %2798 = vmatpush1.msra.mxu0 0.0
        %2799 = vmatprep.subr.mxu0 0.0
        %2800 = vmatpush1.msra.mxu0 0.0
        %2801 = vmatprep.subr.mxu0 0.0
        %2802 = vmatpush1.msra.mxu0 0.0
        %2803 = vmatprep.subr.mxu0 0.0
        %2804 = vmatpush1.msra.mxu0 0.0
        %2805 = vmatprep.subr.mxu0 0.0
        %2806 = vmatpush1.msra.mxu0 0.0
        %2807 = vmatprep.subr.mxu0 0.0
        %2808 = vmatpush1.msra.mxu0 0.0
        %2809 = vmatprep.subr.mxu0 0.0
        %2810 = vmatpush1.msra.mxu0 0.0
        %2811 = vmatprep.subr.mxu0 0.0
        %2812 = vmatpush1.msra.mxu0 0.0
        %2813 = vmatprep.subr.mxu0 0.0
        %2814 = vmatpush1.msra.mxu0 0.0
        %2815 = vmatprep.subr.mxu0 0.0
        %2816 = vmatpush1.msra.mxu0 0.0
        %2817 = vmatprep.subr.mxu0 0.0
        %2818 = vmatpush1.msra.mxu0 0.0
        %2819 = vmatprep.subr.mxu0 %v2781
        %2820 = vmatpush1.msra.mxu0 %v2780
        %2821 = vmatprep.subr.mxu0 0.0
        %2822 = vmatpush2.msra.mxu0 0.0
        %2823 = vmatprep.subr.mxu0 0.0
        %2824 = vmatpush2.msra.mxu0 0.0
        %2825 = vmatprep.subr.mxu0 0.0
        %2826 = vmatpush2.msra.mxu0 0.0
        %2827 = vmatprep.subr.mxu0 0.0
        %2828 = vmatpush2.msra.mxu0 0.0
        %2829 = vmatprep.subr.mxu0 0.0
        %2830 = vmatpush2.msra.mxu0 0.0
        %2831 = vmatprep.subr.mxu0 0.0
        %2832 = vmatpush2.msra.mxu0 0.0
        %2833 = vmatprep.subr.mxu0 0.0
        %2834 = vmatpush2.msra.mxu0 0.0
        %2835 = vmatprep.subr.mxu0 0.0
        %2836 = vmatpush2.msra.mxu0 0.0
        %2837 = vmatprep.subr.mxu0 0.0
        %2838 = vmatpush2.msra.mxu0 0.0
        %2839 = vmatprep.subr.mxu0 0.0
        %2840 = vmatpush2.msra.mxu0 0.0
        %2841 = vmatprep.subr.mxu0 0.0
        %2842 = vmatpush2.msra.mxu0 0.0
        %2843 = vmatprep.subr.mxu0 0.0
        %2844 = vmatpush2.msra.mxu0 0.0
        %2845 = vmatprep.subr.mxu0 0.0
        %2846 = vmatpush2.msra.mxu0 0.0
        %2847 = vmatprep.subr.mxu0 0.0
        %2848 = vmatpush2.msra.mxu0 0.0
        %2849 = vmatprep.subr.mxu0 0.0
        %2850 = vmatpush2.msra.mxu0 0.0
        %2851 = vmatprep.subr.mxu0 0.0
        %2852 = vmatpush2.msra.mxu0 0.0
        %2853 = vmatprep.mubr.f32.mxu0 0.0
        %2854 = vmatmul.mubr.f32.gmra.mxu0 %v2787
        %v2855 = vpop.f32.mrf.mxu0
        %v2856 = vadd.f32 0.0, %v2855
        %v2857 = vpop.f32.mrf.mxu0
        %v2858 = vadd.f32 0.0, %v2857
        %2859 = vdwg.mxu0
        %2860 = vmatprep.subr.mxu0 0.0
        %2861 = vmatpush1.msra.mxu0 0.0
        %2862 = vmatprep.subr.mxu0 0.0
        %2863 = vmatpush1.msra.mxu0 0.0
        %2864 = vmatprep.subr.mxu0 0.0
        %2865 = vmatpush1.msra.mxu0 0.0
        %2866 = vmatprep.subr.mxu0 0.0
        %2867 = vmatpush1.msra.mxu0 0.0
        %2868 = vmatprep.subr.mxu0 0.0
        %2869 = vmatpush1.msra.mxu0 0.0
        %2870 = vmatprep.subr.mxu0 0.0
        %2871 = vmatpush1.msra.mxu0 0.0
        %2872 = vmatprep.subr.mxu0 0.0
        %2873 = vmatpush1.msra.mxu0 0.0
        %2874 = vmatprep.subr.mxu0 0.0
        %2875 = vmatpush1.msra.mxu0 0.0
        %2876 = vmatprep.subr.mxu0 0.0
        %2877 = vmatpush1.msra.mxu0 0.0
        %2878 = vmatprep.subr.mxu0 0.0
        %2879 = vmatpush1.msra.mxu0 0.0
        %2880 = vmatprep.subr.mxu0 0.0
        %2881 = vmatpush1.msra.mxu0 0.0
        %2882 = vmatprep.subr.mxu0 0.0
        %2883 = vmatpush1.msra.mxu0 0.0
        %2884 = vmatprep.subr.mxu0 0.0
        %2885 = vmatpush1.msra.mxu0 0.0
        %2886 = vmatprep.subr.mxu0 0.0
        %2887 = vmatpush1.msra.mxu0 0.0
        %2888 = vmatprep.subr.mxu0 0.0
        %2889 = vmatpush1.msra.mxu0 0.0
        %2890 = vmatprep.subr.mxu0 0.0
        %2891 = vmatpush1.msra.mxu0 %v2782
        %2892 = vmatprep.subr.mxu0 0.0
        %2893 = vmatpush2.msra.mxu0 0.0
        %2894 = vmatprep.subr.mxu0 0.0
        %2895 = vmatpush2.msra.mxu0 0.0
        %2896 = vmatprep.subr.mxu0 0.0
        %2897 = vmatpush2.msra.mxu0 0.0
        %2898 = vmatprep.subr.mxu0 0.0
        %2899 = vmatpush2.msra.mxu0 0.0
        %2900 = vmatprep.subr.mxu0 0.0
        %2901 = vmatpush2.msra.mxu0 0.0
        %2902 = vmatprep.subr.mxu0 0.0
        %2903 = vmatpush2.msra.mxu0 0.0
        %2904 = vmatprep.subr.mxu0 0.0
        %2905 = vmatpush2.msra.mxu0 0.0
        %2906 = vmatprep.subr.mxu0 0.0
        %2907 = vmatpush2.msra.mxu0 0.0
        %2908 = vmatprep.subr.mxu0 0.0
        %2909 = vmatpush2.msra.mxu0 0.0
        %2910 = vmatprep.subr.mxu0 0.0
        %2911 = vmatpush2.msra.mxu0 0.0
        %2912 = vmatprep.subr.mxu0 0.0
        %2913 = vmatpush2.msra.mxu0 0.0
        %2914 = vmatprep.subr.mxu0 0.0
        %2915 = vmatpush2.msra.mxu0 0.0
        %2916 = vmatprep.subr.mxu0 0.0
        %2917 = vmatpush2.msra.mxu0 0.0
        %2918 = vmatprep.subr.mxu0 0.0
        %2919 = vmatpush2.msra.mxu0 0.0
        %2920 = vmatprep.subr.mxu0 0.0
        %2921 = vmatpush2.msra.mxu0 0.0
        %2922 = vmatprep.subr.mxu0 0.0
        %2923 = vmatpush2.msra.mxu0 0.0
        %2924 = vmatprep.mubr.f32.mxu0 0.0
        %2925 = vmatmul.mubr.f32.gmra.mxu0 %v2787
        %v2926 = vpop.f32.mrf.mxu0
        %v2927 = vadd.f32 0.0, %v2926
        %v2928 = vpop.f32.mrf.mxu0
        %2929 = vdwg.mxu0
        %v2930 = vadd.f32 %v2767, %v2856
        %v2931 = vadd.f32 %v2768, %v2858
        %v2932 = vadd.f32 %v2769, %v2927
        %s2933 = scalar_lea.vmem %s7, 40
        %v2934 = vld [vmem:[%s2933] sm:$0xff]
        %2935 = vrot.lane.b32.xlu0 %v2133, 108
        %v2936 = vpop.permute.xlu0 %2935
        %2937 = vrot.lane.b32.xlu0 %v2134, 108
        %v2938 = vpop.permute.xlu0 %2937
        %2939 = vrot.lane.b32.xlu0 %v2135, 108
        %v2940 = vpop.permute.xlu0 %2939
        %2941 = vrot.lane.b32.xlu0 %v2136, 108
        %v2942 = vpop.permute.xlu0 %2941
        %v2943 = vsel %vm1321, %v2936, %v2938
        %v2944 = vsel %vm1321, %v2938, %v2940
        %v2945 = vsel %vm1321, %v2940, %v2942
        %v2950 = vsel %vm2155, %v2934, 0
        %2952 = vmatprep.subr.mxu0 0.0
        %2953 = vmatpush1.msra.mxu0 0.0
        %2954 = vmatprep.subr.mxu0 0.0
        %2955 = vmatpush1.msra.mxu0 0.0
        %2956 = vmatprep.subr.mxu0 0.0
        %2957 = vmatpush1.msra.mxu0 0.0
        %2958 = vmatprep.subr.mxu0 0.0
        %2959 = vmatpush1.msra.mxu0 0.0
        %2960 = vmatprep.subr.mxu0 0.0
        %2961 = vmatpush1.msra.mxu0 0.0
        %2962 = vmatprep.subr.mxu0 0.0
        %2963 = vmatpush1.msra.mxu0 0.0
        %2964 = vmatprep.subr.mxu0 0.0
        %2965 = vmatpush1.msra.mxu0 0.0
        %2966 = vmatprep.subr.mxu0 0.0
        %2967 = vmatpush1.msra.mxu0 0.0
        %2968 = vmatprep.subr.mxu0 0.0
        %2969 = vmatpush1.msra.mxu0 0.0
        %2970 = vmatprep.subr.mxu0 0.0
        %2971 = vmatpush1.msra.mxu0 0.0
        %2972 = vmatprep.subr.mxu0 0.0
        %2973 = vmatpush1.msra.mxu0 0.0
        %2974 = vmatprep.subr.mxu0 0.0
        %2975 = vmatpush1.msra.mxu0 0.0
        %2976 = vmatprep.subr.mxu0 0.0
        %2977 = vmatpush1.msra.mxu0 0.0
        %2978 = vmatprep.subr.mxu0 0.0
        %2979 = vmatpush1.msra.mxu0 0.0
        %2980 = vmatprep.subr.mxu0 0.0
        %2981 = vmatpush1.msra.mxu0 0.0
        %2982 = vmatprep.subr.mxu0 %v2944
        %2983 = vmatpush1.msra.mxu0 %v2943
        %2984 = vmatprep.subr.mxu0 0.0
        %2985 = vmatpush2.msra.mxu0 0.0
        %2986 = vmatprep.subr.mxu0 0.0
        %2987 = vmatpush2.msra.mxu0 0.0
        %2988 = vmatprep.subr.mxu0 0.0
        %2989 = vmatpush2.msra.mxu0 0.0
        %2990 = vmatprep.subr.mxu0 0.0
        %2991 = vmatpush2.msra.mxu0 0.0
        %2992 = vmatprep.subr.mxu0 0.0
        %2993 = vmatpush2.msra.mxu0 0.0
        %2994 = vmatprep.subr.mxu0 0.0
        %2995 = vmatpush2.msra.mxu0 0.0
        %2996 = vmatprep.subr.mxu0 0.0
        %2997 = vmatpush2.msra.mxu0 0.0
        %2998 = vmatprep.subr.mxu0 0.0
        %2999 = vmatpush2.msra.mxu0 0.0
        %3000 = vmatprep.subr.mxu0 0.0
        %3001 = vmatpush2.msra.mxu0 0.0
        %3002 = vmatprep.subr.mxu0 0.0
        %3003 = vmatpush2.msra.mxu0 0.0
        %3004 = vmatprep.subr.mxu0 0.0
        %3005 = vmatpush2.msra.mxu0 0.0
        %3006 = vmatprep.subr.mxu0 0.0
        %3007 = vmatpush2.msra.mxu0 0.0
        %3008 = vmatprep.subr.mxu0 0.0
        %3009 = vmatpush2.msra.mxu0 0.0
        %3010 = vmatprep.subr.mxu0 0.0
        %3011 = vmatpush2.msra.mxu0 0.0
        %3012 = vmatprep.subr.mxu0 0.0
        %3013 = vmatpush2.msra.mxu0 0.0
        %3014 = vmatprep.subr.mxu0 0.0
        %3015 = vmatpush2.msra.mxu0 0.0
        %3016 = vmatprep.mubr.f32.mxu0 0.0
        %3017 = vmatmul.mubr.f32.gmra.mxu0 %v2950
        %v3018 = vpop.f32.mrf.mxu0
        %v3019 = vadd.f32 0.0, %v3018
        %v3020 = vpop.f32.mrf.mxu0
        %v3021 = vadd.f32 0.0, %v3020
        %3022 = vdwg.mxu0
        %3023 = vmatprep.subr.mxu0 0.0
        %3024 = vmatpush1.msra.mxu0 0.0
        %3025 = vmatprep.subr.mxu0 0.0
        %3026 = vmatpush1.msra.mxu0 0.0
        %3027 = vmatprep.subr.mxu0 0.0
        %3028 = vmatpush1.msra.mxu0 0.0
        %3029 = vmatprep.subr.mxu0 0.0
        %3030 = vmatpush1.msra.mxu0 0.0
        %3031 = vmatprep.subr.mxu0 0.0
        %3032 = vmatpush1.msra.mxu0 0.0
        %3033 = vmatprep.subr.mxu0 0.0
        %3034 = vmatpush1.msra.mxu0 0.0
        %3035 = vmatprep.subr.mxu0 0.0
        %3036 = vmatpush1.msra.mxu0 0.0
        %3037 = vmatprep.subr.mxu0 0.0
        %3038 = vmatpush1.msra.mxu0 0.0
        %3039 = vmatprep.subr.mxu0 0.0
        %3040 = vmatpush1.msra.mxu0 0.0
        %3041 = vmatprep.subr.mxu0 0.0
        %3042 = vmatpush1.msra.mxu0 0.0
        %3043 = vmatprep.subr.mxu0 0.0
        %3044 = vmatpush1.msra.mxu0 0.0
        %3045 = vmatprep.subr.mxu0 0.0
        %3046 = vmatpush1.msra.mxu0 0.0
        %3047 = vmatprep.subr.mxu0 0.0
        %3048 = vmatpush1.msra.mxu0 0.0
        %3049 = vmatprep.subr.mxu0 0.0
        %3050 = vmatpush1.msra.mxu0 0.0
        %3051 = vmatprep.subr.mxu0 0.0
        %3052 = vmatpush1.msra.mxu0 0.0
        %3053 = vmatprep.subr.mxu0 0.0
        %3054 = vmatpush1.msra.mxu0 %v2945
        %3055 = vmatprep.subr.mxu0 0.0
        %3056 = vmatpush2.msra.mxu0 0.0
        %3057 = vmatprep.subr.mxu0 0.0
        %3058 = vmatpush2.msra.mxu0 0.0
        %3059 = vmatprep.subr.mxu0 0.0
        %3060 = vmatpush2.msra.mxu0 0.0
        %3061 = vmatprep.subr.mxu0 0.0
        %3062 = vmatpush2.msra.mxu0 0.0
        %3063 = vmatprep.subr.mxu0 0.0
        %3064 = vmatpush2.msra.mxu0 0.0
        %3065 = vmatprep.subr.mxu0 0.0
        %3066 = vmatpush2.msra.mxu0 0.0
        %3067 = vmatprep.subr.mxu0 0.0
        %3068 = vmatpush2.msra.mxu0 0.0
        %3069 = vmatprep.subr.mxu0 0.0
        %3070 = vmatpush2.msra.mxu0 0.0
        %3071 = vmatprep.subr.mxu0 0.0
        %3072 = vmatpush2.msra.mxu0 0.0
        %3073 = vmatprep.subr.mxu0 0.0
        %3074 = vmatpush2.msra.mxu0 0.0
        %3075 = vmatprep.subr.mxu0 0.0
        %3076 = vmatpush2.msra.mxu0 0.0
        %3077 = vmatprep.subr.mxu0 0.0
        %3078 = vmatpush2.msra.mxu0 0.0
        %3079 = vmatprep.subr.mxu0 0.0
        %3080 = vmatpush2.msra.mxu0 0.0
        %3081 = vmatprep.subr.mxu0 0.0
        %3082 = vmatpush2.msra.mxu0 0.0
        %3083 = vmatprep.subr.mxu0 0.0
        %3084 = vmatpush2.msra.mxu0 0.0
        %3085 = vmatprep.subr.mxu0 0.0
        %3086 = vmatpush2.msra.mxu0 0.0
        %3087 = vmatprep.mubr.f32.mxu0 0.0
        %3088 = vmatmul.mubr.f32.gmra.mxu0 %v2950
        %v3089 = vpop.f32.mrf.mxu0
        %v3090 = vadd.f32 0.0, %v3089
        %v3091 = vpop.f32.mrf.mxu0
        %3092 = vdwg.mxu0
        %v3093 = vadd.f32 %v2930, %v3019
        %v3094 = vadd.f32 %v2931, %v3021
        %v3095 = vadd.f32 %v2932, %v3090
        %s3096 = scalar_lea.vmem %s7, 48
        %v3097 = vld [vmem:[%s3096] sm:$0xff]
        %3098 = vrot.lane.b32.xlu0 %v2133, 92
        %v3099 = vpop.permute.xlu0 %3098
        %3100 = vrot.lane.b32.xlu0 %v2134, 92
        %v3101 = vpop.permute.xlu0 %3100
        %3102 = vrot.lane.b32.xlu0 %v2135, 92
        %v3103 = vpop.permute.xlu0 %3102
        %3104 = vrot.lane.b32.xlu0 %v2136, 92
        %v3105 = vpop.permute.xlu0 %3104
        %v3106 = vsel %vm1494, %v3099, %v3101
        %v3107 = vsel %vm1494, %v3101, %v3103
        %v3108 = vsel %vm1494, %v3103, %v3105
        %v3113 = vsel %vm2155, %v3097, 0
        %3115 = vmatprep.subr.mxu0 0.0
        %3116 = vmatpush1.msra.mxu0 0.0
        %3117 = vmatprep.subr.mxu0 0.0
        %3118 = vmatpush1.msra.mxu0 0.0
        %3119 = vmatprep.subr.mxu0 0.0
        %3120 = vmatpush1.msra.mxu0 0.0
        %3121 = vmatprep.subr.mxu0 0.0
        %3122 = vmatpush1.msra.mxu0 0.0
        %3123 = vmatprep.subr.mxu0 0.0
        %3124 = vmatpush1.msra.mxu0 0.0
        %3125 = vmatprep.subr.mxu0 0.0
        %3126 = vmatpush1.msra.mxu0 0.0
        %3127 = vmatprep.subr.mxu0 0.0
        %3128 = vmatpush1.msra.mxu0 0.0
        %3129 = vmatprep.subr.mxu0 0.0
        %3130 = vmatpush1.msra.mxu0 0.0
        %3131 = vmatprep.subr.mxu0 0.0
        %3132 = vmatpush1.msra.mxu0 0.0
        %3133 = vmatprep.subr.mxu0 0.0
        %3134 = vmatpush1.msra.mxu0 0.0
        %3135 = vmatprep.subr.mxu0 0.0
        %3136 = vmatpush1.msra.mxu0 0.0
        %3137 = vmatprep.subr.mxu0 0.0
        %3138 = vmatpush1.msra.mxu0 0.0
        %3139 = vmatprep.subr.mxu0 0.0
        %3140 = vmatpush1.msra.mxu0 0.0
        %3141 = vmatprep.subr.mxu0 0.0
        %3142 = vmatpush1.msra.mxu0 0.0
        %3143 = vmatprep.subr.mxu0 0.0
        %3144 = vmatpush1.msra.mxu0 0.0
        %3145 = vmatprep.subr.mxu0 %v3107
        %3146 = vmatpush1.msra.mxu0 %v3106
        %3147 = vmatprep.subr.mxu0 0.0
        %3148 = vmatpush2.msra.mxu0 0.0
        %3149 = vmatprep.subr.mxu0 0.0
        %3150 = vmatpush2.msra.mxu0 0.0
        %3151 = vmatprep.subr.mxu0 0.0
        %3152 = vmatpush2.msra.mxu0 0.0
        %3153 = vmatprep.subr.mxu0 0.0
        %3154 = vmatpush2.msra.mxu0 0.0
        %3155 = vmatprep.subr.mxu0 0.0
        %3156 = vmatpush2.msra.mxu0 0.0
        %3157 = vmatprep.subr.mxu0 0.0
        %3158 = vmatpush2.msra.mxu0 0.0
        %3159 = vmatprep.subr.mxu0 0.0
        %3160 = vmatpush2.msra.mxu0 0.0
        %3161 = vmatprep.subr.mxu0 0.0
        %3162 = vmatpush2.msra.mxu0 0.0
        %3163 = vmatprep.subr.mxu0 0.0
        %3164 = vmatpush2.msra.mxu0 0.0
        %3165 = vmatprep.subr.mxu0 0.0
        %3166 = vmatpush2.msra.mxu0 0.0
        %3167 = vmatprep.subr.mxu0 0.0
        %3168 = vmatpush2.msra.mxu0 0.0
        %3169 = vmatprep.subr.mxu0 0.0
        %3170 = vmatpush2.msra.mxu0 0.0
        %3171 = vmatprep.subr.mxu0 0.0
        %3172 = vmatpush2.msra.mxu0 0.0
        %3173 = vmatprep.subr.mxu0 0.0
        %3174 = vmatpush2.msra.mxu0 0.0
        %3175 = vmatprep.subr.mxu0 0.0
        %3176 = vmatpush2.msra.mxu0 0.0
        %3177 = vmatprep.subr.mxu0 0.0
        %3178 = vmatpush2.msra.mxu0 0.0
        %3179 = vmatprep.mubr.f32.mxu0 0.0
        %3180 = vmatmul.mubr.f32.gmra.mxu0 %v3113
        %v3181 = vpop.f32.mrf.mxu0
        %v3182 = vadd.f32 0.0, %v3181
        %v3183 = vpop.f32.mrf.mxu0
        %v3184 = vadd.f32 0.0, %v3183
        %3185 = vdwg.mxu0
        %3186 = vmatprep.subr.mxu0 0.0
        %3187 = vmatpush1.msra.mxu0 0.0
        %3188 = vmatprep.subr.mxu0 0.0
        %3189 = vmatpush1.msra.mxu0 0.0
        %3190 = vmatprep.subr.mxu0 0.0
        %3191 = vmatpush1.msra.mxu0 0.0
        %3192 = vmatprep.subr.mxu0 0.0
        %3193 = vmatpush1.msra.mxu0 0.0
        %3194 = vmatprep.subr.mxu0 0.0
        %3195 = vmatpush1.msra.mxu0 0.0
        %3196 = vmatprep.subr.mxu0 0.0
        %3197 = vmatpush1.msra.mxu0 0.0
        %3198 = vmatprep.subr.mxu0 0.0
        %3199 = vmatpush1.msra.mxu0 0.0
        %3200 = vmatprep.subr.mxu0 0.0
        %3201 = vmatpush1.msra.mxu0 0.0
        %3202 = vmatprep.subr.mxu0 0.0
        %3203 = vmatpush1.msra.mxu0 0.0
        %3204 = vmatprep.subr.mxu0 0.0
        %3205 = vmatpush1.msra.mxu0 0.0
        %3206 = vmatprep.subr.mxu0 0.0
        %3207 = vmatpush1.msra.mxu0 0.0
        %3208 = vmatprep.subr.mxu0 0.0
        %3209 = vmatpush1.msra.mxu0 0.0
        %3210 = vmatprep.subr.mxu0 0.0
        %3211 = vmatpush1.msra.mxu0 0.0
        %3212 = vmatprep.subr.mxu0 0.0
        %3213 = vmatpush1.msra.mxu0 0.0
        %3214 = vmatprep.subr.mxu0 0.0
        %3215 = vmatpush1.msra.mxu0 0.0
        %3216 = vmatprep.subr.mxu0 0.0
        %3217 = vmatpush1.msra.mxu0 %v3108
        %3218 = vmatprep.subr.mxu0 0.0
        %3219 = vmatpush2.msra.mxu0 0.0
        %3220 = vmatprep.subr.mxu0 0.0
        %3221 = vmatpush2.msra.mxu0 0.0
        %3222 = vmatprep.subr.mxu0 0.0
        %3223 = vmatpush2.msra.mxu0 0.0
        %3224 = vmatprep.subr.mxu0 0.0
        %3225 = vmatpush2.msra.mxu0 0.0
        %3226 = vmatprep.subr.mxu0 0.0
        %3227 = vmatpush2.msra.mxu0 0.0
        %3228 = vmatprep.subr.mxu0 0.0
        %3229 = vmatpush2.msra.mxu0 0.0
        %3230 = vmatprep.subr.mxu0 0.0
        %3231 = vmatpush2.msra.mxu0 0.0
        %3232 = vmatprep.subr.mxu0 0.0
        %3233 = vmatpush2.msra.mxu0 0.0
        %3234 = vmatprep.subr.mxu0 0.0
        %3235 = vmatpush2.msra.mxu0 0.0
        %3236 = vmatprep.subr.mxu0 0.0
        %3237 = vmatpush2.msra.mxu0 0.0
        %3238 = vmatprep.subr.mxu0 0.0
        %3239 = vmatpush2.msra.mxu0 0.0
        %3240 = vmatprep.subr.mxu0 0.0
        %3241 = vmatpush2.msra.mxu0 0.0
        %3242 = vmatprep.subr.mxu0 0.0
        %3243 = vmatpush2.msra.mxu0 0.0
        %3244 = vmatprep.subr.mxu0 0.0
        %3245 = vmatpush2.msra.mxu0 0.0
        %3246 = vmatprep.subr.mxu0 0.0
        %3247 = vmatpush2.msra.mxu0 0.0
        %3248 = vmatprep.subr.mxu0 0.0
        %3249 = vmatpush2.msra.mxu0 0.0
        %3250 = vmatprep.mubr.f32.mxu0 0.0
        %3251 = vmatmul.mubr.f32.gmra.mxu0 %v3113
        %v3252 = vpop.f32.mrf.mxu0
        %v3253 = vadd.f32 0.0, %v3252
        %v3254 = vpop.f32.mrf.mxu0
        %3255 = vdwg.mxu0
        %v3256 = vadd.f32 %v3093, %v3182
        %v3257 = vadd.f32 %v3094, %v3184
        %v3258 = vadd.f32 %v3095, %v3253
        %s3259 = scalar_lea.vmem %s7, 56
        %v3260 = vld [vmem:[%s3259] sm:$0xff]
        %3261 = vrot.lane.b32.xlu0 %v2133, 91
        %v3262 = vpop.permute.xlu0 %3261
        %3263 = vrot.lane.b32.xlu0 %v2134, 91
        %v3264 = vpop.permute.xlu0 %3263
        %3265 = vrot.lane.b32.xlu0 %v2135, 91
        %v3266 = vpop.permute.xlu0 %3265
        %3267 = vrot.lane.b32.xlu0 %v2136, 91
        %v3268 = vpop.permute.xlu0 %3267
        %v3269 = vsel %vm1667, %v3262, %v3264
        %v3270 = vsel %vm1667, %v3264, %v3266
        %v3271 = vsel %vm1667, %v3266, %v3268
        %v3276 = vsel %vm2155, %v3260, 0
        %3278 = vmatprep.subr.mxu0 0.0
        %3279 = vmatpush1.msra.mxu0 0.0
        %3280 = vmatprep.subr.mxu0 0.0
        %3281 = vmatpush1.msra.mxu0 0.0
        %3282 = vmatprep.subr.mxu0 0.0
        %3283 = vmatpush1.msra.mxu0 0.0
        %3284 = vmatprep.subr.mxu0 0.0
        %3285 = vmatpush1.msra.mxu0 0.0
        %3286 = vmatprep.subr.mxu0 0.0
        %3287 = vmatpush1.msra.mxu0 0.0
        %3288 = vmatprep.subr.mxu0 0.0
        %3289 = vmatpush1.msra.mxu0 0.0
        %3290 = vmatprep.subr.mxu0 0.0
        %3291 = vmatpush1.msra.mxu0 0.0
        %3292 = vmatprep.subr.mxu0 0.0
        %3293 = vmatpush1.msra.mxu0 0.0
        %3294 = vmatprep.subr.mxu0 0.0
        %3295 = vmatpush1.msra.mxu0 0.0
        %3296 = vmatprep.subr.mxu0 0.0
        %3297 = vmatpush1.msra.mxu0 0.0
        %3298 = vmatprep.subr.mxu0 0.0
        %3299 = vmatpush1.msra.mxu0 0.0
        %3300 = vmatprep.subr.mxu0 0.0
        %3301 = vmatpush1.msra.mxu0 0.0
        %3302 = vmatprep.subr.mxu0 0.0
        %3303 = vmatpush1.msra.mxu0 0.0
        %3304 = vmatprep.subr.mxu0 0.0
        %3305 = vmatpush1.msra.mxu0 0.0
        %3306 = vmatprep.subr.mxu0 0.0
        %3307 = vmatpush1.msra.mxu0 0.0
        %3308 = vmatprep.subr.mxu0 %v3270
        %3309 = vmatpush1.msra.mxu0 %v3269
        %3310 = vmatprep.subr.mxu0 0.0
        %3311 = vmatpush2.msra.mxu0 0.0
        %3312 = vmatprep.subr.mxu0 0.0
        %3313 = vmatpush2.msra.mxu0 0.0
        %3314 = vmatprep.subr.mxu0 0.0
        %3315 = vmatpush2.msra.mxu0 0.0
        %3316 = vmatprep.subr.mxu0 0.0
        %3317 = vmatpush2.msra.mxu0 0.0
        %3318 = vmatprep.subr.mxu0 0.0
        %3319 = vmatpush2.msra.mxu0 0.0
        %3320 = vmatprep.subr.mxu0 0.0
        %3321 = vmatpush2.msra.mxu0 0.0
        %3322 = vmatprep.subr.mxu0 0.0
        %3323 = vmatpush2.msra.mxu0 0.0
        %3324 = vmatprep.subr.mxu0 0.0
        %3325 = vmatpush2.msra.mxu0 0.0
        %3326 = vmatprep.subr.mxu0 0.0
        %3327 = vmatpush2.msra.mxu0 0.0
        %3328 = vmatprep.subr.mxu0 0.0
        %3329 = vmatpush2.msra.mxu0 0.0
        %3330 = vmatprep.subr.mxu0 0.0
        %3331 = vmatpush2.msra.mxu0 0.0
        %3332 = vmatprep.subr.mxu0 0.0
        %3333 = vmatpush2.msra.mxu0 0.0
        %3334 = vmatprep.subr.mxu0 0.0
        %3335 = vmatpush2.msra.mxu0 0.0
        %3336 = vmatprep.subr.mxu0 0.0
        %3337 = vmatpush2.msra.mxu0 0.0
        %3338 = vmatprep.subr.mxu0 0.0
        %3339 = vmatpush2.msra.mxu0 0.0
        %3340 = vmatprep.subr.mxu0 0.0
        %3341 = vmatpush2.msra.mxu0 0.0
        %3342 = vmatprep.mubr.f32.mxu0 0.0
        %3343 = vmatmul.mubr.f32.gmra.mxu0 %v3276
        %v3344 = vpop.f32.mrf.mxu0
        %v3345 = vadd.f32 0.0, %v3344
        %v3346 = vpop.f32.mrf.mxu0
        %v3347 = vadd.f32 0.0, %v3346
        %3348 = vdwg.mxu0
        %3349 = vmatprep.subr.mxu0 0.0
        %3350 = vmatpush1.msra.mxu0 0.0
        %3351 = vmatprep.subr.mxu0 0.0
        %3352 = vmatpush1.msra.mxu0 0.0
        %3353 = vmatprep.subr.mxu0 0.0
        %3354 = vmatpush1.msra.mxu0 0.0
        %3355 = vmatprep.subr.mxu0 0.0
        %3356 = vmatpush1.msra.mxu0 0.0
        %3357 = vmatprep.subr.mxu0 0.0
        %3358 = vmatpush1.msra.mxu0 0.0
        %3359 = vmatprep.subr.mxu0 0.0
        %3360 = vmatpush1.msra.mxu0 0.0
        %3361 = vmatprep.subr.mxu0 0.0
        %3362 = vmatpush1.msra.mxu0 0.0
        %3363 = vmatprep.subr.mxu0 0.0
        %3364 = vmatpush1.msra.mxu0 0.0
        %3365 = vmatprep.subr.mxu0 0.0
        %3366 = vmatpush1.msra.mxu0 0.0
        %3367 = vmatprep.subr.mxu0 0.0
        %3368 = vmatpush1.msra.mxu0 0.0
        %3369 = vmatprep.subr.mxu0 0.0
        %3370 = vmatpush1.msra.mxu0 0.0
        %3371 = vmatprep.subr.mxu0 0.0
        %3372 = vmatpush1.msra.mxu0 0.0
        %3373 = vmatprep.subr.mxu0 0.0
        %3374 = vmatpush1.msra.mxu0 0.0
        %3375 = vmatprep.subr.mxu0 0.0
        %3376 = vmatpush1.msra.mxu0 0.0
        %3377 = vmatprep.subr.mxu0 0.0
        %3378 = vmatpush1.msra.mxu0 0.0
        %3379 = vmatprep.subr.mxu0 0.0
        %3380 = vmatpush1.msra.mxu0 %v3271
        %3381 = vmatprep.subr.mxu0 0.0
        %3382 = vmatpush2.msra.mxu0 0.0
        %3383 = vmatprep.subr.mxu0 0.0
        %3384 = vmatpush2.msra.mxu0 0.0
        %3385 = vmatprep.subr.mxu0 0.0
        %3386 = vmatpush2.msra.mxu0 0.0
        %3387 = vmatprep.subr.mxu0 0.0
        %3388 = vmatpush2.msra.mxu0 0.0
        %3389 = vmatprep.subr.mxu0 0.0
        %3390 = vmatpush2.msra.mxu0 0.0
        %3391 = vmatprep.subr.mxu0 0.0
        %3392 = vmatpush2.msra.mxu0 0.0
        %3393 = vmatprep.subr.mxu0 0.0
        %3394 = vmatpush2.msra.mxu0 0.0
        %3395 = vmatprep.subr.mxu0 0.0
        %3396 = vmatpush2.msra.mxu0 0.0
        %3397 = vmatprep.subr.mxu0 0.0
        %3398 = vmatpush2.msra.mxu0 0.0
        %3399 = vmatprep.subr.mxu0 0.0
        %3400 = vmatpush2.msra.mxu0 0.0
        %3401 = vmatprep.subr.mxu0 0.0
        %3402 = vmatpush2.msra.mxu0 0.0
        %3403 = vmatprep.subr.mxu0 0.0
        %3404 = vmatpush2.msra.mxu0 0.0
        %3405 = vmatprep.subr.mxu0 0.0
        %3406 = vmatpush2.msra.mxu0 0.0
        %3407 = vmatprep.subr.mxu0 0.0
        %3408 = vmatpush2.msra.mxu0 0.0
        %3409 = vmatprep.subr.mxu0 0.0
        %3410 = vmatpush2.msra.mxu0 0.0
        %3411 = vmatprep.subr.mxu0 0.0
        %3412 = vmatpush2.msra.mxu0 0.0
        %3413 = vmatprep.mubr.f32.mxu0 0.0
        %3414 = vmatmul.mubr.f32.gmra.mxu0 %v3276
        %v3415 = vpop.f32.mrf.mxu0
        %v3416 = vadd.f32 0.0, %v3415
        %v3417 = vpop.f32.mrf.mxu0
        %3418 = vdwg.mxu0
        %v3419 = vadd.f32 %v3256, %v3345
        %v3420 = vadd.f32 %v3257, %v3347
        %v3421 = vadd.f32 %v3258, %v3416
        %s3422 = scalar_lea.vmem %s7, 64
        %v3423 = vld [vmem:[%s3422] sm:$0xff]
        %3424 = vrot.lane.b32.xlu0 %v2133, 90
        %v3425 = vpop.permute.xlu0 %3424
        %3426 = vrot.lane.b32.xlu0 %v2134, 90
        %v3427 = vpop.permute.xlu0 %3426
        %3428 = vrot.lane.b32.xlu0 %v2135, 90
        %v3429 = vpop.permute.xlu0 %3428
        %3430 = vrot.lane.b32.xlu0 %v2136, 90
        %v3431 = vpop.permute.xlu0 %3430
        %v3432 = vsel %vm1840, %v3425, %v3427
        %v3433 = vsel %vm1840, %v3427, %v3429
        %v3434 = vsel %vm1840, %v3429, %v3431
        %v3439 = vsel %vm2155, %v3423, 0
        %3441 = vmatprep.subr.mxu0 0.0
        %3442 = vmatpush1.msra.mxu0 0.0
        %3443 = vmatprep.subr.mxu0 0.0
        %3444 = vmatpush1.msra.mxu0 0.0
        %3445 = vmatprep.subr.mxu0 0.0
        %3446 = vmatpush1.msra.mxu0 0.0
        %3447 = vmatprep.subr.mxu0 0.0
        %3448 = vmatpush1.msra.mxu0 0.0
        %3449 = vmatprep.subr.mxu0 0.0
        %3450 = vmatpush1.msra.mxu0 0.0
        %3451 = vmatprep.subr.mxu0 0.0
        %3452 = vmatpush1.msra.mxu0 0.0
        %3453 = vmatprep.subr.mxu0 0.0
        %3454 = vmatpush1.msra.mxu0 0.0
        %3455 = vmatprep.subr.mxu0 0.0
        %3456 = vmatpush1.msra.mxu0 0.0
        %3457 = vmatprep.subr.mxu0 0.0
        %3458 = vmatpush1.msra.mxu0 0.0
        %3459 = vmatprep.subr.mxu0 0.0
        %3460 = vmatpush1.msra.mxu0 0.0
        %3461 = vmatprep.subr.mxu0 0.0
        %3462 = vmatpush1.msra.mxu0 0.0
        %3463 = vmatprep.subr.mxu0 0.0
        %3464 = vmatpush1.msra.mxu0 0.0
        %3465 = vmatprep.subr.mxu0 0.0
        %3466 = vmatpush1.msra.mxu0 0.0
        %3467 = vmatprep.subr.mxu0 0.0
        %3468 = vmatpush1.msra.mxu0 0.0
        %3469 = vmatprep.subr.mxu0 0.0
        %3470 = vmatpush1.msra.mxu0 0.0
        %3471 = vmatprep.subr.mxu0 %v3433
        %3472 = vmatpush1.msra.mxu0 %v3432
        %3473 = vmatprep.subr.mxu0 0.0
        %3474 = vmatpush2.msra.mxu0 0.0
        %3475 = vmatprep.subr.mxu0 0.0
        %3476 = vmatpush2.msra.mxu0 0.0
        %3477 = vmatprep.subr.mxu0 0.0
        %3478 = vmatpush2.msra.mxu0 0.0
        %3479 = vmatprep.subr.mxu0 0.0
        %3480 = vmatpush2.msra.mxu0 0.0
        %3481 = vmatprep.subr.mxu0 0.0
        %3482 = vmatpush2.msra.mxu0 0.0
        %3483 = vmatprep.subr.mxu0 0.0
        %3484 = vmatpush2.msra.mxu0 0.0
        %3485 = vmatprep.subr.mxu0 0.0
        %3486 = vmatpush2.msra.mxu0 0.0
        %3487 = vmatprep.subr.mxu0 0.0
        %3488 = vmatpush2.msra.mxu0 0.0
        %3489 = vmatprep.subr.mxu0 0.0
        %3490 = vmatpush2.msra.mxu0 0.0
        %3491 = vmatprep.subr.mxu0 0.0
        %3492 = vmatpush2.msra.mxu0 0.0
        %3493 = vmatprep.subr.mxu0 0.0
        %3494 = vmatpush2.msra.mxu0 0.0
        %3495 = vmatprep.subr.mxu0 0.0
        %3496 = vmatpush2.msra.mxu0 0.0
        %3497 = vmatprep.subr.mxu0 0.0
        %3498 = vmatpush2.msra.mxu0 0.0
        %3499 = vmatprep.subr.mxu0 0.0
        %3500 = vmatpush2.msra.mxu0 0.0
        %3501 = vmatprep.subr.mxu0 0.0
        %3502 = vmatpush2.msra.mxu0 0.0
        %3503 = vmatprep.subr.mxu0 0.0
        %3504 = vmatpush2.msra.mxu0 0.0
        %3505 = vmatprep.mubr.f32.mxu0 0.0
        %3506 = vmatmul.mubr.f32.gmra.mxu0 %v3439
        %v3507 = vpop.f32.mrf.mxu0
        %v3508 = vadd.f32 0.0, %v3507
        %v3509 = vpop.f32.mrf.mxu0
        %v3510 = vadd.f32 0.0, %v3509
        %3511 = vdwg.mxu0
        %3512 = vmatprep.subr.mxu0 0.0
        %3513 = vmatpush1.msra.mxu0 0.0
        %3514 = vmatprep.subr.mxu0 0.0
        %3515 = vmatpush1.msra.mxu0 0.0
        %3516 = vmatprep.subr.mxu0 0.0
        %3517 = vmatpush1.msra.mxu0 0.0
        %3518 = vmatprep.subr.mxu0 0.0
        %3519 = vmatpush1.msra.mxu0 0.0
        %3520 = vmatprep.subr.mxu0 0.0
        %3521 = vmatpush1.msra.mxu0 0.0
        %3522 = vmatprep.subr.mxu0 0.0
        %3523 = vmatpush1.msra.mxu0 0.0
        %3524 = vmatprep.subr.mxu0 0.0
        %3525 = vmatpush1.msra.mxu0 0.0
        %3526 = vmatprep.subr.mxu0 0.0
        %3527 = vmatpush1.msra.mxu0 0.0
        %3528 = vmatprep.subr.mxu0 0.0
        %3529 = vmatpush1.msra.mxu0 0.0
        %3530 = vmatprep.subr.mxu0 0.0
        %3531 = vmatpush1.msra.mxu0 0.0
        %3532 = vmatprep.subr.mxu0 0.0
        %3533 = vmatpush1.msra.mxu0 0.0
        %3534 = vmatprep.subr.mxu0 0.0
        %3535 = vmatpush1.msra.mxu0 0.0
        %3536 = vmatprep.subr.mxu0 0.0
        %3537 = vmatpush1.msra.mxu0 0.0
        %3538 = vmatprep.subr.mxu0 0.0
        %3539 = vmatpush1.msra.mxu0 0.0
        %3540 = vmatprep.subr.mxu0 0.0
        %3541 = vmatpush1.msra.mxu0 0.0
        %3542 = vmatprep.subr.mxu0 0.0
        %3543 = vmatpush1.msra.mxu0 %v3434
        %3544 = vmatprep.subr.mxu0 0.0
        %3545 = vmatpush2.msra.mxu0 0.0
        %3546 = vmatprep.subr.mxu0 0.0
        %3547 = vmatpush2.msra.mxu0 0.0
        %3548 = vmatprep.subr.mxu0 0.0
        %3549 = vmatpush2.msra.mxu0 0.0
        %3550 = vmatprep.subr.mxu0 0.0
        %3551 = vmatpush2.msra.mxu0 0.0
        %3552 = vmatprep.subr.mxu0 0.0
        %3553 = vmatpush2.msra.mxu0 0.0
        %3554 = vmatprep.subr.mxu0 0.0
        %3555 = vmatpush2.msra.mxu0 0.0
        %3556 = vmatprep.subr.mxu0 0.0
        %3557 = vmatpush2.msra.mxu0 0.0
        %3558 = vmatprep.subr.mxu0 0.0
        %3559 = vmatpush2.msra.mxu0 0.0
        %3560 = vmatprep.subr.mxu0 0.0
        %3561 = vmatpush2.msra.mxu0 0.0
        %3562 = vmatprep.subr.mxu0 0.0
        %3563 = vmatpush2.msra.mxu0 0.0
        %3564 = vmatprep.subr.mxu0 0.0
        %3565 = vmatpush2.msra.mxu0 0.0
        %3566 = vmatprep.subr.mxu0 0.0
        %3567 = vmatpush2.msra.mxu0 0.0
        %3568 = vmatprep.subr.mxu0 0.0
        %3569 = vmatpush2.msra.mxu0 0.0
        %3570 = vmatprep.subr.mxu0 0.0
        %3571 = vmatpush2.msra.mxu0 0.0
        %3572 = vmatprep.subr.mxu0 0.0
        %3573 = vmatpush2.msra.mxu0 0.0
        %3574 = vmatprep.subr.mxu0 0.0
        %3575 = vmatpush2.msra.mxu0 0.0
        %3576 = vmatprep.mubr.f32.mxu0 0.0
        %3577 = vmatmul.mubr.f32.gmra.mxu0 %v3439
        %v3578 = vpop.f32.mrf.mxu0
        %v3579 = vadd.f32 0.0, %v3578
        %v3580 = vpop.f32.mrf.mxu0
        %3581 = vdwg.mxu0
        %v3582 = vadd.f32 %v3419, %v3508
        %v3583 = vadd.f32 %v3420, %v3510
        %v3584 = vadd.f32 %v3421, %v3579
        %v3585 = vld [vmem:[%s8] sm:$0xff]
        %3587 = vset.pattern.permute.xlu0 0
        %3588 = vperm.xlu0 %3587, %v3585
        %v3589 = vpop.permute.xlu0 %3588
        %v3591 = vadd.f32 %v3582, %v3589
        %v3592 = vadd.f32 %v3583, %v3589
        %v3593 = vadd.f32 %v3584, %v3589
        %v3594 = vld [vmem:[%s9] sm:$0xff]
        %v3595 = vld [vmem:[%s10] sm:$0xff]
        %v3596 = vmul.f32 %v3591, %v2012
        %v3597 = vmul.f32 %v3592, %v2016
        %v3598 = vmul.f32 %v3593, %v2020
        %v3599 = vadd.f32 %v3596, %v3597
        %v3600 = vadd.f32 %v3599, %v3598
        %3601 = vadd.xlane.f32.xlu0 %v3600
        %v3602 = vpop.xlane.xlu0 %3601
        %v3603 = vadd.f32 %v3602, 0.0
        %v3604 = vmul.f32 %v3603, %v2032
        %v3605 = vsub.f32 %v3591, %v3604
        %v3606 = vsub.f32 %v3592, %v3604
        %v3607 = vsub.f32 %v3593, %v3604
        %v3608 = vmul.f32 %v3605, %v2012
        %v3609 = vmul.f32 %v3606, %v2016
        %v3610 = vmul.f32 %v3607, %v2020
        %v3611 = vmul.f32 %v3608, %v3608
        %v3612 = vmul.f32 %v3609, %v3609
        %v3613 = vmul.f32 %v3610, %v3610
        %v3614 = vadd.f32 %v3611, %v3612
        %v3615 = vadd.f32 %v3614, %v3613
        %3616 = vadd.xlane.f32.xlu0 %v3615
        %v3617 = vpop.xlane.xlu0 %3616
        %v3618 = vadd.f32 %v3617, 0.0
        %v3619 = vmul.f32 %v3618, %v2032
        %v3620 = vadd.f32 %v3619, 1e-05
        %v3621 = vrsqrt.pop %v3620
        %v3622 = vmul.f32 %v3605, %v3621
        %v3623 = vmul.f32 %v3606, %v3621
        %v3624 = vmul.f32 %v3607, %v3621
        %3626 = vset.pattern.permute.xlu0 0
        %3627 = vperm.xlu0 %3626, %v3594
        %v3628 = vpop.permute.xlu0 %3627
        %v3630 = vmul.f32 %v3622, %v3628
        %v3631 = vmul.f32 %v3623, %v3628
        %v3632 = vmul.f32 %v3624, %v3628
        %3634 = vset.pattern.permute.xlu0 0
        %3635 = vperm.xlu0 %3634, %v3595
        %v3636 = vpop.permute.xlu0 %3635
        %v3638 = vadd.f32 %v3630, %v3636
        %v3639 = vadd.f32 %v3631, %v3636
        %v3640 = vadd.f32 %v3632, %v3636
        %v3641 = vxor.u32 %v3638, 2147483648
        %v3642 = vxor.u32 %v3639, 2147483648
        %v3643 = vxor.u32 %v3640, 2147483648
        %v3644 = vmul.f32 %v3641, 1.442695
        %v3645 = vpow.pop %v3644
        %v3646 = vmul.f32 %v3642, 1.442695
        %v3647 = vpow.pop %v3646
        %v3648 = vmul.f32 %v3643, 1.442695
        %v3649 = vpow.pop %v3648
        %v3650 = vadd.f32 %v3645, 1.0
        %v3651 = vadd.f32 %v3647, 1.0
        %v3652 = vadd.f32 %v3649, 1.0
        %v3653 = vrcp.pop %v3650
        %v3654 = vmul.f32 1.0, %v3653
        %v3655 = vrcp.pop %v3651
        %v3656 = vmul.f32 1.0, %v3655
        %v3657 = vrcp.pop %v3652
        %v3658 = vmul.f32 1.0, %v3657
        %v3659 = vmul.f32 %v3638, %v3654
        %v3660 = vmul.f32 %v3639, %v3656
        %v3661 = vmul.f32 %v3640, %v3658
        %v3662 = vld [vmem:[%s11] sm:$0xff]
        %v3663 = vld [vmem:[%s451] sm:$0xff]
        %v3664 = vld [vmem:[%s451 + $0x8] sm:$0xff]
        %v3665 = vld [vmem:[%s12] sm:$0xff]
        %3667 = vset.pattern.permute.xlu0 0
        %3668 = vperm.xlu0 %3667, %v3665
        %v3669 = vpop.permute.xlu0 %3668
        %v3673 = vcombine.high %v3663, %v3663
        %v3674 = vcombine.high %v3664, %v3664
        %3675 = vrot.lane.b32.xlu0 %v3663, 109
        %v3676 = vpop.permute.xlu0 %3675
        %3677 = vrot.lane.b32.xlu0 %v3673, 109
        %v3678 = vpop.permute.xlu0 %3677
        %3679 = vrot.lane.b32.xlu0 %v3664, 109
        %v3680 = vpop.permute.xlu0 %3679
        %3681 = vrot.lane.b32.xlu0 %v3674, 109
        %v3682 = vpop.permute.xlu0 %3681
        %v3683 = vsel %vm1148, %v3676, %v3678
        %v3684 = vsel %vm1148, %v3678, %v3680
        %v3685 = vsel %vm1148, %v3680, %v3682
        %v3687 = vsel %vm481, %v3662, 0
        %v3689 = vsel %vm485, %v3683, 0
        %v3691 = vsel %vm485, %v3684, 0
        %v3693 = vsel %vm485, %v3685, 0
        %3695 = vmatprep.subr.mxu0 0.0
        %3696 = vmatpush1.msra.mxu0 0.0
        %3697 = vmatprep.subr.mxu0 0.0
        %3698 = vmatpush1.msra.mxu0 0.0
        %3699 = vmatprep.subr.mxu0 0.0
        %3700 = vmatpush1.msra.mxu0 0.0
        %3701 = vmatprep.subr.mxu0 0.0
        %3702 = vmatpush1.msra.mxu0 0.0
        %3703 = vmatprep.subr.mxu0 0.0
        %3704 = vmatpush1.msra.mxu0 0.0
        %3705 = vmatprep.subr.mxu0 0.0
        %3706 = vmatpush1.msra.mxu0 0.0
        %3707 = vmatprep.subr.mxu0 0.0
        %3708 = vmatpush1.msra.mxu0 0.0
        %3709 = vmatprep.subr.mxu0 0.0
        %3710 = vmatpush1.msra.mxu0 0.0
        %3711 = vmatprep.subr.mxu0 0.0
        %3712 = vmatpush1.msra.mxu0 0.0
        %3713 = vmatprep.subr.mxu0 0.0
        %3714 = vmatpush1.msra.mxu0 0.0
        %3715 = vmatprep.subr.mxu0 0.0
        %3716 = vmatpush1.msra.mxu0 0.0
        %3717 = vmatprep.subr.mxu0 0.0
        %3718 = vmatpush1.msra.mxu0 0.0
        %3719 = vmatprep.subr.mxu0 0.0
        %3720 = vmatpush1.msra.mxu0 0.0
        %3721 = vmatprep.subr.mxu0 0.0
        %3722 = vmatpush1.msra.mxu0 0.0
        %3723 = vmatprep.subr.mxu0 0.0
        %3724 = vmatpush1.msra.mxu0 0.0
        %3725 = vmatprep.subr.mxu0 %v3691
        %3726 = vmatpush1.msra.mxu0 %v3689
        %3727 = vmatprep.subr.mxu0 0.0
        %3728 = vmatpush2.msra.mxu0 0.0
        %3729 = vmatprep.subr.mxu0 0.0
        %3730 = vmatpush2.msra.mxu0 0.0
        %3731 = vmatprep.subr.mxu0 0.0
        %3732 = vmatpush2.msra.mxu0 0.0
        %3733 = vmatprep.subr.mxu0 0.0
        %3734 = vmatpush2.msra.mxu0 0.0
        %3735 = vmatprep.subr.mxu0 0.0
        %3736 = vmatpush2.msra.mxu0 0.0
        %3737 = vmatprep.subr.mxu0 0.0
        %3738 = vmatpush2.msra.mxu0 0.0
        %3739 = vmatprep.subr.mxu0 0.0
        %3740 = vmatpush2.msra.mxu0 0.0
        %3741 = vmatprep.subr.mxu0 0.0
        %3742 = vmatpush2.msra.mxu0 0.0
        %3743 = vmatprep.subr.mxu0 0.0
        %3744 = vmatpush2.msra.mxu0 0.0
        %3745 = vmatprep.subr.mxu0 0.0
        %3746 = vmatpush2.msra.mxu0 0.0
        %3747 = vmatprep.subr.mxu0 0.0
        %3748 = vmatpush2.msra.mxu0 0.0
        %3749 = vmatprep.subr.mxu0 0.0
        %3750 = vmatpush2.msra.mxu0 0.0
        %3751 = vmatprep.subr.mxu0 0.0
        %3752 = vmatpush2.msra.mxu0 0.0
        %3753 = vmatprep.subr.mxu0 0.0
        %3754 = vmatpush2.msra.mxu0 0.0
        %3755 = vmatprep.subr.mxu0 0.0
        %3756 = vmatpush2.msra.mxu0 0.0
        %3757 = vmatprep.subr.mxu0 0.0
        %3758 = vmatpush2.msra.mxu0 0.0
        %3759 = vmatprep.mubr.f32.mxu0 0.0
        %3760 = vmatmul.mubr.f32.gmra.mxu0 %v3687
        %v3761 = vpop.f32.mrf.mxu0
        %v3762 = vadd.f32 %v3669, %v3761
        %v3763 = vpop.f32.mrf.mxu0
        %v3764 = vadd.f32 %v3669, %v3763
        %3765 = vdwg.mxu0
        %3766 = vmatprep.subr.mxu0 0.0
        %3767 = vmatpush1.msra.mxu0 0.0
        %3768 = vmatprep.subr.mxu0 0.0
        %3769 = vmatpush1.msra.mxu0 0.0
        %3770 = vmatprep.subr.mxu0 0.0
        %3771 = vmatpush1.msra.mxu0 0.0
        %3772 = vmatprep.subr.mxu0 0.0
        %3773 = vmatpush1.msra.mxu0 0.0
        %3774 = vmatprep.subr.mxu0 0.0
        %3775 = vmatpush1.msra.mxu0 0.0
        %3776 = vmatprep.subr.mxu0 0.0
        %3777 = vmatpush1.msra.mxu0 0.0
        %3778 = vmatprep.subr.mxu0 0.0
        %3779 = vmatpush1.msra.mxu0 0.0
        %3780 = vmatprep.subr.mxu0 0.0
        %3781 = vmatpush1.msra.mxu0 0.0
        %3782 = vmatprep.subr.mxu0 0.0
        %3783 = vmatpush1.msra.mxu0 0.0
        %3784 = vmatprep.subr.mxu0 0.0
        %3785 = vmatpush1.msra.mxu0 0.0
        %3786 = vmatprep.subr.mxu0 0.0
        %3787 = vmatpush1.msra.mxu0 0.0
        %3788 = vmatprep.subr.mxu0 0.0
        %3789 = vmatpush1.msra.mxu0 0.0
        %3790 = vmatprep.subr.mxu0 0.0
        %3791 = vmatpush1.msra.mxu0 0.0
        %3792 = vmatprep.subr.mxu0 0.0
        %3793 = vmatpush1.msra.mxu0 0.0
        %3794 = vmatprep.subr.mxu0 0.0
        %3795 = vmatpush1.msra.mxu0 0.0
        %3796 = vmatprep.subr.mxu0 0.0
        %3797 = vmatpush1.msra.mxu0 %v3693
        %3798 = vmatprep.subr.mxu0 0.0
        %3799 = vmatpush2.msra.mxu0 0.0
        %3800 = vmatprep.subr.mxu0 0.0
        %3801 = vmatpush2.msra.mxu0 0.0
        %3802 = vmatprep.subr.mxu0 0.0
        %3803 = vmatpush2.msra.mxu0 0.0
        %3804 = vmatprep.subr.mxu0 0.0
        %3805 = vmatpush2.msra.mxu0 0.0
        %3806 = vmatprep.subr.mxu0 0.0
        %3807 = vmatpush2.msra.mxu0 0.0
        %3808 = vmatprep.subr.mxu0 0.0
        %3809 = vmatpush2.msra.mxu0 0.0
        %3810 = vmatprep.subr.mxu0 0.0
        %3811 = vmatpush2.msra.mxu0 0.0
        %3812 = vmatprep.subr.mxu0 0.0
        %3813 = vmatpush2.msra.mxu0 0.0
        %3814 = vmatprep.subr.mxu0 0.0
        %3815 = vmatpush2.msra.mxu0 0.0
        %3816 = vmatprep.subr.mxu0 0.0
        %3817 = vmatpush2.msra.mxu0 0.0
        %3818 = vmatprep.subr.mxu0 0.0
        %3819 = vmatpush2.msra.mxu0 0.0
        %3820 = vmatprep.subr.mxu0 0.0
        %3821 = vmatpush2.msra.mxu0 0.0
        %3822 = vmatprep.subr.mxu0 0.0
        %3823 = vmatpush2.msra.mxu0 0.0
        %3824 = vmatprep.subr.mxu0 0.0
        %3825 = vmatpush2.msra.mxu0 0.0
        %3826 = vmatprep.subr.mxu0 0.0
        %3827 = vmatpush2.msra.mxu0 0.0
        %3828 = vmatprep.subr.mxu0 0.0
        %3829 = vmatpush2.msra.mxu0 0.0
        %3830 = vmatprep.mubr.f32.mxu0 0.0
        %3831 = vmatmul.mubr.f32.gmra.mxu0 %v3687
        %v3832 = vpop.f32.mrf.mxu0
        %v3833 = vadd.f32 %v3669, %v3832
        %v3834 = vpop.f32.mrf.mxu0
        %3835 = vdwg.mxu0
        %v3836 = vadd.f32 %v3659, %v3762
        %v3837 = vadd.f32 %v3660, %v3764
        %v3838 = vadd.f32 %v3661, %v3833
        %v3839 = vmul.f32 %v3836, %v2012
        %v3840 = vmul.f32 %v3837, %v2016
        %v3841 = vmul.f32 %v3838, %v2020
        %3842 = vst [vmem:[%s446] sm:$0xff] %v3839
        %3843 = vst [vmem:[%s446 + $0x8] sm:$0xff] %v3840
        %3844 = vst [vmem:[%s446 + $0x10] sm:$0xff] %v3841
        %s3845 = sand.u32 %s318, 1
        %s3846 = scalar_lea.sflag [#allocation4], %s3845
        %s3847 = sand.u32 %s318, 1
        %s3848 = smul.addr %s3847, 24
        %s3849 = scalar_lea.vmem [#allocation3], %s3848
        // Predicated region
        $region73: #{tpu_custom_call.1} parent=71 // pred_check
          %p3850 = pneg %p328
        $region74: #{tpu_custom_call.1} parent=71 // pred_check_branch
          %3852 = sbr.rel (%p3850) target = $region76
        $region75: #{tpu_custom_call.1} parent=71 // pred_region
          %s3854 = ssub.s32 384, 384
          %3855 = vsyncadd %s3846, %s3854
          %s3856 = smul.addr %s27, 3
          %s3857 = smul.addr %s3856, 128
          %s3858 = scalar_lea.hbm %s13, %s3857
          %s3860 = sshll.u32 %s3849, 4
          %s3861 = int_to_ptr.vmem [resolvable:$true] %s3860
          %3863 = dma.vmem_to_hbm [thread:$0]  %s3861, 384, %s3858, %s3846
        $region76: #{tpu_custom_call.1} parent=71 // pred_fallthru
          _
      $region72: #{tpu_custom_call.1} parent=5 // pred_fallthru
        _
      %p3864 = scmp.le.s32.totalorder 2, %s22
      // Predicated region
      $region77: #{tpu_custom_call.1} parent=5 // pred_check
        %p3865 = pneg %p3864
      $region78: #{tpu_custom_call.1} parent=5 // pred_check_branch
        %3867 = sbr.rel (%p3865) target = $region80
      $region79: #{tpu_custom_call.1} parent=5 // pred_region
        %s3868 = ssub.s32 %s22, 2
        // Predicated region
        $region81: #{tpu_custom_call.1} parent=79 // pred_check
          %p3869 = pneg %p334
        $region82: #{tpu_custom_call.1} parent=79 // pred_check_branch
          %3871 = sbr.rel (%p3869) target = $region84
        $region83: #{tpu_custom_call.1} parent=79 // pred_region
          %s3872 = sand.u32 %s319, 1
          %s3873 = scalar_lea.sflag [#allocation4], %s3872
          %s3874 = sand.u32 %s319, 1
          %s3875 = smul.addr %s3874, 24
          %s3876 = scalar_lea.vmem [#allocation3], %s3875
          %3877 = dma.done %s3873, 384
        $region84: #{tpu_custom_call.1} parent=79 // pred_fallthru
          _
      $region80: #{tpu_custom_call.1} parent=5 // pred_fallthru
        _
    $region6: #{tpu_custom_call.1} parent=1 // loop_footer
      %s26 = sadd.s32 1, %s22
    $region7: #{tpu_custom_call.1} parent=1 // loop_footer_branch
      %21 = sbr.rel target = $region3
    $region8: #{tpu_custom_call.1} parent=1 // loop_exit
      _
    %3878 = vsyncpa [#allocation4], 1
    %s3879 = scalar_lea.sflag [#allocation4], 1
    %3880 = vsyncpa %s3879, 1

</llo_original>
